<compile_context>
chip_gen: v6e
topology: v6e:2x2x1
jax: 0.10.0
libtpu: 0.0.40
codegen_flags: <defaults>
</compile_context>

<pallas_src>
import functools

import jax
import jax.numpy as jnp
from jax.experimental import pallas as pl
from jax.experimental.pallas import tpu as pltpu

EPS = 1e-5
_VMEM_LIMIT_BYTES = 64 * 1024 * 1024


# ----------------------------- Pallas kernels ------------------------------ #

def _conv3x3x3_kernel(x_ref, w_ref, m_ref, scale_ref, shift_ref,
                      y_ref, sum_ref, ssq_ref, col_ref,
                      *, spatial, fuse_input_bn_relu):
    """3x3x3 conv (padding=1, stride=1) for one batch element, flat-spatial layout.

    x_ref     : (1, Cin, DHW)   channels on sublanes, flattened D*H*W on lanes
    w_ref     : (Cout, 27*Cin)  one contiguous contraction tile (taps x Cin)
    m_ref     : (27, DHW)       per-tap validity mask (replaces zero padding)
    scale_ref : (Cin, 1)        previous-BN scale (used only if fuse_input_bn_relu)
    shift_ref : (Cin, 1)        previous-BN shift (used only if fuse_input_bn_relu)
    y_ref     : (1, Cout, DHW)  conv output (pre-BN)
    sum_ref   : (1, 1, Cout)    per-channel sum of y   (partial BN statistics)
    ssq_ref   : (1, 1, Cout)    per-channel sum of y*y (partial BN statistics)
    col_ref   : (27*Cin, DHW)   VMEM scratch: im2col matrix for this slab
    """
    D, H, W = spatial
    Cin = x_ref.shape[1]
    Cout = y_ref.shape[1]

    xs = x_ref[0]                                        # (Cin, DHW)
    if fuse_input_bn_relu:
        # Fused prologue: the input of this conv is relu(bn(previous conv output)).
        xs = jnp.maximum(xs * scale_ref[...] + shift_ref[...], 0.0)

    # Build the im2col matrix with flat-index rolls + boundary masks:
    # no input padding and no per-tap reshape relayouts; everything stays lane-dense.
    t = 0
    for dd in (-1, 0, 1):
        for dh in (-1, 0, 1):
            for dw in (-1, 0, 1):
                off = dd * (H * W) + dh * W + dw
                if off == 0:
                    chunk = xs                           # centre tap: identity, mask==1
                else:
                    chunk = jnp.roll(xs, -off, axis=1) * m_ref[t:t + 1, :]
                col_ref[t * Cin:(t + 1) * Cin, :] = chunk
                t += 1

    # Single MXU matmul with K = 27*Cin.  Result (Cout, DHW) is lane-dense and tiny
    # on the sublane axis, so it lives comfortably in registers (no spills).
    y = jnp.dot(w_ref[...], col_ref[...],
                preferred_element_type=jnp.float32,
                precision=jax.lax.Precision.HIGHEST)
    y_ref[0] = y

    # Per-channel partial statistics so BatchNorm never needs its own HBM pass.
    sum_ref[...] = jnp.sum(y, axis=1).reshape(1, 1, Cout)
    ssq_ref[...] = jnp.sum(y * y, axis=1).reshape(1, 1, Cout)


def _bn_add_relu_kernel(y_ref, r_ref, s_ref, b_ref, o_ref):
    """out = relu(y * scale + shift + residual); scale/shift are per-channel."""
    o_ref[...] = jnp.maximum(
        y_ref[...] * s_ref[...] + b_ref[...] + r_ref[...], 0.0)


# ------------------------------ Pallas wrappers ----------------------------- #

def conv3x3x3_bn_fused(x_flat, w_full, masks, scale, shift, *, spatial,
                       fuse_input_bn_relu):
    """x_flat: (N, Cin, DHW) -> (y (N, Cout, DHW), sum (N,1,Cout), sumsq (N,1,Cout))."""
    N, Cin, DHW = x_flat.shape
    Cout = w_full.shape[0]
    kernel = functools.partial(_conv3x3x3_kernel, spatial=spatial,
                               fuse_input_bn_relu=fuse_input_bn_relu)
    return pl.pallas_call(
        kernel,
        out_shape=(
            jax.ShapeDtypeStruct((N, Cout, DHW), jnp.float32),
            jax.ShapeDtypeStruct((N, 1, Cout), jnp.float32),
            jax.ShapeDtypeStruct((N, 1, Cout), jnp.float32),
        ),
        grid=(N,),
        in_specs=[
            pl.BlockSpec((1, Cin, DHW), lambda n: (n, 0, 0)),
            pl.BlockSpec((Cout, 27 * Cin), lambda n: (0, 0)),
            pl.BlockSpec((27, DHW), lambda n: (0, 0)),
            pl.BlockSpec((Cin, 1), lambda n: (0, 0)),
            pl.BlockSpec((Cin, 1), lambda n: (0, 0)),
        ],
        out_specs=(
            pl.BlockSpec((1, Cout, DHW), lambda n: (n, 0, 0)),
            pl.BlockSpec((1, 1, Cout), lambda n: (n, 0, 0)),
            pl.BlockSpec((1, 1, Cout), lambda n: (n, 0, 0)),
        ),
        scratch_shapes=[pltpu.VMEM((27 * Cin, DHW), jnp.float32)],
        compiler_params=pltpu.CompilerParams(
            dimension_semantics=("parallel",),
            vmem_limit_bytes=_VMEM_LIMIT_BYTES),
    )(x_flat, w_full, masks, scale, shift)


def _pick_lane_tile(n, cap=32768):
    """Largest lane-tile: full extent if it fits, else a multiple-of-128 divisor."""
    if n <= cap:
        return n
    for t in range((min(cap, n) // 128) * 128, 0, -128):
        if n % t == 0:
            return t
    return n


def bn_add_relu_pallas(y, residual, scale, shift):
    """y, residual: (N, C, DHW); scale/shift: (1, C, 1) -> relu(y*s + b + residual)."""
    N, C, DHW = y.shape
    tl = _pick_lane_tile(DHW)
    return pl.pallas_call(
        _bn_add_relu_kernel,
        out_shape=jax.ShapeDtypeStruct((N, C, DHW), jnp.float32),
        grid=(N, DHW // tl),
        in_specs=[
            pl.BlockSpec((1, C, tl), lambda n, t: (n, 0, t)),
            pl.BlockSpec((1, C, tl), lambda n, t: (n, 0, t)),
            pl.BlockSpec((1, C, 1), lambda n, t: (0, 0, 0)),
            pl.BlockSpec((1, C, 1), lambda n, t: (0, 0, 0)),
        ],
        out_specs=pl.BlockSpec((1, C, tl), lambda n, t: (n, 0, t)),
        compiler_params=pltpu.CompilerParams(
            dimension_semantics=("parallel", "parallel"),
            vmem_limit_bytes=_VMEM_LIMIT_BYTES),
    )(y, residual, scale, shift)


# --------------------------------- helpers ---------------------------------- #

def _flatten_conv_weight(w_oidhw):
    """PyTorch (Cout, Cin, 3, 3, 3) -> (Cout, 27*Cin), columns ordered (kd,kh,kw,ci)."""
    cout, cin = w_oidhw.shape[:2]
    return jnp.transpose(w_oidhw, (0, 2, 3, 4, 1)).reshape(cout, 27 * cin)


def _make_tap_masks(D, H, W):
    """(27, D*H*W) f32 validity masks per tap (handles the conv halo, no padding)."""
    d = jnp.arange(D).reshape(D, 1, 1)
    h = jnp.arange(H).reshape(1, H, 1)
    w = jnp.arange(W).reshape(1, 1, W)
    rows = []
    for dd in (-1, 0, 1):
        for dh in (-1, 0, 1):
            for dw in (-1, 0, 1):
                ok = ((d + dd >= 0) & (d + dd < D) &
                      (h + dh >= 0) & (h + dh < H) &
                      (w + dw >= 0) & (w + dw < W))
                rows.append(ok.reshape(-1))
    return jnp.stack(rows, axis=0).astype(jnp.float32)


def _bn_scale_shift(sum_p, ssq_p, count, gamma, beta):
    """Training-mode BN (biased batch variance) from per-batch partial sums."""
    total = jnp.sum(sum_p, axis=(0, 1))          # (C,)
    total_sq = jnp.sum(ssq_p, axis=(0, 1))       # (C,)
    mean = total / count
    var = jnp.maximum(total_sq / count - mean * mean, 0.0)
    inv = gamma / jnp.sqrt(var + EPS)
    return inv, beta - mean * inv                # scale, shift  (each (C,))


def basic_block_forward(x_ncdhw, params):
    """BasicBlock.forward with stride=1, downsample=None.  Input/output: NCDHW."""
    N, C, D, H, W = x_ncdhw.shape
    DHW = D * H * W
    x_flat = x_ncdhw.reshape(N, C, DHW).astype(jnp.float32)

    w1 = _flatten_conv_weight(params["conv1_w"])
    w2 = _flatten_conv_weight(params["conv2_w"])
    masks = _make_tap_masks(D, H, W)

    ones = jnp.ones((C, 1), jnp.float32)
    zeros = jnp.zeros((C, 1), jnp.float32)

    # conv1 (+ emits BN1 partial statistics)
    y1, s1p, q1p = conv3x3x3_bn_fused(
        x_flat, w1, masks, ones, zeros,
        spatial=(D, H, W), fuse_input_bn_relu=False)
    sc1, sh1 = _bn_scale_shift(s1p, q1p, N * DHW,
                               params["bn1_gamma"], params["bn1_beta"])

    # conv2 with fused BN1-apply + ReLU prologue (+ emits BN2 partial statistics)
    y2, s2p, q2p = conv3x3x3_bn_fused(
        y1, w2, masks, sc1.reshape(C, 1), sh1.reshape(C, 1),
        spatial=(D, H, W), fuse_input_bn_relu=True)
    sc2, sh2 = _bn_scale_shift(s2p, q2p, N * DHW,
                               params["bn2_gamma"], params["bn2_beta"])

    # BN2-apply + residual add + ReLU (fused elementwise epilogue)
    out_flat = bn_add_relu_pallas(y2, x_flat,
                                  sc2.reshape(1, C, 1), sh2.reshape(1, C, 1))
    return out_flat.reshape(N, C, D, H, W)


# ------------------------------ pure-JAX reference -------------------------- #

def _ref_conv(x_ncdhw, w_oidhw):
    return jax.lax.conv_general_dilated(
        x_ncdhw, w_oidhw, window_strides=(1, 1, 1),
        padding=((1, 1), (1, 1), (1, 1)),
        dimension_numbers=("NCDHW", "OIDHW", "NCDHW"),
        precision=jax.lax.Precision.HIGHEST)


def _ref_bn(y, gamma, beta):
    m = jnp.mean(y, axis=(0, 2, 3, 4), keepdims=True)
    v = jnp.var(y, axis=(0, 2, 3, 4), keepdims=True)
    g = gamma.reshape(1, -1, 1, 1, 1)
    b = beta.reshape(1, -1, 1, 1, 1)
    return (y - m) / jnp.sqrt(v + EPS) * g + b


def ref_basic_block(x, p):
    y = _ref_conv(x, p["conv1_w"])
    y = jnp.maximum(_ref_bn(y, p["bn1_gamma"], p["bn1_beta"]), 0.0)
    y = _ref_conv(y, p["conv2_w"])
    y = _ref_bn(y, p["bn2_gamma"], p["bn2_beta"]) + x
    return jnp.maximum(y, 0.0)


# ----------------------------------- main ----------------------------------- #

if __name__ == "__main__":
    N, C, D, H, W = 2, 4, 8, 8, 8          # in_planes == planes == 4, stride = 1
    in_planes = planes = C

    key = jax.random.PRNGKey(0)
    k1, k2, kx = jax.random.split(key, 3)

    fan_in = in_planes * 3 * 3 * 3
    bound = 1.0 / (fan_in ** 0.5)          # PyTorch Conv3d default init bound
    params = {
        "conv1_w": jax.random.uniform(k1, (planes, in_planes, 3, 3, 3),
                                      minval=-bound, maxval=bound, dtype=jnp.float32),
        "conv2_w": jax.random.uniform(k2, (planes, planes, 3, 3, 3),
                                      minval=-bound, maxval=bound, dtype=jnp.float32),
        "bn1_gamma": jnp.ones((planes,), jnp.float32),
        "bn1_beta": jnp.zeros((planes,), jnp.float32),
        "bn2_gamma": jnp.ones((planes,), jnp.float32),
        "bn2_beta": jnp.zeros((planes,), jnp.float32),
    }

    x = jax.random.normal(kx, (N, C, D, H, W), dtype=jnp.float32)

    out = basic_block_forward(x, params)
    out = jax.block_until_ready(out)
    assert out.shape == (N, planes, D, H, W) and out.dtype == jnp.float32

    ref = ref_basic_block(x, params)
    max_err = float(jnp.max(jnp.abs(out - ref)))
    # Tightened vs. previous 5e-2: full-f32 MXU path typically lands around 1e-5.
    assert max_err < 1e-3, f"mismatch vs reference, max abs err = {max_err}"

    print("KERNEL_OK")
</pallas_src>

<mosaic_0001>
module attributes {stable_mosaic.version = 11 : i64} {
  func.func @_conv3x3x3_kernel(%arg0: i32, %arg1: memref<1x4x512xf32, #tpu.memory_space<vmem>>, %arg2: memref<4x108xf32, #tpu.memory_space<vmem>>, %arg3: memref<27x512xf32, #tpu.memory_space<vmem>>, %arg4: memref<4x1xf32, #tpu.memory_space<vmem>>, %arg5: memref<4x1xf32, #tpu.memory_space<vmem>>, %arg6: memref<1x4x512xf32, #tpu.memory_space<vmem>>, %arg7: memref<1x1x4xf32, #tpu.memory_space<vmem>>, %arg8: memref<1x1x4xf32, #tpu.memory_space<vmem>>, %arg9: memref<108x512xf32, #tpu.memory_space<vmem>>) attributes {dimension_semantics = [#tpu.dimension_semantics<parallel>], iteration_bounds = array<i64: 2>, scalar_prefetch = 0 : i64, scratch_operands = 1 : i64, tpu.core_type = #tpu.core_type<tc>, window_params = [{transform_indices = @transform_0, window_bounds = array<i64: 1, 4, 512>}, {pipeline_mode = #tpu.pipeline_mode<synchronous>, transform_indices = @transform_1, window_bounds = array<i64: 4, 108>}, {pipeline_mode = #tpu.pipeline_mode<synchronous>, transform_indices = @transform_2, window_bounds = array<i64: 27, 512>}, {pipeline_mode = #tpu.pipeline_mode<synchronous>, transform_indices = @transform_3, window_bounds = array<i64: 4, 1>}, {pipeline_mode = #tpu.pipeline_mode<synchronous>, transform_indices = @transform_4, window_bounds = array<i64: 4, 1>}, {transform_indices = @transform_5, window_bounds = array<i64: 1, 4, 512>}, {transform_indices = @transform_6, window_bounds = array<i64: 1, 1, 4>}, {transform_indices = @transform_7, window_bounds = array<i64: 1, 1, 4>}]} {
    %c0 = arith.constant 0 : index
    %c0_0 = arith.constant 0 : index
    %c0_1 = arith.constant 0 : index
    %0 = vector.load %arg1[%c0, %c0_0, %c0_1] : memref<1x4x512xf32, #tpu.memory_space<vmem>>, vector<1x4x512xf32>
    %1 = vector.shape_cast %0 : vector<1x4x512xf32> to vector<4x512xf32>
    %2 = vector.extract_strided_slice %1 {offsets = [0, 439], sizes = [4, 73], strides = [1, 1]} : vector<4x512xf32> to vector<4x73xf32>
    %3 = vector.extract_strided_slice %1 {offsets = [0, 0], sizes = [4, 439], strides = [1, 1]} : vector<4x512xf32> to vector<4x439xf32>
    %4 = tpu.concatenate %2, %3 in 1 : vector<4x73xf32>, vector<4x439xf32> -> vector<4x512xf32>
    %c0_2 = arith.constant 0 : index
    %c0_3 = arith.constant 0 : index
    %5 = vector.load %arg3[%c0_2, %c0_3] : memref<27x512xf32, #tpu.memory_space<vmem>>, vector<1x512xf32>
    %6 = vector.broadcast %5 : vector<1x512xf32> to vector<4x512xf32>
    %7 = arith.mulf %4, %6 : vector<4x512xf32>
    %c0_4 = arith.constant 0 : index
    %c0_5 = arith.constant 0 : index
    %8 = vector.load %arg9[%c0_4, %c0_5] : memref<108x512xf32, #tpu.memory_space<vmem>>, vector<4x512xf32>
    tpu.vector_store %arg9[%c0_4, %c0_5], %7 {strides = array<i32>} : memref<108x512xf32, #tpu.memory_space<vmem>>, vector<4x512xf32>,
    %9 = vector.extract_strided_slice %1 {offsets = [0, 440], sizes = [4, 72], strides = [1, 1]} : vector<4x512xf32> to vector<4x72xf32>
    %10 = vector.extract_strided_slice %1 {offsets = [0, 0], sizes = [4, 440], strides = [1, 1]} : vector<4x512xf32> to vector<4x440xf32>
    %11 = tpu.concatenate %9, %10 in 1 : vector<4x72xf32>, vector<4x440xf32> -> vector<4x512xf32>
    %c1 = arith.constant 1 : index
    %c0_6 = arith.constant 0 : index
    %12 = vector.load %arg3[%c1, %c0_6] : memref<27x512xf32, #tpu.memory_space<vmem>>, vector<1x512xf32>
    %13 = vector.broadcast %12 : vector<1x512xf32> to vector<4x512xf32>
    %14 = arith.mulf %11, %13 : vector<4x512xf32>
    %c4 = arith.constant 4 : index
    %c0_7 = arith.constant 0 : index
    %15 = vector.load %arg9[%c4, %c0_7] : memref<108x512xf32, #tpu.memory_space<vmem>>, vector<4x512xf32>
    tpu.vector_store %arg9[%c4, %c0_7], %14 {strides = array<i32>} : memref<108x512xf32, #tpu.memory_space<vmem>>, vector<4x512xf32>,
    %16 = vector.extract_strided_slice %1 {offsets = [0, 441], sizes = [4, 71], strides = [1, 1]} : vector<4x512xf32> to vector<4x71xf32>
    %17 = vector.extract_strided_slice %1 {offsets = [0, 0], sizes = [4, 441], strides = [1, 1]} : vector<4x512xf32> to vector<4x441xf32>
    %18 = tpu.concatenate %16, %17 in 1 : vector<4x71xf32>, vector<4x441xf32> -> vector<4x512xf32>
    %c2 = arith.constant 2 : index
    %c0_8 = arith.constant 0 : index
    %19 = vector.load %arg3[%c2, %c0_8] : memref<27x512xf32, #tpu.memory_space<vmem>>, vector<1x512xf32>
    %20 = vector.broadcast %19 : vector<1x512xf32> to vector<4x512xf32>
    %21 = arith.mulf %18, %20 : vector<4x512xf32>
    %c8 = arith.constant 8 : index
    %c0_9 = arith.constant 0 : index
    %22 = vector.load %arg9[%c8, %c0_9] : memref<108x512xf32, #tpu.memory_space<vmem>>, vector<4x512xf32>
    tpu.vector_store %arg9[%c8, %c0_9], %21 {strides = array<i32>} : memref<108x512xf32, #tpu.memory_space<vmem>>, vector<4x512xf32>,
    %23 = vector.extract_strided_slice %1 {offsets = [0, 447], sizes = [4, 65], strides = [1, 1]} : vector<4x512xf32> to vector<4x65xf32>
    %24 = vector.extract_strided_slice %1 {offsets = [0, 0], sizes = [4, 447], strides = [1, 1]} : vector<4x512xf32> to vector<4x447xf32>
    %25 = tpu.concatenate %23, %24 in 1 : vector<4x65xf32>, vector<4x447xf32> -> vector<4x512xf32>
    %c3 = arith.constant 3 : index
    %c0_10 = arith.constant 0 : index
    %26 = vector.load %arg3[%c3, %c0_10] : memref<27x512xf32, #tpu.memory_space<vmem>>, vector<1x512xf32>
    %27 = vector.broadcast %26 : vector<1x512xf32> to vector<4x512xf32>
    %28 = arith.mulf %25, %27 : vector<4x512xf32>
    %c12 = arith.constant 12 : index
    %c0_11 = arith.constant 0 : index
    %29 = vector.load %arg9[%c12, %c0_11] : memref<108x512xf32, #tpu.memory_space<vmem>>, vector<4x512xf32>
    tpu.vector_store %arg9[%c12, %c0_11], %28 {strides = array<i32>} : memref<108x512xf32, #tpu.memory_space<vmem>>, vector<4x512xf32>,
    %30 = vector.extract_strided_slice %1 {offsets = [0, 448], sizes = [4, 64], strides = [1, 1]} : vector<4x512xf32> to vector<4x64xf32>
    %31 = vector.extract_strided_slice %1 {offsets = [0, 0], sizes = [4, 448], strides = [1, 1]} : vector<4x512xf32> to vector<4x448xf32>
    %32 = tpu.concatenate %30, %31 in 1 : vector<4x64xf32>, vector<4x448xf32> -> vector<4x512xf32>
    %c4_12 = arith.constant 4 : index
    %c0_13 = arith.constant 0 : index
    %33 = vector.load %arg3[%c4_12, %c0_13] : memref<27x512xf32, #tpu.memory_space<vmem>>, vector<1x512xf32>
    %34 = vector.broadcast %33 : vector<1x512xf32> to vector<4x512xf32>
    %35 = arith.mulf %32, %34 : vector<4x512xf32>
    %c16 = arith.constant 16 : index
    %c0_14 = arith.constant 0 : index
    %36 = vector.load %arg9[%c16, %c0_14] : memref<108x512xf32, #tpu.memory_space<vmem>>, vector<4x512xf32>
    tpu.vector_store %arg9[%c16, %c0_14], %35 {strides = array<i32>} : memref<108x512xf32, #tpu.memory_space<vmem>>, vector<4x512xf32>,
    %37 = vector.extract_strided_slice %1 {offsets = [0, 449], sizes = [4, 63], strides = [1, 1]} : vector<4x512xf32> to vector<4x63xf32>
    %38 = vector.extract_strided_slice %1 {offsets = [0, 0], sizes = [4, 449], strides = [1, 1]} : vector<4x512xf32> to vector<4x449xf32>
    %39 = tpu.concatenate %37, %38 in 1 : vector<4x63xf32>, vector<4x449xf32> -> vector<4x512xf32>
    %c5 = arith.constant 5 : index
    %c0_15 = arith.constant 0 : index
    %40 = vector.load %arg3[%c5, %c0_15] : memref<27x512xf32, #tpu.memory_space<vmem>>, vector<1x512xf32>
    %41 = vector.broadcast %40 : vector<1x512xf32> to vector<4x512xf32>
    %42 = arith.mulf %39, %41 : vector<4x512xf32>
    %c20 = arith.constant 20 : index
    %c0_16 = arith.constant 0 : index
    %43 = vector.load %arg9[%c20, %c0_16] : memref<108x512xf32, #tpu.memory_space<vmem>>, vector<4x512xf32>
    tpu.vector_store %arg9[%c20, %c0_16], %42 {strides = array<i32>} : memref<108x512xf32, #tpu.memory_space<vmem>>, vector<4x512xf32>,
    %44 = vector.extract_strided_slice %1 {offsets = [0, 455], sizes = [4, 57], strides = [1, 1]} : vector<4x512xf32> to vector<4x57xf32>
    %45 = vector.extract_strided_slice %1 {offsets = [0, 0], sizes = [4, 455], strides = [1, 1]} : vector<4x512xf32> to vector<4x455xf32>
    %46 = tpu.concatenate %44, %45 in 1 : vector<4x57xf32>, vector<4x455xf32> -> vector<4x512xf32>
    %c6 = arith.constant 6 : index
    %c0_17 = arith.constant 0 : index
    %47 = vector.load %arg3[%c6, %c0_17] : memref<27x512xf32, #tpu.memory_space<vmem>>, vector<1x512xf32>
    %48 = vector.broadcast %47 : vector<1x512xf32> to vector<4x512xf32>
    %49 = arith.mulf %46, %48 : vector<4x512xf32>
    %c24 = arith.constant 24 : index
    %c0_18 = arith.constant 0 : index
    %50 = vector.load %arg9[%c24, %c0_18] : memref<108x512xf32, #tpu.memory_space<vmem>>, vector<4x512xf32>
    tpu.vector_store %arg9[%c24, %c0_18], %49 {strides = array<i32>} : memref<108x512xf32, #tpu.memory_space<vmem>>, vector<4x512xf32>,
    %51 = vector.extract_strided_slice %1 {offsets = [0, 456], sizes = [4, 56], strides = [1, 1]} : vector<4x512xf32> to vector<4x56xf32>
    %52 = vector.extract_strided_slice %1 {offsets = [0, 0], sizes = [4, 456], strides = [1, 1]} : vector<4x512xf32> to vector<4x456xf32>
    %53 = tpu.concatenate %51, %52 in 1 : vector<4x56xf32>, vector<4x456xf32> -> vector<4x512xf32>
    %c7 = arith.constant 7 : index
    %c0_19 = arith.constant 0 : index
    %54 = vector.load %arg3[%c7, %c0_19] : memref<27x512xf32, #tpu.memory_space<vmem>>, vector<1x512xf32>
    %55 = vector.broadcast %54 : vector<1x512xf32> to vector<4x512xf32>
    %56 = arith.mulf %53, %55 : vector<4x512xf32>
    %c28 = arith.constant 28 : index
    %c0_20 = arith.constant 0 : index
    %57 = vector.load %arg9[%c28, %c0_20] : memref<108x512xf32, #tpu.memory_space<vmem>>, vector<4x512xf32>
    tpu.vector_store %arg9[%c28, %c0_20], %56 {strides = array<i32>} : memref<108x512xf32, #tpu.memory_space<vmem>>, vector<4x512xf32>,
    %58 = vector.extract_strided_slice %1 {offsets = [0, 457], sizes = [4, 55], strides = [1, 1]} : vector<4x512xf32> to vector<4x55xf32>
    %59 = vector.extract_strided_slice %1 {offsets = [0, 0], sizes = [4, 457], strides = [1, 1]} : vector<4x512xf32> to vector<4x457xf32>
    %60 = tpu.concatenate %58, %59 in 1 : vector<4x55xf32>, vector<4x457xf32> -> vector<4x512xf32>
    %c8_21 = arith.constant 8 : index
    %c0_22 = arith.constant 0 : index
    %61 = vector.load %arg3[%c8_21, %c0_22] : memref<27x512xf32, #tpu.memory_space<vmem>>, vector<1x512xf32>
    %62 = vector.broadcast %61 : vector<1x512xf32> to vector<4x512xf32>
    %63 = arith.mulf %60, %62 : vector<4x512xf32>
    %c32 = arith.constant 32 : index
    %c0_23 = arith.constant 0 : index
    %64 = vector.load %arg9[%c32, %c0_23] : memref<108x512xf32, #tpu.memory_space<vmem>>, vector<4x512xf32>
    tpu.vector_store %arg9[%c32, %c0_23], %63 {strides = array<i32>} : memref<108x512xf32, #tpu.memory_space<vmem>>, vector<4x512xf32>,
    %65 = vector.extract_strided_slice %1 {offsets = [0, 503], sizes = [4, 9], strides = [1, 1]} : vector<4x512xf32> to vector<4x9xf32>
    %66 = vector.extract_strided_slice %1 {offsets = [0, 0], sizes = [4, 503], strides = [1, 1]} : vector<4x512xf32> to vector<4x503xf32>
    %67 = tpu.concatenate %65, %66 in 1 : vector<4x9xf32>, vector<4x503xf32> -> vector<4x512xf32>
    %c9 = arith.constant 9 : index
    %c0_24 = arith.constant 0 : index
    %68 = vector.load %arg3[%c9, %c0_24] : memref<27x512xf32, #tpu.memory_space<vmem>>, vector<1x512xf32>
    %69 = vector.broadcast %68 : vector<1x512xf32> to vector<4x512xf32>
    %70 = arith.mulf %67, %69 : vector<4x512xf32>
    %c36 = arith.constant 36 : index
    %c0_25 = arith.constant 0 : index
    %71 = vector.load %arg9[%c36, %c0_25] : memref<108x512xf32, #tpu.memory_space<vmem>>, vector<4x512xf32>
    tpu.vector_store %arg9[%c36, %c0_25], %70 {strides = array<i32>} : memref<108x512xf32, #tpu.memory_space<vmem>>, vector<4x512xf32>,
    %72 = vector.extract_strided_slice %1 {offsets = [0, 504], sizes = [4, 8], strides = [1, 1]} : vector<4x512xf32> to vector<4x8xf32>
    %73 = vector.extract_strided_slice %1 {offsets = [0, 0], sizes = [4, 504], strides = [1, 1]} : vector<4x512xf32> to vector<4x504xf32>
    %74 = tpu.concatenate %72, %73 in 1 : vector<4x8xf32>, vector<4x504xf32> -> vector<4x512xf32>
    %c10 = arith.constant 10 : index
    %c0_26 = arith.constant 0 : index
    %75 = vector.load %arg3[%c10, %c0_26] : memref<27x512xf32, #tpu.memory_space<vmem>>, vector<1x512xf32>
    %76 = vector.broadcast %75 : vector<1x512xf32> to vector<4x512xf32>
    %77 = arith.mulf %74, %76 : vector<4x512xf32>
    %c40 = arith.constant 40 : index
    %c0_27 = arith.constant 0 : index
    %78 = vector.load %arg9[%c40, %c0_27] : memref<108x512xf32, #tpu.memory_space<vmem>>, vector<4x512xf32>
    tpu.vector_store %arg9[%c40, %c0_27], %77 {strides = array<i32>} : memref<108x512xf32, #tpu.memory_space<vmem>>, vector<4x512xf32>,
    %79 = vector.extract_strided_slice %1 {offsets = [0, 505], sizes = [4, 7], strides = [1, 1]} : vector<4x512xf32> to vector<4x7xf32>
    %80 = vector.extract_strided_slice %1 {offsets = [0, 0], sizes = [4, 505], strides = [1, 1]} : vector<4x512xf32> to vector<4x505xf32>
    %81 = tpu.concatenate %79, %80 in 1 : vector<4x7xf32>, vector<4x505xf32> -> vector<4x512xf32>
    %c11 = arith.constant 11 : index
    %c0_28 = arith.constant 0 : index
    %82 = vector.load %arg3[%c11, %c0_28] : memref<27x512xf32, #tpu.memory_space<vmem>>, vector<1x512xf32>
    %83 = vector.broadcast %82 : vector<1x512xf32> to vector<4x512xf32>
    %84 = arith.mulf %81, %83 : vector<4x512xf32>
    %c44 = arith.constant 44 : index
    %c0_29 = arith.constant 0 : index
    %85 = vector.load %arg9[%c44, %c0_29] : memref<108x512xf32, #tpu.memory_space<vmem>>, vector<4x512xf32>
    tpu.vector_store %arg9[%c44, %c0_29], %84 {strides = array<i32>} : memref<108x512xf32, #tpu.memory_space<vmem>>, vector<4x512xf32>,
    %86 = vector.extract_strided_slice %1 {offsets = [0, 511], sizes = [4, 1], strides = [1, 1]} : vector<4x512xf32> to vector<4x1xf32>
    %87 = vector.extract_strided_slice %1 {offsets = [0, 0], sizes = [4, 511], strides = [1, 1]} : vector<4x512xf32> to vector<4x511xf32>
    %88 = tpu.concatenate %86, %87 in 1 : vector<4x1xf32>, vector<4x511xf32> -> vector<4x512xf32>
    %c12_30 = arith.constant 12 : index
    %c0_31 = arith.constant 0 : index
    %89 = vector.load %arg3[%c12_30, %c0_31] : memref<27x512xf32, #tpu.memory_space<vmem>>, vector<1x512xf32>
    %90 = vector.broadcast %89 : vector<1x512xf32> to vector<4x512xf32>
    %91 = arith.mulf %88, %90 : vector<4x512xf32>
    %c48 = arith.constant 48 : index
    %c0_32 = arith.constant 0 : index
    %92 = vector.load %arg9[%c48, %c0_32] : memref<108x512xf32, #tpu.memory_space<vmem>>, vector<4x512xf32>
    tpu.vector_store %arg9[%c48, %c0_32], %91 {strides = array<i32>} : memref<108x512xf32, #tpu.memory_space<vmem>>, vector<4x512xf32>,
    %c52 = arith.constant 52 : index
    %c0_33 = arith.constant 0 : index
    %93 = vector.load %arg9[%c52, %c0_33] : memref<108x512xf32, #tpu.memory_space<vmem>>, vector<4x512xf32>
    tpu.vector_store %arg9[%c52, %c0_33], %1 {strides = array<i32>} : memref<108x512xf32, #tpu.memory_space<vmem>>, vector<4x512xf32>,
    %94 = vector.extract_strided_slice %1 {offsets = [0, 1], sizes = [4, 511], strides = [1, 1]} : vector<4x512xf32> to vector<4x511xf32>
    %95 = vector.extract_strided_slice %1 {offsets = [0, 0], sizes = [4, 1], strides = [1, 1]} : vector<4x512xf32> to vector<4x1xf32>
    %96 = tpu.concatenate %94, %95 in 1 : vector<4x511xf32>, vector<4x1xf32> -> vector<4x512xf32>
    %c14 = arith.constant 14 : index
    %c0_34 = arith.constant 0 : index
    %97 = vector.load %arg3[%c14, %c0_34] : memref<27x512xf32, #tpu.memory_space<vmem>>, vector<1x512xf32>
    %98 = vector.broadcast %97 : vector<1x512xf32> to vector<4x512xf32>
    %99 = arith.mulf %96, %98 : vector<4x512xf32>
    %c56 = arith.constant 56 : index
    %c0_35 = arith.constant 0 : index
    %100 = vector.load %arg9[%c56, %c0_35] : memref<108x512xf32, #tpu.memory_space<vmem>>, vector<4x512xf32>
    tpu.vector_store %arg9[%c56, %c0_35], %99 {strides = array<i32>} : memref<108x512xf32, #tpu.memory_space<vmem>>, vector<4x512xf32>,
    %101 = vector.extract_strided_slice %1 {offsets = [0, 7], sizes = [4, 505], strides = [1, 1]} : vector<4x512xf32> to vector<4x505xf32>
    %102 = vector.extract_strided_slice %1 {offsets = [0, 0], sizes = [4, 7], strides = [1, 1]} : vector<4x512xf32> to vector<4x7xf32>
    %103 = tpu.concatenate %101, %102 in 1 : vector<4x505xf32>, vector<4x7xf32> -> vector<4x512xf32>
    %c15 = arith.constant 15 : index
    %c0_36 = arith.constant 0 : index
    %104 = vector.load %arg3[%c15, %c0_36] : memref<27x512xf32, #tpu.memory_space<vmem>>, vector<1x512xf32>
    %105 = vector.broadcast %104 : vector<1x512xf32> to vector<4x512xf32>
    %106 = arith.mulf %103, %105 : vector<4x512xf32>
    %c60 = arith.constant 60 : index
    %c0_37 = arith.constant 0 : index
    %107 = vector.load %arg9[%c60, %c0_37] : memref<108x512xf32, #tpu.memory_space<vmem>>, vector<4x512xf32>
    tpu.vector_store %arg9[%c60, %c0_37], %106 {strides = array<i32>} : memref<108x512xf32, #tpu.memory_space<vmem>>, vector<4x512xf32>,
    %108 = vector.extract_strided_slice %1 {offsets = [0, 8], sizes = [4, 504], strides = [1, 1]} : vector<4x512xf32> to vector<4x504xf32>
    %109 = vector.extract_strided_slice %1 {offsets = [0, 0], sizes = [4, 8], strides = [1, 1]} : vector<4x512xf32> to vector<4x8xf32>
    %110 = tpu.concatenate %108, %109 in 1 : vector<4x504xf32>, vector<4x8xf32> -> vector<4x512xf32>
    %c16_38 = arith.constant 16 : index
    %c0_39 = arith.constant 0 : index
    %111 = vector.load %arg3[%c16_38, %c0_39] : memref<27x512xf32, #tpu.memory_space<vmem>>, vector<1x512xf32>
    %112 = vector.broadcast %111 : vector<1x512xf32> to vector<4x512xf32>
    %113 = arith.mulf %110, %112 : vector<4x512xf32>
    %c64 = arith.constant 64 : index
    %c0_40 = arith.constant 0 : index
    %114 = vector.load %arg9[%c64, %c0_40] : memref<108x512xf32, #tpu.memory_space<vmem>>, vector<4x512xf32>
    tpu.vector_store %arg9[%c64, %c0_40], %113 {strides = array<i32>} : memref<108x512xf32, #tpu.memory_space<vmem>>, vector<4x512xf32>,
    %115 = vector.extract_strided_slice %1 {offsets = [0, 9], sizes = [4, 503], strides = [1, 1]} : vector<4x512xf32> to vector<4x503xf32>
    %116 = vector.extract_strided_slice %1 {offsets = [0, 0], sizes = [4, 9], strides = [1, 1]} : vector<4x512xf32> to vector<4x9xf32>
    %117 = tpu.concatenate %115, %116 in 1 : vector<4x503xf32>, vector<4x9xf32> -> vector<4x512xf32>
    %c17 = arith.constant 17 : index
    %c0_41 = arith.constant 0 : index
    %118 = vector.load %arg3[%c17, %c0_41] : memref<27x512xf32, #tpu.memory_space<vmem>>, vector<1x512xf32>
    %119 = vector.broadcast %118 : vector<1x512xf32> to vector<4x512xf32>
    %120 = arith.mulf %117, %119 : vector<4x512xf32>
    %c68 = arith.constant 68 : index
    %c0_42 = arith.constant 0 : index
    %121 = vector.load %arg9[%c68, %c0_42] : memref<108x512xf32, #tpu.memory_space<vmem>>, vector<4x512xf32>
    tpu.vector_store %arg9[%c68, %c0_42], %120 {strides = array<i32>} : memref<108x512xf32, #tpu.memory_space<vmem>>, vector<4x512xf32>,
    %122 = vector.extract_strided_slice %1 {offsets = [0, 55], sizes = [4, 457], strides = [1, 1]} : vector<4x512xf32> to vector<4x457xf32>
    %123 = vector.extract_strided_slice %1 {offsets = [0, 0], sizes = [4, 55], strides = [1, 1]} : vector<4x512xf32> to vector<4x55xf32>
    %124 = tpu.concatenate %122, %123 in 1 : vector<4x457xf32>, vector<4x55xf32> -> vector<4x512xf32>
    %c18 = arith.constant 18 : index
    %c0_43 = arith.constant 0 : index
    %125 = vector.load %arg3[%c18, %c0_43] : memref<27x512xf32, #tpu.memory_space<vmem>>, vector<1x512xf32>
    %126 = vector.broadcast %125 : vector<1x512xf32> to vector<4x512xf32>
    %127 = arith.mulf %124, %126 : vector<4x512xf32>
    %c72 = arith.constant 72 : index
    %c0_44 = arith.constant 0 : index
    %128 = vector.load %arg9[%c72, %c0_44] : memref<108x512xf32, #tpu.memory_space<vmem>>, vector<4x512xf32>
    tpu.vector_store %arg9[%c72, %c0_44], %127 {strides = array<i32>} : memref<108x512xf32, #tpu.memory_space<vmem>>, vector<4x512xf32>,
    %129 = vector.extract_strided_slice %1 {offsets = [0, 56], sizes = [4, 456], strides = [1, 1]} : vector<4x512xf32> to vector<4x456xf32>
    %130 = vector.extract_strided_slice %1 {offsets = [0, 0], sizes = [4, 56], strides = [1, 1]} : vector<4x512xf32> to vector<4x56xf32>
    %131 = tpu.concatenate %129, %130 in 1 : vector<4x456xf32>, vector<4x56xf32> -> vector<4x512xf32>
    %c19 = arith.constant 19 : index
    %c0_45 = arith.constant 0 : index
    %132 = vector.load %arg3[%c19, %c0_45] : memref<27x512xf32, #tpu.memory_space<vmem>>, vector<1x512xf32>
    %133 = vector.broadcast %132 : vector<1x512xf32> to vector<4x512xf32>
    %134 = arith.mulf %131, %133 : vector<4x512xf32>
    %c76 = arith.constant 76 : index
    %c0_46 = arith.constant 0 : index
    %135 = vector.load %arg9[%c76, %c0_46] : memref<108x512xf32, #tpu.memory_space<vmem>>, vector<4x512xf32>
    tpu.vector_store %arg9[%c76, %c0_46], %134 {strides = array<i32>} : memref<108x512xf32, #tpu.memory_space<vmem>>, vector<4x512xf32>,
    %136 = vector.extract_strided_slice %1 {offsets = [0, 57], sizes = [4, 455], strides = [1, 1]} : vector<4x512xf32> to vector<4x455xf32>
    %137 = vector.extract_strided_slice %1 {offsets = [0, 0], sizes = [4, 57], strides = [1, 1]} : vector<4x512xf32> to vector<4x57xf32>
    %138 = tpu.concatenate %136, %137 in 1 : vector<4x455xf32>, vector<4x57xf32> -> vector<4x512xf32>
    %c20_47 = arith.constant 20 : index
    %c0_48 = arith.constant 0 : index
    %139 = vector.load %arg3[%c20_47, %c0_48] : memref<27x512xf32, #tpu.memory_space<vmem>>, vector<1x512xf32>
    %140 = vector.broadcast %139 : vector<1x512xf32> to vector<4x512xf32>
    %141 = arith.mulf %138, %140 : vector<4x512xf32>
    %c80 = arith.constant 80 : index
    %c0_49 = arith.constant 0 : index
    %142 = vector.load %arg9[%c80, %c0_49] : memref<108x512xf32, #tpu.memory_space<vmem>>, vector<4x512xf32>
    tpu.vector_store %arg9[%c80, %c0_49], %141 {strides = array<i32>} : memref<108x512xf32, #tpu.memory_space<vmem>>, vector<4x512xf32>,
    %143 = vector.extract_strided_slice %1 {offsets = [0, 63], sizes = [4, 449], strides = [1, 1]} : vector<4x512xf32> to vector<4x449xf32>
    %144 = vector.extract_strided_slice %1 {offsets = [0, 0], sizes = [4, 63], strides = [1, 1]} : vector<4x512xf32> to vector<4x63xf32>
    %145 = tpu.concatenate %143, %144 in 1 : vector<4x449xf32>, vector<4x63xf32> -> vector<4x512xf32>
    %c21 = arith.constant 21 : index
    %c0_50 = arith.constant 0 : index
    %146 = vector.load %arg3[%c21, %c0_50] : memref<27x512xf32, #tpu.memory_space<vmem>>, vector<1x512xf32>
    %147 = vector.broadcast %146 : vector<1x512xf32> to vector<4x512xf32>
    %148 = arith.mulf %145, %147 : vector<4x512xf32>
    %c84 = arith.constant 84 : index
    %c0_51 = arith.constant 0 : index
    %149 = vector.load %arg9[%c84, %c0_51] : memref<108x512xf32, #tpu.memory_space<vmem>>, vector<4x512xf32>
    tpu.vector_store %arg9[%c84, %c0_51], %148 {strides = array<i32>} : memref<108x512xf32, #tpu.memory_space<vmem>>, vector<4x512xf32>,
    %150 = vector.extract_strided_slice %1 {offsets = [0, 64], sizes = [4, 448], strides = [1, 1]} : vector<4x512xf32> to vector<4x448xf32>
    %151 = vector.extract_strided_slice %1 {offsets = [0, 0], sizes = [4, 64], strides = [1, 1]} : vector<4x512xf32> to vector<4x64xf32>
    %152 = tpu.concatenate %150, %151 in 1 : vector<4x448xf32>, vector<4x64xf32> -> vector<4x512xf32>
    %c22 = arith.constant 22 : index
    %c0_52 = arith.constant 0 : index
    %153 = vector.load %arg3[%c22, %c0_52] : memref<27x512xf32, #tpu.memory_space<vmem>>, vector<1x512xf32>
    %154 = vector.broadcast %153 : vector<1x512xf32> to vector<4x512xf32>
    %155 = arith.mulf %152, %154 : vector<4x512xf32>
    %c88 = arith.constant 88 : index
    %c0_53 = arith.constant 0 : index
    %156 = vector.load %arg9[%c88, %c0_53] : memref<108x512xf32, #tpu.memory_space<vmem>>, vector<4x512xf32>
    tpu.vector_store %arg9[%c88, %c0_53], %155 {strides = array<i32>} : memref<108x512xf32, #tpu.memory_space<vmem>>, vector<4x512xf32>,
    %157 = vector.extract_strided_slice %1 {offsets = [0, 65], sizes = [4, 447], strides = [1, 1]} : vector<4x512xf32> to vector<4x447xf32>
    %158 = vector.extract_strided_slice %1 {offsets = [0, 0], sizes = [4, 65], strides = [1, 1]} : vector<4x512xf32> to vector<4x65xf32>
    %159 = tpu.concatenate %157, %158 in 1 : vector<4x447xf32>, vector<4x65xf32> -> vector<4x512xf32>
    %c23 = arith.constant 23 : index
    %c0_54 = arith.constant 0 : index
    %160 = vector.load %arg3[%c23, %c0_54] : memref<27x512xf32, #tpu.memory_space<vmem>>, vector<1x512xf32>
    %161 = vector.broadcast %160 : vector<1x512xf32> to vector<4x512xf32>
    %162 = arith.mulf %159, %161 : vector<4x512xf32>
    %c92 = arith.constant 92 : index
    %c0_55 = arith.constant 0 : index
    %163 = vector.load %arg9[%c92, %c0_55] : memref<108x512xf32, #tpu.memory_space<vmem>>, vector<4x512xf32>
    tpu.vector_store %arg9[%c92, %c0_55], %162 {strides = array<i32>} : memref<108x512xf32, #tpu.memory_space<vmem>>, vector<4x512xf32>,
    %164 = vector.extract_strided_slice %1 {offsets = [0, 71], sizes = [4, 441], strides = [1, 1]} : vector<4x512xf32> to vector<4x441xf32>
    %165 = vector.extract_strided_slice %1 {offsets = [0, 0], sizes = [4, 71], strides = [1, 1]} : vector<4x512xf32> to vector<4x71xf32>
    %166 = tpu.concatenate %164, %165 in 1 : vector<4x441xf32>, vector<4x71xf32> -> vector<4x512xf32>
    %c24_56 = arith.constant 24 : index
    %c0_57 = arith.constant 0 : index
    %167 = vector.load %arg3[%c24_56, %c0_57] : memref<27x512xf32, #tpu.memory_space<vmem>>, vector<1x512xf32>
    %168 = vector.broadcast %167 : vector<1x512xf32> to vector<4x512xf32>
    %169 = arith.mulf %166, %168 : vector<4x512xf32>
    %c96 = arith.constant 96 : index
    %c0_58 = arith.constant 0 : index
    %170 = vector.load %arg9[%c96, %c0_58] : memref<108x512xf32, #tpu.memory_space<vmem>>, vector<4x512xf32>
    tpu.vector_store %arg9[%c96, %c0_58], %169 {strides = array<i32>} : memref<108x512xf32, #tpu.memory_space<vmem>>, vector<4x512xf32>,
    %171 = vector.extract_strided_slice %1 {offsets = [0, 72], sizes = [4, 440], strides = [1, 1]} : vector<4x512xf32> to vector<4x440xf32>
    %172 = vector.extract_strided_slice %1 {offsets = [0, 0], sizes = [4, 72], strides = [1, 1]} : vector<4x512xf32> to vector<4x72xf32>
    %173 = tpu.concatenate %171, %172 in 1 : vector<4x440xf32>, vector<4x72xf32> -> vector<4x512xf32>
    %c25 = arith.constant 25 : index
    %c0_59 = arith.constant 0 : index
    %174 = vector.load %arg3[%c25, %c0_59] : memref<27x512xf32, #tpu.memory_space<vmem>>, vector<1x512xf32>
    %175 = vector.broadcast %174 : vector<1x512xf32> to vector<4x512xf32>
    %176 = arith.mulf %173, %175 : vector<4x512xf32>
    %c100 = arith.constant 100 : index
    %c0_60 = arith.constant 0 : index
    %177 = vector.load %arg9[%c100, %c0_60] : memref<108x512xf32, #tpu.memory_space<vmem>>, vector<4x512xf32>
    tpu.vector_store %arg9[%c100, %c0_60], %176 {strides = array<i32>} : memref<108x512xf32, #tpu.memory_space<vmem>>, vector<4x512xf32>,
    %178 = vector.extract_strided_slice %1 {offsets = [0, 73], sizes = [4, 439], strides = [1, 1]} : vector<4x512xf32> to vector<4x439xf32>
    %179 = vector.extract_strided_slice %1 {offsets = [0, 0], sizes = [4, 73], strides = [1, 1]} : vector<4x512xf32> to vector<4x73xf32>
    %180 = tpu.concatenate %178, %179 in 1 : vector<4x439xf32>, vector<4x73xf32> -> vector<4x512xf32>
    %c26 = arith.constant 26 : index
    %c0_61 = arith.constant 0 : index
    %181 = vector.load %arg3[%c26, %c0_61] : memref<27x512xf32, #tpu.memory_space<vmem>>, vector<1x512xf32>
    %182 = vector.broadcast %181 : vector<1x512xf32> to vector<4x512xf32>
    %183 = arith.mulf %180, %182 : vector<4x512xf32>
    %c104 = arith.constant 104 : index
    %c0_62 = arith.constant 0 : index
    %184 = vector.load %arg9[%c104, %c0_62] : memref<108x512xf32, #tpu.memory_space<vmem>>, vector<4x512xf32>
    tpu.vector_store %arg9[%c104, %c0_62], %183 {strides = array<i32>} : memref<108x512xf32, #tpu.memory_space<vmem>>, vector<4x512xf32>,
    %c0_63 = arith.constant 0 : index
    %c0_64 = arith.constant 0 : index
    %185 = vector.load %arg2[%c0_63, %c0_64] : memref<4x108xf32, #tpu.memory_space<vmem>>, vector<4x108xf32>
    %c0_65 = arith.constant 0 : index
    %c0_66 = arith.constant 0 : index
    %186 = vector.load %arg9[%c0_65, %c0_66] : memref<108x512xf32, #tpu.memory_space<vmem>>, vector<108x512xf32>
    %cst = arith.constant dense<0.000000e+00> : vector<4x512xf32>
    %187 = tpu.matmul %185, %186, %cst {dimension_numbers = #tpu.dot_dimension_numbers<[1], [0], [0], [1], [0, 0, 1, 1], [], []>, precision = #tpu.contract_precision<fp32>} : vector<4x108xf32>, vector<108x512xf32>, vector<4x512xf32> -> vector<4x512xf32>
    %c0_67 = arith.constant 0 : index
    %c0_68 = arith.constant 0 : index
    %c0_69 = arith.constant 0 : index
    %188 = vector.load %arg6[%c0_67, %c0_68, %c0_69] : memref<1x4x512xf32, #tpu.memory_space<vmem>>, vector<1x4x512xf32>
    %189 = vector.shape_cast %188 : vector<1x4x512xf32> to vector<4x512xf32>
    %190 = vector.shape_cast %187 : vector<4x512xf32> to vector<1x4x512xf32>
    tpu.vector_store %arg6[%c0_67, %c0_68, %c0_69], %190 {strides = array<i32>} : memref<1x4x512xf32, #tpu.memory_space<vmem>>, vector<1x4x512xf32>,
    %cst_70 = arith.constant dense<0.000000e+00> : vector<4xf32>
    %191 = vector.multi_reduction <add>, %187, %cst_70 [1] : vector<4x512xf32> to vector<4xf32>
    %192 = vector.shape_cast %191 : vector<4xf32> to vector<1x1x4xf32>
    %c0_71 = arith.constant 0 : index
    %c0_72 = arith.constant 0 : index
    %c0_73 = arith.constant 0 : index
    %193 = vector.load %arg7[%c0_71, %c0_72, %c0_73] : memref<1x1x4xf32, #tpu.memory_space<vmem>>, vector<1x1x4xf32>
    tpu.vector_store %arg7[%c0_71, %c0_72, %c0_73], %192 {strides = array<i32>} : memref<1x1x4xf32, #tpu.memory_space<vmem>>, vector<1x1x4xf32>,
    %194 = arith.mulf %187, %187 : vector<4x512xf32>
    %cst_74 = arith.constant dense<0.000000e+00> : vector<4xf32>
    %195 = vector.multi_reduction <add>, %194, %cst_74 [1] : vector<4x512xf32> to vector<4xf32>
    %196 = vector.shape_cast %195 : vector<4xf32> to vector<1x1x4xf32>
    %c0_75 = arith.constant 0 : index
    %c0_76 = arith.constant 0 : index
    %c0_77 = arith.constant 0 : index
    %197 = vector.load %arg8[%c0_75, %c0_76, %c0_77] : memref<1x1x4xf32, #tpu.memory_space<vmem>>, vector<1x1x4xf32>
    tpu.vector_store %arg8[%c0_75, %c0_76, %c0_77], %196 {strides = array<i32>} : memref<1x1x4xf32, #tpu.memory_space<vmem>>, vector<1x1x4xf32>,
    return
  }
  func.func @transform_0(%arg0: i32) -> (i32, i32, i32) {
    %c0_i32 = arith.constant 0 : i32
    %c0_i32_0 = arith.constant 0 : i32
    %c0_i32_1 = arith.constant 0 : i32
    return %arg0, %c0_i32, %c0_i32_0 : i32, i32, i32
  }
  func.func @transform_1(%arg0: i32) -> (i32, i32) {
    %c0_i32 = arith.constant 0 : i32
    %c0_i32_0 = arith.constant 0 : i32
    %c0_i32_1 = arith.constant 0 : i32
    return %c0_i32, %c0_i32_0 : i32, i32
  }
  func.func @transform_2(%arg0: i32) -> (i32, i32) {
    %c0_i32 = arith.constant 0 : i32
    %c0_i32_0 = arith.constant 0 : i32
    %c0_i32_1 = arith.constant 0 : i32
    return %c0_i32, %c0_i32_0 : i32, i32
  }
  func.func @transform_3(%arg0: i32) -> (i32, i32) {
    %c0_i32 = arith.constant 0 : i32
    %c0_i32_0 = arith.constant 0 : i32
    %c0_i32_1 = arith.constant 0 : i32
    return %c0_i32, %c0_i32_0 : i32, i32
  }
  func.func @transform_4(%arg0: i32) -> (i32, i32) {
    %c0_i32 = arith.constant 0 : i32
    %c0_i32_0 = arith.constant 0 : i32
    %c0_i32_1 = arith.constant 0 : i32
    return %c0_i32, %c0_i32_0 : i32, i32
  }
  func.func @transform_5(%arg0: i32) -> (i32, i32, i32) {
    %c0_i32 = arith.constant 0 : i32
    %c0_i32_0 = arith.constant 0 : i32
    %c0_i32_1 = arith.constant 0 : i32
    return %arg0, %c0_i32, %c0_i32_0 : i32, i32, i32
  }
  func.func @transform_6(%arg0: i32) -> (i32, i32, i32) {
    %c0_i32 = arith.constant 0 : i32
    %c0_i32_0 = arith.constant 0 : i32
    %c0_i32_1 = arith.constant 0 : i32
    return %arg0, %c0_i32, %c0_i32_0 : i32, i32, i32
  }
  func.func @transform_7(%arg0: i32) -> (i32, i32, i32) {
    %c0_i32 = arith.constant 0 : i32
    %c0_i32_0 = arith.constant 0 : i32
    %c0_i32_1 = arith.constant 0 : i32
    return %arg0, %c0_i32, %c0_i32_0 : i32, i32, i32
  }
}

</mosaic_0001>

<llo_original>
// kernel: tpu_custom_call.1
$region0: #{tpu_custom_call.1}
  #allocation0 [shape = 'u32[]', space=smem, size = 0x4, offset = 0x4, fixed_abs, tag = 'smem constant byte address 0x4 - core index']
  #allocation1 [shape = 'u32[144,128]{1,0:T(1,128)}', space=vmem, size = 0x12000, scoped, tag = 'internal scratch']
  #allocation2 [shape = 'f32[108,512]{1,0:T(8,128)}', space=vmem, size = 0x38000, scoped, tag = 'scratch operand']
  %s0 = inlined_call_operand.hbm [shape: f32[2,4,512], index: 0, kind: input, shape index: {}]
  %s1 = inlined_call_operand.vmem [shape: f32[4,108], index: 1, kind: input, shape index: {}]
  %s2 = inlined_call_operand.hbm [shape: f32[27,512], index: 2, kind: input, shape index: {}]
  %s3 = inlined_call_operand.vmem [shape: f32[4,1], index: 3, kind: input, shape index: {}]
  %s4 = inlined_call_operand.vmem [shape: f32[4,1], index: 4, kind: input, shape index: {}]
  %s5 = inlined_call_operand.hbm [shape: f32[2,4,512], index: 5, kind: output, shape index: {0}]
  %s6 = inlined_call_operand.hbm [shape: f32[2,1,4], index: 6, kind: output, shape index: {1}]
  %s7 = inlined_call_operand.hbm [shape: f32[2,1,4], index: 7, kind: output, shape index: {2}]
  %8 = xla_tuple %s5, %s6, %s7
  %s9 = sld [smem:[#allocation0]]
  $region77: #{tpu_custom_call.1} parent=0
    _
  %s11 = ssub.s32 1, %s9
  %s12 = scalar_select 0, %s11, %s9
  $region1: #{tpu_custom_call.1} parent=0
    #allocation3 [shape = 'u8[16384]{0}', space=vmem, size = 0x4000, scoped, tag = 'input window, operand 0']
    #allocation4 [shape = 's32[2]{0}', space=sflag, size = 0x8, scoped, tag = 'scoped memory for tpu_custom_call.1']
    #allocation5 [shape = 's32[2]{0}', space=sflag, size = 0x8, scoped, tag = 'scoped memory for tpu_custom_call.1']
    #allocation6 [shape = 'u8[65536]{0}', space=vmem, size = 0x10000, scoped, tag = 'input window, operand 2, single buffered']
    #allocation7 [shape = 's32[1]{0}', space=sflag, size = 0x4, scoped, tag = 'scoped memory for tpu_custom_call.1']
    #allocation8 [shape = 'u8[16384]{0}', space=vmem, size = 0x4000, scoped, tag = 'output window, operand 0']
    #allocation9 [shape = 'u8[1024]{0}', space=vmem, size = 0x400, scoped, tag = 'output window, operand 1']
    #allocation10 [shape = 's32[2]{0}', space=sflag, size = 0x8, scoped, tag = 'scoped memory for tpu_custom_call.1']
    #allocation11 [shape = 'u8[1024]{0}', space=vmem, size = 0x400, scoped, tag = 'output window, operand 2']
    %13 = vsyncpa [#allocation4], 0
    %s14 = scalar_lea.sflag [#allocation4], 1
    %15 = vsyncpa %s14, 0
    %16 = vsyncpa [#allocation7], 0
    %17 = vsyncpa [#allocation5], 0
    %s18 = scalar_lea.sflag [#allocation5], 1
    %19 = vsyncpa %s18, 0
    %20 = vsyncpa [#allocation10], 0
    %s21 = scalar_lea.sflag [#allocation10], 1
    %22 = vsyncpa %s21, 0
    loop: start=0, step=1, limit=4
    $region2: #{tpu_custom_call.1} parent=1 // loop_pre_header
      _
    $region3: #{tpu_custom_call.1} parent=1 // loop_header
      %s24 = sphi 0, %s28
      %p25 = scmp.ge.s32.totalorder %s24, 4
      %s34 = sphi 0, %s36
      %s37 = sphi 0, %s34
      %s38 = sphi 0, %s37
      %s54 = sphi 0, %s38
      %s58 = sphi 0, %s58
      %s60 = sphi 0, %s58
      %s61 = sphi 0, %s60
      %s75 = sphi 0, %s61
      %s79 = sphi 0, %s79
      %s81 = sphi 0, %s79
      %s82 = sphi 0, %s81
      %s96 = sphi 0, %s82
      %s100 = sphi 0, %s100
      %s102 = sphi 0, %s100
      %s103 = sphi 0, %s102
      %s117 = sphi 0, %s103
      %s121 = sphi 0, %s121
      %s123 = sphi 0, %s121
      %s124 = sphi 0, %s123
      %s138 = sphi 0, %s124
      %s144 = sphi 0, %s146
      %s147 = sphi 0, %s144
      %s148 = sphi 0, %s147
      %s164 = sphi 0, %s148
      %s170 = sphi 0, %s172
      %s173 = sphi 0, %s170
      %s174 = sphi 0, %s173
      %s190 = sphi 0, %s174
      %s196 = sphi 0, %s198
      %s199 = sphi 0, %s196
      %s200 = sphi 0, %s199
      %s216 = sphi 0, %s200
    $region4: #{tpu_custom_call.1} parent=1 // loop_header_branch
      %27 = sbr.rel (%p25) target = $region8
    $region5: #{tpu_custom_call.1} parent=1 // loop_body
      %s29 = ssub.s32 %s24, 1
      %s30 = ssub.s32 %s24, 2
      %s31 = sadd.s32 %s24, 1
      %s32 = ssub.s32 %s24, %s31
      %p33 = scmp.eq.s32.totalorder %s32, 0
      %s35 = sadd.s32 %s34, 1
      %s36 = scalar_select %p33, %s34, %s35
      %p39 = pneg %p33
      %p40 = scmp.eq.s32.totalorder %s24, 1
      %p41 = por %p39, %p40
      %p42 = scmp.ne.s32.totalorder %s34, %s37
      %p43 = scmp.eq.s32.totalorder %s24, 0
      %p44 = por %p42, %p43
      %p45 = scmp.ne.s32.totalorder %s34, %s37
      %p46 = scmp.eq.s32.totalorder %s29, 1
      %p47 = por %p45, %p46
      %p48 = scmp.ne.s32.totalorder %s37, %s38
      %p49 = scmp.eq.s32.totalorder %s29, 0
      %p50 = por %p48, %p49
      %p51 = scmp.ne.s32.totalorder %s37, %s38
      %p52 = scmp.eq.s32.totalorder %s30, 1
      %p53 = por %p51, %p52
      %p55 = scmp.ne.s32.totalorder %s38, %s54
      %p56 = scmp.eq.s32.totalorder %s30, 0
      %p57 = por %p55, %p56
      %s59 = sadd.s32 %s58, 1
      %p62 = scmp.eq.s32.totalorder %s24, 1
      %p63 = scmp.ne.s32.totalorder %s58, %s60
      %p64 = scmp.eq.s32.totalorder %s24, 0
      %p65 = por %p63, %p64
      %p66 = scmp.ne.s32.totalorder %s58, %s60
      %p67 = scmp.eq.s32.totalorder %s29, 1
      %p68 = por %p66, %p67
      %p69 = scmp.ne.s32.totalorder %s60, %s61
      %p70 = scmp.eq.s32.totalorder %s29, 0
      %p71 = por %p69, %p70
      %p72 = scmp.ne.s32.totalorder %s60, %s61
      %p73 = scmp.eq.s32.totalorder %s30, 1
      %p74 = por %p72, %p73
      %p76 = scmp.ne.s32.totalorder %s61, %s75
      %p77 = scmp.eq.s32.totalorder %s30, 0
      %p78 = por %p76, %p77
      %s80 = sadd.s32 %s79, 1
      %p83 = scmp.eq.s32.totalorder %s24, 1
      %p84 = scmp.ne.s32.totalorder %s79, %s81
      %p85 = scmp.eq.s32.totalorder %s24, 0
      %p86 = por %p84, %p85
      %p87 = scmp.ne.s32.totalorder %s79, %s81
      %p88 = scmp.eq.s32.totalorder %s29, 1
      %p89 = por %p87, %p88
      %p90 = scmp.ne.s32.totalorder %s81, %s82
      %p91 = scmp.eq.s32.totalorder %s29, 0
      %p92 = por %p90, %p91
      %p93 = scmp.ne.s32.totalorder %s81, %s82
      %p94 = scmp.eq.s32.totalorder %s30, 1
      %p95 = por %p93, %p94
      %p97 = scmp.ne.s32.totalorder %s82, %s96
      %p98 = scmp.eq.s32.totalorder %s30, 0
      %p99 = por %p97, %p98
      %s101 = sadd.s32 %s100, 1
      %p104 = scmp.eq.s32.totalorder %s24, 1
      %p105 = scmp.ne.s32.totalorder %s100, %s102
      %p106 = scmp.eq.s32.totalorder %s24, 0
      %p107 = por %p105, %p106
      %p108 = scmp.ne.s32.totalorder %s100, %s102
      %p109 = scmp.eq.s32.totalorder %s29, 1
      %p110 = por %p108, %p109
      %p111 = scmp.ne.s32.totalorder %s102, %s103
      %p112 = scmp.eq.s32.totalorder %s29, 0
      %p113 = por %p111, %p112
      %p114 = scmp.ne.s32.totalorder %s102, %s103
      %p115 = scmp.eq.s32.totalorder %s30, 1
      %p116 = por %p114, %p115
      %p118 = scmp.ne.s32.totalorder %s103, %s117
      %p119 = scmp.eq.s32.totalorder %s30, 0
      %p120 = por %p118, %p119
      %s122 = sadd.s32 %s121, 1
      %p125 = scmp.eq.s32.totalorder %s24, 1
      %p126 = scmp.ne.s32.totalorder %s121, %s123
      %p127 = scmp.eq.s32.totalorder %s24, 0
      %p128 = por %p126, %p127
      %p129 = scmp.ne.s32.totalorder %s121, %s123
      %p130 = scmp.eq.s32.totalorder %s29, 1
      %p131 = por %p129, %p130
      %p132 = scmp.ne.s32.totalorder %s123, %s124
      %p133 = scmp.eq.s32.totalorder %s29, 0
      %p134 = por %p132, %p133
      %p135 = scmp.ne.s32.totalorder %s123, %s124
      %p136 = scmp.eq.s32.totalorder %s30, 1
      %p137 = por %p135, %p136
      %p139 = scmp.ne.s32.totalorder %s124, %s138
      %p140 = scmp.eq.s32.totalorder %s30, 0
      %p141 = por %p139, %p140
      %s142 = ssub.s32 %s24, %s31
      %p143 = scmp.eq.s32.totalorder %s142, 0
      %s145 = sadd.s32 %s144, 1
      %s146 = scalar_select %p143, %s144, %s145
      %p149 = pneg %p143
      %p150 = scmp.eq.s32.totalorder %s24, 1
      %p151 = por %p149, %p150
      %p152 = scmp.ne.s32.totalorder %s144, %s147
      %p153 = scmp.eq.s32.totalorder %s24, 0
      %p154 = por %p152, %p153
      %p155 = scmp.ne.s32.totalorder %s144, %s147
      %p156 = scmp.eq.s32.totalorder %s29, 1
      %p157 = por %p155, %p156
      %p158 = scmp.ne.s32.totalorder %s147, %s148
      %p159 = scmp.eq.s32.totalorder %s29, 0
      %p160 = por %p158, %p159
      %p161 = scmp.ne.s32.totalorder %s147, %s148
      %p162 = scmp.eq.s32.totalorder %s30, 1
      %p163 = por %p161, %p162
      %p165 = scmp.ne.s32.totalorder %s148, %s164
      %p166 = scmp.eq.s32.totalorder %s30, 0
      %p167 = por %p165, %p166
      %s168 = ssub.s32 %s24, %s31
      %p169 = scmp.eq.s32.totalorder %s168, 0
      %s171 = sadd.s32 %s170, 1
      %s172 = scalar_select %p169, %s170, %s171
      %p175 = pneg %p169
      %p176 = scmp.eq.s32.totalorder %s24, 1
      %p177 = por %p175, %p176
      %p178 = scmp.ne.s32.totalorder %s170, %s173
      %p179 = scmp.eq.s32.totalorder %s24, 0
      %p180 = por %p178, %p179
      %p181 = scmp.ne.s32.totalorder %s170, %s173
      %p182 = scmp.eq.s32.totalorder %s29, 1
      %p183 = por %p181, %p182
      %p184 = scmp.ne.s32.totalorder %s173, %s174
      %p185 = scmp.eq.s32.totalorder %s29, 0
      %p186 = por %p184, %p185
      %p187 = scmp.ne.s32.totalorder %s173, %s174
      %p188 = scmp.eq.s32.totalorder %s30, 1
      %p189 = por %p187, %p188
      %p191 = scmp.ne.s32.totalorder %s174, %s190
      %p192 = scmp.eq.s32.totalorder %s30, 0
      %p193 = por %p191, %p192
      %s194 = ssub.s32 %s24, %s31
      %p195 = scmp.eq.s32.totalorder %s194, 0
      %s197 = sadd.s32 %s196, 1
      %s198 = scalar_select %p195, %s196, %s197
      %p201 = pneg %p195
      %p202 = scmp.eq.s32.totalorder %s24, 1
      %p203 = por %p201, %p202
      %p204 = scmp.ne.s32.totalorder %s196, %s199
      %p205 = scmp.eq.s32.totalorder %s24, 0
      %p206 = por %p204, %p205
      %p207 = scmp.ne.s32.totalorder %s196, %s199
      %p208 = scmp.eq.s32.totalorder %s29, 1
      %p209 = por %p207, %p208
      %p210 = scmp.ne.s32.totalorder %s199, %s200
      %p211 = scmp.eq.s32.totalorder %s29, 0
      %p212 = por %p210, %p211
      %p213 = scmp.ne.s32.totalorder %s199, %s200
      %p214 = scmp.eq.s32.totalorder %s30, 1
      %p215 = por %p213, %p214
      %p217 = scmp.ne.s32.totalorder %s200, %s216
      %p218 = scmp.eq.s32.totalorder %s30, 0
      %p219 = por %p217, %p218
      %p220 = scmp.le.s32.totalorder 1, %s24
      %p221 = scmp.lt.s32.totalorder %s24, 3
      %p222 = pnand %p220, %p221
      %p223 = pneg %p222
      // Predicated region
      $region9: #{tpu_custom_call.1} parent=5 // pred_check
        _
      $region10: #{tpu_custom_call.1} parent=5 // pred_check_branch
        %225 = sbr.rel (%p222) target = $region12
      $region11: #{tpu_custom_call.1} parent=5 // pred_region
        %s226 = ssub.s32 %s24, 1
        // Predicated region
        $region13: #{tpu_custom_call.1} parent=11 // pred_check
          %p227 = pneg %p71
        $region14: #{tpu_custom_call.1} parent=11 // pred_check_branch
          %229 = sbr.rel (%p227) target = $region16
        $region15: #{tpu_custom_call.1} parent=11 // pred_region
          _
        $region16: #{tpu_custom_call.1} parent=11 // pred_fallthru
          _
        // Predicated region
        $region17: #{tpu_custom_call.1} parent=11 // pred_check
          %p230 = pneg %p92
        $region18: #{tpu_custom_call.1} parent=11 // pred_check_branch
          %232 = sbr.rel (%p230) target = $region20
        $region19: #{tpu_custom_call.1} parent=11 // pred_region
          %s234 = ssub.s32 2048, 2048
          %235 = vsyncadd [#allocation7], %s234
          %s236 = sshll.u32 [#allocation6], 4
          %s237 = int_to_ptr.vmem [resolvable:$true] %s236
          %242 = dma.hbm_to_vmem [thread:$0]  %s2, 2048, %s237, [#allocation7], 512, 512, 32
        $region20: #{tpu_custom_call.1} parent=11 // pred_fallthru
          _
        // Predicated region
        $region21: #{tpu_custom_call.1} parent=11 // pred_check
          %p243 = pneg %p113
        $region22: #{tpu_custom_call.1} parent=11 // pred_check_branch
          %245 = sbr.rel (%p243) target = $region24
        $region23: #{tpu_custom_call.1} parent=11 // pred_region
          _
        $region24: #{tpu_custom_call.1} parent=11 // pred_fallthru
          _
        // Predicated region
        $region25: #{tpu_custom_call.1} parent=11 // pred_check
          %p246 = pneg %p134
        $region26: #{tpu_custom_call.1} parent=11 // pred_check_branch
          %248 = sbr.rel (%p246) target = $region28
        $region27: #{tpu_custom_call.1} parent=11 // pred_region
          _
        $region28: #{tpu_custom_call.1} parent=11 // pred_fallthru
          _
      $region12: #{tpu_custom_call.1} parent=5 // pred_fallthru
        _
      %p249 = scmp.lt.s32.totalorder %s24, 2
      // Predicated region
      $region29: #{tpu_custom_call.1} parent=5 // pred_check
        %p250 = pneg %p249
      $region30: #{tpu_custom_call.1} parent=5 // pred_check_branch
        %252 = sbr.rel (%p250) target = $region32
      $region31: #{tpu_custom_call.1} parent=5 // pred_region
        // Predicated region
        $region33: #{tpu_custom_call.1} parent=31 // pred_check
          %p253 = pneg %p44
        $region34: #{tpu_custom_call.1} parent=31 // pred_check_branch
          %255 = sbr.rel (%p253) target = $region36
        $region35: #{tpu_custom_call.1} parent=31 // pred_region
          %s256 = sand.u32 %s34, 1
          %s257 = scalar_lea.sflag [#allocation4], %s256
          %s258 = sand.u32 %s34, 1
          %s259 = smul.addr %s258, 16
          %s260 = scalar_lea.vmem [#allocation3], %s259
          %s262 = ssub.s32 256, 256
          %263 = vsyncadd %s257, %s262
          %s264 = smul.addr %s24, 4
          %s265 = smul.addr %s264, 64
          %s266 = scalar_lea.hbm %s0, %s265
          %s268 = sshll.u32 %s260, 4
          %s269 = int_to_ptr.vmem [resolvable:$true] %s268
          %271 = dma.hbm_to_vmem [thread:$0]  %s266, 256, %s269, %s257
        $region36: #{tpu_custom_call.1} parent=31 // pred_fallthru
          _
      $region32: #{tpu_custom_call.1} parent=5 // pred_fallthru
        _
      %p272 = scmp.le.s32.totalorder 1, %s24
      %p273 = scmp.lt.s32.totalorder %s24, 3
      %p274 = pnand %p272, %p273
      %p275 = pneg %p274
      // Predicated region
      $region37: #{tpu_custom_call.1} parent=5 // pred_check
        _
      $region38: #{tpu_custom_call.1} parent=5 // pred_check_branch
        %277 = sbr.rel (%p274) target = $region40
      $region39: #{tpu_custom_call.1} parent=5 // pred_region
        %s278 = ssub.s32 %s24, 1
        %s279 = sand.u32 %s37, 1
        %s280 = scalar_lea.sflag [#allocation4], %s279
        %s281 = sand.u32 %s37, 1
        %s282 = smul.addr %s281, 16
        %s283 = scalar_lea.vmem [#allocation3], %s282
        // Predicated region
        $region41: #{tpu_custom_call.1} parent=39 // pred_check
          %p284 = pneg %p50
        $region42: #{tpu_custom_call.1} parent=39 // pred_check_branch
          %286 = sbr.rel (%p284) target = $region44
        $region43: #{tpu_custom_call.1} parent=39 // pred_region
          %287 = dma.done %s280, 256
        $region44: #{tpu_custom_call.1} parent=39 // pred_fallthru
          _
        // Predicated region
        $region45: #{tpu_custom_call.1} parent=39 // pred_check
          %p288 = pneg %p92
        $region46: #{tpu_custom_call.1} parent=39 // pred_check_branch
          %290 = sbr.rel (%p288) target = $region48
        $region47: #{tpu_custom_call.1} parent=39 // pred_region
          %291 = dma.done [#allocation7], 2048
        $region48: #{tpu_custom_call.1} parent=39 // pred_fallthru
          _
        %s292 = sand.u32 %s37, 1
        %s293 = scalar_lea.sflag [#allocation4], %s292
        %s294 = sand.u32 %s37, 1
        %s295 = smul.addr %s294, 16
        %s296 = scalar_lea.vmem [#allocation3], %s295
        %p297 = pneg %p50
        %p298 = pneg %p47
        %p299 = pneg %p71
        %p300 = pneg %p68
        %p301 = pneg %p92
        %p302 = pneg %p89
        %p303 = pneg %p113
        %p304 = pneg %p110
        %p305 = pneg %p134
        %p306 = pneg %p131
        %p307 = pneg %p160
        %p308 = pneg %p157
        %s309 = sand.u32 %s147, 1
        %s310 = scalar_lea.sflag [#allocation5], %s309
        %s311 = sand.u32 %s147, 1
        %s312 = smul.addr %s311, 16
        %s313 = scalar_lea.vmem [#allocation8], %s312
        %p314 = pneg %p186
        %p315 = pneg %p183
        %s316 = sand.u32 %s29, 1
        %s317 = scalar_lea.sflag [#allocation10], %s316
        %s318 = sand.u32 %s173, 1
        %s319 = scalar_lea.vmem [#allocation9], %s318
        %p320 = pneg %p212
        %p321 = pneg %p209
        %s322 = sand.u32 %s29, 1
        %s323 = scalar_lea.sflag [#allocation10], %s322
        %s324 = sand.u32 %s199, 1
        %s325 = scalar_lea.vmem [#allocation11], %s324
        %v326 = vld [vmem:[%s283] sm:$0xff]
        %v327 = vld [vmem:[%s283 + $0x8] sm:$0xff]
        %v329 = vcombine.high %v327, %v327
        %330 = vrot.lane.b32.xlu0 %v329, 73
        %v331 = vpop.permute.xlu0 %330
        %v334 = vcombine.high %v326, %v326
        %335 = vrot.lane.b32.xlu0 %v326, 73
        %v336 = vpop.permute.xlu0 %335
        %337 = vrot.lane.b32.xlu0 %v334, 73
        %v338 = vpop.permute.xlu0 %337
        %339 = vrot.lane.b32.xlu0 %v327, 73
        %v340 = vpop.permute.xlu0 %339
        %vm341 = vcmask 596992
        %v342 = vsel %vm341, %v336, %v338
        %v343 = vsel %vm341, %v338, %v340
        %v344 = vsel %vm341, %v340, %v331
        %v349 = vsel %vm341, %v331, %v336
        %v350 = vld [vmem:[#allocation6] ss:$8 sm:$0xf]
        %v352 = vlaneseq
        %v353 = vshrl.u32 %v352, 7
        %v354 = vsub.s32 0, %v353
        %v355 = vrot.slane %v350, %v354
        %v356 = vlaneseq
        %v357 = vshrl.u32 %v356, 7
        %v358 = vsub.s32 1, %v357
        %v359 = vrot.slane %v350, %v358
        %v360 = vlaneseq
        %v361 = vshrl.u32 %v360, 7
        %v362 = vsub.s32 2, %v361
        %v363 = vrot.slane %v350, %v362
        %v364 = vlaneseq
        %v365 = vshrl.u32 %v364, 7
        %v366 = vsub.s32 3, %v365
        %v367 = vrot.slane %v350, %v366
        %v372 = vmul.f32 %v349, %v355
        %v373 = vmul.f32 %v342, %v359
        %v374 = vmul.f32 %v343, %v363
        %v375 = vmul.f32 %v344, %v367
        %376 = vst [vmem:[#allocation2] sm:$0xf] %v372
        %377 = vst [vmem:[#allocation2 + $0x8] sm:$0xf] %v373
        %378 = vst [vmem:[#allocation2 + $0x10] sm:$0xf] %v374
        %379 = vst [vmem:[#allocation2 + $0x18] sm:$0xf] %v375
        %380 = vrot.lane.b32.xlu0 %v329, 72
        %v381 = vpop.permute.xlu0 %380
        %383 = vrot.lane.b32.xlu0 %v326, 72
        %v384 = vpop.permute.xlu0 %383
        %385 = vrot.lane.b32.xlu0 %v334, 72
        %v386 = vpop.permute.xlu0 %385
        %387 = vrot.lane.b32.xlu0 %v327, 72
        %v388 = vpop.permute.xlu0 %387
        %vm389 = vcmask 588800
        %v390 = vsel %vm389, %v384, %v386
        %v391 = vsel %vm389, %v386, %v388
        %v392 = vsel %vm389, %v388, %v381
        %v397 = vsel %vm389, %v381, %v384
        %s398 = scalar_lea.vmem [#allocation6], 1
        %v399 = vld [vmem:[%s398] ss:$8 sm:$0xf]
        %v401 = vlaneseq
        %v402 = vshrl.u32 %v401, 7
        %v403 = vsub.s32 0, %v402
        %v404 = vrot.slane %v399, %v403
        %v405 = vlaneseq
        %v406 = vshrl.u32 %v405, 7
        %v407 = vsub.s32 1, %v406
        %v408 = vrot.slane %v399, %v407
        %v409 = vlaneseq
        %v410 = vshrl.u32 %v409, 7
        %v411 = vsub.s32 2, %v410
        %v412 = vrot.slane %v399, %v411
        %v413 = vlaneseq
        %v414 = vshrl.u32 %v413, 7
        %v415 = vsub.s32 3, %v414
        %v416 = vrot.slane %v399, %v415
        %v421 = vmul.f32 %v397, %v404
        %v422 = vmul.f32 %v390, %v408
        %v423 = vmul.f32 %v391, %v412
        %v424 = vmul.f32 %v392, %v416
        %v429 = vrot.slane %v421, 4
        %v430 = vrot.slane %v422, 4
        %v431 = vrot.slane %v423, 4
        %v432 = vrot.slane %v424, 4
        %437 = vst [vmem:[#allocation2] sm:$0xf0] %v429
        %438 = vst [vmem:[#allocation2 + $0x8] sm:$0xf0] %v430
        %439 = vst [vmem:[#allocation2 + $0x10] sm:$0xf0] %v431
        %440 = vst [vmem:[#allocation2 + $0x18] sm:$0xf0] %v432
        %441 = vrot.lane.b32.xlu0 %v329, 71
        %v442 = vpop.permute.xlu0 %441
        %444 = vrot.lane.b32.xlu0 %v326, 71
        %v445 = vpop.permute.xlu0 %444
        %446 = vrot.lane.b32.xlu0 %v334, 71
        %v447 = vpop.permute.xlu0 %446
        %448 = vrot.lane.b32.xlu0 %v327, 71
        %v449 = vpop.permute.xlu0 %448
        %vm450 = vcmask 580608
        %v451 = vsel %vm450, %v445, %v447
        %v452 = vsel %vm450, %v447, %v449
        %v453 = vsel %vm450, %v449, %v442
        %v458 = vsel %vm450, %v442, %v445
        %s459 = scalar_lea.vmem [#allocation6], 2
        %v460 = vld [vmem:[%s459] ss:$8 sm:$0xf]
        %v462 = vlaneseq
        %v463 = vshrl.u32 %v462, 7
        %v464 = vsub.s32 0, %v463
        %v465 = vrot.slane %v460, %v464
        %v466 = vlaneseq
        %v467 = vshrl.u32 %v466, 7
        %v468 = vsub.s32 1, %v467
        %v469 = vrot.slane %v460, %v468
        %v470 = vlaneseq
        %v471 = vshrl.u32 %v470, 7
        %v472 = vsub.s32 2, %v471
        %v473 = vrot.slane %v460, %v472
        %v474 = vlaneseq
        %v475 = vshrl.u32 %v474, 7
        %v476 = vsub.s32 3, %v475
        %v477 = vrot.slane %v460, %v476
        %v482 = vmul.f32 %v458, %v465
        %v483 = vmul.f32 %v451, %v469
        %v484 = vmul.f32 %v452, %v473
        %v485 = vmul.f32 %v453, %v477
        %486 = vst [vmem:[#allocation2 + $0x20] sm:$0xf] %v482
        %487 = vst [vmem:[#allocation2 + $0x28] sm:$0xf] %v483
        %488 = vst [vmem:[#allocation2 + $0x30] sm:$0xf] %v484
        %489 = vst [vmem:[#allocation2 + $0x38] sm:$0xf] %v485
        %490 = vrot.lane.b32.xlu0 %v329, 65
        %v491 = vpop.permute.xlu0 %490
        %493 = vrot.lane.b32.xlu0 %v326, 65
        %v494 = vpop.permute.xlu0 %493
        %495 = vrot.lane.b32.xlu0 %v334, 65
        %v496 = vpop.permute.xlu0 %495
        %497 = vrot.lane.b32.xlu0 %v327, 65
        %v498 = vpop.permute.xlu0 %497
        %vm499 = vcmask 531456
        %v500 = vsel %vm499, %v494, %v496
        %v501 = vsel %vm499, %v496, %v498
        %v502 = vsel %vm499, %v498, %v491
        %v507 = vsel %vm499, %v491, %v494
        %s508 = scalar_lea.vmem [#allocation6], 3
        %v509 = vld [vmem:[%s508] ss:$8 sm:$0xf]
        %v511 = vlaneseq
        %v512 = vshrl.u32 %v511, 7
        %v513 = vsub.s32 0, %v512
        %v514 = vrot.slane %v509, %v513
        %v515 = vlaneseq
        %v516 = vshrl.u32 %v515, 7
        %v517 = vsub.s32 1, %v516
        %v518 = vrot.slane %v509, %v517
        %v519 = vlaneseq
        %v520 = vshrl.u32 %v519, 7
        %v521 = vsub.s32 2, %v520
        %v522 = vrot.slane %v509, %v521
        %v523 = vlaneseq
        %v524 = vshrl.u32 %v523, 7
        %v525 = vsub.s32 3, %v524
        %v526 = vrot.slane %v509, %v525
        %v531 = vmul.f32 %v507, %v514
        %v532 = vmul.f32 %v500, %v518
        %v533 = vmul.f32 %v501, %v522
        %v534 = vmul.f32 %v502, %v526
        %v539 = vrot.slane %v531, 4
        %v540 = vrot.slane %v532, 4
        %v541 = vrot.slane %v533, 4
        %v542 = vrot.slane %v534, 4
        %547 = vst [vmem:[#allocation2 + $0x20] sm:$0xf0] %v539
        %548 = vst [vmem:[#allocation2 + $0x28] sm:$0xf0] %v540
        %549 = vst [vmem:[#allocation2 + $0x30] sm:$0xf0] %v541
        %550 = vst [vmem:[#allocation2 + $0x38] sm:$0xf0] %v542
        %551 = vrot.lane.b32.xlu0 %v329, 64
        %v552 = vpop.permute.xlu0 %551
        %554 = vrot.lane.b32.xlu0 %v326, 64
        %v555 = vpop.permute.xlu0 %554
        %556 = vrot.lane.b32.xlu0 %v334, 64
        %v557 = vpop.permute.xlu0 %556
        %558 = vrot.lane.b32.xlu0 %v327, 64
        %v559 = vpop.permute.xlu0 %558
        %vm560 = vcmask 523264
        %v561 = vsel %vm560, %v555, %v557
        %v562 = vsel %vm560, %v557, %v559
        %v563 = vsel %vm560, %v559, %v552
        %v568 = vsel %vm560, %v552, %v555
        %s569 = scalar_lea.vmem [#allocation6], 4
        %v570 = vld [vmem:[%s569] ss:$8 sm:$0xf]
        %v572 = vlaneseq
        %v573 = vshrl.u32 %v572, 7
        %v574 = vsub.s32 0, %v573
        %v575 = vrot.slane %v570, %v574
        %v576 = vlaneseq
        %v577 = vshrl.u32 %v576, 7
        %v578 = vsub.s32 1, %v577
        %v579 = vrot.slane %v570, %v578
        %v580 = vlaneseq
        %v581 = vshrl.u32 %v580, 7
        %v582 = vsub.s32 2, %v581
        %v583 = vrot.slane %v570, %v582
        %v584 = vlaneseq
        %v585 = vshrl.u32 %v584, 7
        %v586 = vsub.s32 3, %v585
        %v587 = vrot.slane %v570, %v586
        %v592 = vmul.f32 %v568, %v575
        %v593 = vmul.f32 %v561, %v579
        %v594 = vmul.f32 %v562, %v583
        %v595 = vmul.f32 %v563, %v587
        %596 = vst [vmem:[#allocation2 + $0x40] sm:$0xf] %v592
        %597 = vst [vmem:[#allocation2 + $0x48] sm:$0xf] %v593
        %598 = vst [vmem:[#allocation2 + $0x50] sm:$0xf] %v594
        %599 = vst [vmem:[#allocation2 + $0x58] sm:$0xf] %v595
        %600 = vrot.lane.b32.xlu0 %v329, 63
        %v601 = vpop.permute.xlu0 %600
        %603 = vrot.lane.b32.xlu0 %v326, 63
        %v604 = vpop.permute.xlu0 %603
        %605 = vrot.lane.b32.xlu0 %v334, 63
        %v606 = vpop.permute.xlu0 %605
        %607 = vrot.lane.b32.xlu0 %v327, 63
        %v608 = vpop.permute.xlu0 %607
        %vm609 = vcmask 515072
        %v610 = vsel %vm609, %v604, %v606
        %v611 = vsel %vm609, %v606, %v608
        %v612 = vsel %vm609, %v608, %v601
        %v617 = vsel %vm609, %v601, %v604
        %s618 = scalar_lea.vmem [#allocation6], 5
        %v619 = vld [vmem:[%s618] ss:$8 sm:$0xf]
        %v621 = vlaneseq
        %v622 = vshrl.u32 %v621, 7
        %v623 = vsub.s32 0, %v622
        %v624 = vrot.slane %v619, %v623
        %v625 = vlaneseq
        %v626 = vshrl.u32 %v625, 7
        %v627 = vsub.s32 1, %v626
        %v628 = vrot.slane %v619, %v627
        %v629 = vlaneseq
        %v630 = vshrl.u32 %v629, 7
        %v631 = vsub.s32 2, %v630
        %v632 = vrot.slane %v619, %v631
        %v633 = vlaneseq
        %v634 = vshrl.u32 %v633, 7
        %v635 = vsub.s32 3, %v634
        %v636 = vrot.slane %v619, %v635
        %v641 = vmul.f32 %v617, %v624
        %v642 = vmul.f32 %v610, %v628
        %v643 = vmul.f32 %v611, %v632
        %v644 = vmul.f32 %v612, %v636
        %v649 = vrot.slane %v641, 4
        %v650 = vrot.slane %v642, 4
        %v651 = vrot.slane %v643, 4
        %v652 = vrot.slane %v644, 4
        %657 = vst [vmem:[#allocation2 + $0x40] sm:$0xf0] %v649
        %658 = vst [vmem:[#allocation2 + $0x48] sm:$0xf0] %v650
        %659 = vst [vmem:[#allocation2 + $0x50] sm:$0xf0] %v651
        %660 = vst [vmem:[#allocation2 + $0x58] sm:$0xf0] %v652
        %661 = vrot.lane.b32.xlu0 %v329, 57
        %v662 = vpop.permute.xlu0 %661
        %664 = vrot.lane.b32.xlu0 %v326, 57
        %v665 = vpop.permute.xlu0 %664
        %666 = vrot.lane.b32.xlu0 %v334, 57
        %v667 = vpop.permute.xlu0 %666
        %668 = vrot.lane.b32.xlu0 %v327, 57
        %v669 = vpop.permute.xlu0 %668
        %vm670 = vcmask 465920
        %v671 = vsel %vm670, %v665, %v667
        %v672 = vsel %vm670, %v667, %v669
        %v673 = vsel %vm670, %v669, %v662
        %v678 = vsel %vm670, %v662, %v665
        %s679 = scalar_lea.vmem [#allocation6], 6
        %v680 = vld [vmem:[%s679] ss:$8 sm:$0xf]
        %v682 = vlaneseq
        %v683 = vshrl.u32 %v682, 7
        %v684 = vsub.s32 0, %v683
        %v685 = vrot.slane %v680, %v684
        %v686 = vlaneseq
        %v687 = vshrl.u32 %v686, 7
        %v688 = vsub.s32 1, %v687
        %v689 = vrot.slane %v680, %v688
        %v690 = vlaneseq
        %v691 = vshrl.u32 %v690, 7
        %v692 = vsub.s32 2, %v691
        %v693 = vrot.slane %v680, %v692
        %v694 = vlaneseq
        %v695 = vshrl.u32 %v694, 7
        %v696 = vsub.s32 3, %v695
        %v697 = vrot.slane %v680, %v696
        %v702 = vmul.f32 %v678, %v685
        %v703 = vmul.f32 %v671, %v689
        %v704 = vmul.f32 %v672, %v693
        %v705 = vmul.f32 %v673, %v697
        %706 = vst [vmem:[#allocation2 + $0x60] sm:$0xf] %v702
        %707 = vst [vmem:[#allocation2 + $0x68] sm:$0xf] %v703
        %708 = vst [vmem:[#allocation2 + $0x70] sm:$0xf] %v704
        %709 = vst [vmem:[#allocation2 + $0x78] sm:$0xf] %v705
        %710 = vrot.lane.b32.xlu0 %v329, 56
        %v711 = vpop.permute.xlu0 %710
        %713 = vrot.lane.b32.xlu0 %v326, 56
        %v714 = vpop.permute.xlu0 %713
        %715 = vrot.lane.b32.xlu0 %v334, 56
        %v716 = vpop.permute.xlu0 %715
        %717 = vrot.lane.b32.xlu0 %v327, 56
        %v718 = vpop.permute.xlu0 %717
        %vm719 = vcmask 457728
        %v720 = vsel %vm719, %v714, %v716
        %v721 = vsel %vm719, %v716, %v718
        %v722 = vsel %vm719, %v718, %v711
        %v727 = vsel %vm719, %v711, %v714
        %s728 = scalar_lea.vmem [#allocation6], 7
        %v729 = vld [vmem:[%s728] ss:$8 sm:$0xf]
        %v731 = vlaneseq
        %v732 = vshrl.u32 %v731, 7
        %v733 = vsub.s32 0, %v732
        %v734 = vrot.slane %v729, %v733
        %v735 = vlaneseq
        %v736 = vshrl.u32 %v735, 7
        %v737 = vsub.s32 1, %v736
        %v738 = vrot.slane %v729, %v737
        %v739 = vlaneseq
        %v740 = vshrl.u32 %v739, 7
        %v741 = vsub.s32 2, %v740
        %v742 = vrot.slane %v729, %v741
        %v743 = vlaneseq
        %v744 = vshrl.u32 %v743, 7
        %v745 = vsub.s32 3, %v744
        %v746 = vrot.slane %v729, %v745
        %v751 = vmul.f32 %v727, %v734
        %v752 = vmul.f32 %v720, %v738
        %v753 = vmul.f32 %v721, %v742
        %v754 = vmul.f32 %v722, %v746
        %v759 = vrot.slane %v751, 4
        %v760 = vrot.slane %v752, 4
        %v761 = vrot.slane %v753, 4
        %v762 = vrot.slane %v754, 4
        %767 = vst [vmem:[#allocation2 + $0x60] sm:$0xf0] %v759
        %768 = vst [vmem:[#allocation2 + $0x68] sm:$0xf0] %v760
        %769 = vst [vmem:[#allocation2 + $0x70] sm:$0xf0] %v761
        %770 = vst [vmem:[#allocation2 + $0x78] sm:$0xf0] %v762
        %771 = vrot.lane.b32.xlu0 %v329, 55
        %v772 = vpop.permute.xlu0 %771
        %774 = vrot.lane.b32.xlu0 %v326, 55
        %v775 = vpop.permute.xlu0 %774
        %776 = vrot.lane.b32.xlu0 %v334, 55
        %v777 = vpop.permute.xlu0 %776
        %778 = vrot.lane.b32.xlu0 %v327, 55
        %v779 = vpop.permute.xlu0 %778
        %vm780 = vcmask 449536
        %v781 = vsel %vm780, %v775, %v777
        %v782 = vsel %vm780, %v777, %v779
        %v783 = vsel %vm780, %v779, %v772
        %v788 = vsel %vm780, %v772, %v775
        %s789 = scalar_lea.vmem [#allocation6], 32
        %v790 = vld [vmem:[%s789] ss:$8 sm:$0xf]
        %v792 = vlaneseq
        %v793 = vshrl.u32 %v792, 7
        %v794 = vsub.s32 0, %v793
        %v795 = vrot.slane %v790, %v794
        %v796 = vlaneseq
        %v797 = vshrl.u32 %v796, 7
        %v798 = vsub.s32 1, %v797
        %v799 = vrot.slane %v790, %v798
        %v800 = vlaneseq
        %v801 = vshrl.u32 %v800, 7
        %v802 = vsub.s32 2, %v801
        %v803 = vrot.slane %v790, %v802
        %v804 = vlaneseq
        %v805 = vshrl.u32 %v804, 7
        %v806 = vsub.s32 3, %v805
        %v807 = vrot.slane %v790, %v806
        %v812 = vmul.f32 %v788, %v795
        %v813 = vmul.f32 %v781, %v799
        %v814 = vmul.f32 %v782, %v803
        %v815 = vmul.f32 %v783, %v807
        %816 = vst [vmem:[#allocation2 + $0x80] sm:$0xf] %v812
        %817 = vst [vmem:[#allocation2 + $0x88] sm:$0xf] %v813
        %818 = vst [vmem:[#allocation2 + $0x90] sm:$0xf] %v814
        %819 = vst [vmem:[#allocation2 + $0x98] sm:$0xf] %v815
        %820 = vrot.lane.b32.xlu0 %v329, 9
        %v821 = vpop.permute.xlu0 %820
        %823 = vrot.lane.b32.xlu0 %v326, 9
        %v824 = vpop.permute.xlu0 %823
        %825 = vrot.lane.b32.xlu0 %v334, 9
        %v826 = vpop.permute.xlu0 %825
        %827 = vrot.lane.b32.xlu0 %v327, 9
        %v828 = vpop.permute.xlu0 %827
        %vm829 = vcmask 72704
        %v830 = vsel %vm829, %v824, %v826
        %v831 = vsel %vm829, %v826, %v828
        %v832 = vsel %vm829, %v828, %v821
        %v837 = vsel %vm829, %v821, %v824
        %s838 = scalar_lea.vmem [#allocation6], 33
        %v839 = vld [vmem:[%s838] ss:$8 sm:$0xf]
        %v841 = vlaneseq
        %v842 = vshrl.u32 %v841, 7
        %v843 = vsub.s32 0, %v842
        %v844 = vrot.slane %v839, %v843
        %v845 = vlaneseq
        %v846 = vshrl.u32 %v845, 7
        %v847 = vsub.s32 1, %v846
        %v848 = vrot.slane %v839, %v847
        %v849 = vlaneseq
        %v850 = vshrl.u32 %v849, 7
        %v851 = vsub.s32 2, %v850
        %v852 = vrot.slane %v839, %v851
        %v853 = vlaneseq
        %v854 = vshrl.u32 %v853, 7
        %v855 = vsub.s32 3, %v854
        %v856 = vrot.slane %v839, %v855
        %v861 = vmul.f32 %v837, %v844
        %v862 = vmul.f32 %v830, %v848
        %v863 = vmul.f32 %v831, %v852
        %v864 = vmul.f32 %v832, %v856
        %v869 = vrot.slane %v861, 4
        %v870 = vrot.slane %v862, 4
        %v871 = vrot.slane %v863, 4
        %v872 = vrot.slane %v864, 4
        %877 = vst [vmem:[#allocation2 + $0x80] sm:$0xf0] %v869
        %878 = vst [vmem:[#allocation2 + $0x88] sm:$0xf0] %v870
        %879 = vst [vmem:[#allocation2 + $0x90] sm:$0xf0] %v871
        %880 = vst [vmem:[#allocation2 + $0x98] sm:$0xf0] %v872
        %881 = vrot.lane.b32.xlu0 %v329, 8
        %v882 = vpop.permute.xlu0 %881
        %884 = vrot.lane.b32.xlu0 %v326, 8
        %v885 = vpop.permute.xlu0 %884
        %886 = vrot.lane.b32.xlu0 %v334, 8
        %v887 = vpop.permute.xlu0 %886
        %888 = vrot.lane.b32.xlu0 %v327, 8
        %v889 = vpop.permute.xlu0 %888
        %vm890 = vcmask 64512
        %v891 = vsel %vm890, %v885, %v887
        %v892 = vsel %vm890, %v887, %v889
        %v893 = vsel %vm890, %v889, %v882
        %v898 = vsel %vm890, %v882, %v885
        %s899 = scalar_lea.vmem [#allocation6], 34
        %v900 = vld [vmem:[%s899] ss:$8 sm:$0xf]
        %v902 = vlaneseq
        %v903 = vshrl.u32 %v902, 7
        %v904 = vsub.s32 0, %v903
        %v905 = vrot.slane %v900, %v904
        %v906 = vlaneseq
        %v907 = vshrl.u32 %v906, 7
        %v908 = vsub.s32 1, %v907
        %v909 = vrot.slane %v900, %v908
        %v910 = vlaneseq
        %v911 = vshrl.u32 %v910, 7
        %v912 = vsub.s32 2, %v911
        %v913 = vrot.slane %v900, %v912
        %v914 = vlaneseq
        %v915 = vshrl.u32 %v914, 7
        %v916 = vsub.s32 3, %v915
        %v917 = vrot.slane %v900, %v916
        %v922 = vmul.f32 %v898, %v905
        %v923 = vmul.f32 %v891, %v909
        %v924 = vmul.f32 %v892, %v913
        %v925 = vmul.f32 %v893, %v917
        %926 = vst [vmem:[#allocation2 + $0xa0] sm:$0xf] %v922
        %927 = vst [vmem:[#allocation2 + $0xa8] sm:$0xf] %v923
        %928 = vst [vmem:[#allocation2 + $0xb0] sm:$0xf] %v924
        %929 = vst [vmem:[#allocation2 + $0xb8] sm:$0xf] %v925
        %930 = vrot.lane.b32.xlu0 %v329, 7
        %v931 = vpop.permute.xlu0 %930
        %933 = vrot.lane.b32.xlu0 %v326, 7
        %v934 = vpop.permute.xlu0 %933
        %935 = vrot.lane.b32.xlu0 %v334, 7
        %v936 = vpop.permute.xlu0 %935
        %937 = vrot.lane.b32.xlu0 %v327, 7
        %v938 = vpop.permute.xlu0 %937
        %vm939 = vcmask 56320
        %v940 = vsel %vm939, %v934, %v936
        %v941 = vsel %vm939, %v936, %v938
        %v942 = vsel %vm939, %v938, %v931
        %v947 = vsel %vm939, %v931, %v934
        %s948 = scalar_lea.vmem [#allocation6], 35
        %v949 = vld [vmem:[%s948] ss:$8 sm:$0xf]
        %v951 = vlaneseq
        %v952 = vshrl.u32 %v951, 7
        %v953 = vsub.s32 0, %v952
        %v954 = vrot.slane %v949, %v953
        %v955 = vlaneseq
        %v956 = vshrl.u32 %v955, 7
        %v957 = vsub.s32 1, %v956
        %v958 = vrot.slane %v949, %v957
        %v959 = vlaneseq
        %v960 = vshrl.u32 %v959, 7
        %v961 = vsub.s32 2, %v960
        %v962 = vrot.slane %v949, %v961
        %v963 = vlaneseq
        %v964 = vshrl.u32 %v963, 7
        %v965 = vsub.s32 3, %v964
        %v966 = vrot.slane %v949, %v965
        %v971 = vmul.f32 %v947, %v954
        %v972 = vmul.f32 %v940, %v958
        %v973 = vmul.f32 %v941, %v962
        %v974 = vmul.f32 %v942, %v966
        %v979 = vrot.slane %v971, 4
        %v980 = vrot.slane %v972, 4
        %v981 = vrot.slane %v973, 4
        %v982 = vrot.slane %v974, 4
        %987 = vst [vmem:[#allocation2 + $0xa0] sm:$0xf0] %v979
        %988 = vst [vmem:[#allocation2 + $0xa8] sm:$0xf0] %v980
        %989 = vst [vmem:[#allocation2 + $0xb0] sm:$0xf0] %v981
        %990 = vst [vmem:[#allocation2 + $0xb8] sm:$0xf0] %v982
        %991 = vrot.lane.b32.xlu0 %v329, 1
        %v992 = vpop.permute.xlu0 %991
        %994 = vrot.lane.b32.xlu0 %v326, 1
        %v995 = vpop.permute.xlu0 %994
        %996 = vrot.lane.b32.xlu0 %v334, 1
        %v997 = vpop.permute.xlu0 %996
        %998 = vrot.lane.b32.xlu0 %v327, 1
        %v999 = vpop.permute.xlu0 %998
        %vm1000 = vcmask 7168
        %v1001 = vsel %vm1000, %v995, %v997
        %v1002 = vsel %vm1000, %v997, %v999
        %v1003 = vsel %vm1000, %v999, %v992
        %v1008 = vsel %vm1000, %v992, %v995
        %s1009 = scalar_lea.vmem [#allocation6], 36
        %v1010 = vld [vmem:[%s1009] ss:$8 sm:$0xf]
        %v1012 = vlaneseq
        %v1013 = vshrl.u32 %v1012, 7
        %v1014 = vsub.s32 0, %v1013
        %v1015 = vrot.slane %v1010, %v1014
        %v1016 = vlaneseq
        %v1017 = vshrl.u32 %v1016, 7
        %v1018 = vsub.s32 1, %v1017
        %v1019 = vrot.slane %v1010, %v1018
        %v1020 = vlaneseq
        %v1021 = vshrl.u32 %v1020, 7
        %v1022 = vsub.s32 2, %v1021
        %v1023 = vrot.slane %v1010, %v1022
        %v1024 = vlaneseq
        %v1025 = vshrl.u32 %v1024, 7
        %v1026 = vsub.s32 3, %v1025
        %v1027 = vrot.slane %v1010, %v1026
        %v1032 = vmul.f32 %v1008, %v1015
        %v1033 = vmul.f32 %v1001, %v1019
        %v1034 = vmul.f32 %v1002, %v1023
        %v1035 = vmul.f32 %v1003, %v1027
        %1036 = vst [vmem:[#allocation2 + $0xc0] sm:$0xf] %v1032
        %1037 = vst [vmem:[#allocation2 + $0xc8] sm:$0xf] %v1033
        %1038 = vst [vmem:[#allocation2 + $0xd0] sm:$0xf] %v1034
        %1039 = vst [vmem:[#allocation2 + $0xd8] sm:$0xf] %v1035
        %v1040 = vcombine.low %v326, %v326
        %v1041 = vcombine.low %v327, %v327
        %1044 = vst [vmem:[#allocation2 + $0xc0] sm:$0xf0] %v1040
        %1045 = vst [vmem:[#allocation2 + $0xc8] sm:$0xf0] %v326
        %1046 = vst [vmem:[#allocation2 + $0xd0] sm:$0xf0] %v1041
        %1047 = vst [vmem:[#allocation2 + $0xd8] sm:$0xf0] %v327
        %1048 = vrot.lane.b32.xlu0 %v326, 127
        %v1049 = vpop.permute.xlu0 %1048
        %1050 = vrot.lane.b32.xlu0 %v334, 127
        %v1051 = vpop.permute.xlu0 %1050
        %1052 = vrot.lane.b32.xlu0 %v327, 127
        %v1053 = vpop.permute.xlu0 %1052
        %1054 = vrot.lane.b32.xlu0 %v329, 127
        %v1055 = vpop.permute.xlu0 %1054
        %vm1056 = vcmask 1039360
        %v1057 = vsel %vm1056, %v1049, %v1051
        %v1058 = vsel %vm1056, %v1051, %v1053
        %v1059 = vsel %vm1056, %v1053, %v1055
        %v1065 = vsel %vm1056, %v1055, %v1049
        %s1066 = scalar_lea.vmem [#allocation6], 38
        %v1067 = vld [vmem:[%s1066] ss:$8 sm:$0xf]
        %v1069 = vlaneseq
        %v1070 = vshrl.u32 %v1069, 7
        %v1071 = vsub.s32 0, %v1070
        %v1072 = vrot.slane %v1067, %v1071
        %v1073 = vlaneseq
        %v1074 = vshrl.u32 %v1073, 7
        %v1075 = vsub.s32 1, %v1074
        %v1076 = vrot.slane %v1067, %v1075
        %v1077 = vlaneseq
        %v1078 = vshrl.u32 %v1077, 7
        %v1079 = vsub.s32 2, %v1078
        %v1080 = vrot.slane %v1067, %v1079
        %v1081 = vlaneseq
        %v1082 = vshrl.u32 %v1081, 7
        %v1083 = vsub.s32 3, %v1082
        %v1084 = vrot.slane %v1067, %v1083
        %v1089 = vmul.f32 %v1057, %v1072
        %v1090 = vmul.f32 %v1058, %v1076
        %v1091 = vmul.f32 %v1059, %v1080
        %v1092 = vmul.f32 %v1065, %v1084
        %1093 = vst [vmem:[#allocation2 + $0xe0] sm:$0xf] %v1089
        %1094 = vst [vmem:[#allocation2 + $0xe8] sm:$0xf] %v1090
        %1095 = vst [vmem:[#allocation2 + $0xf0] sm:$0xf] %v1091
        %1096 = vst [vmem:[#allocation2 + $0xf8] sm:$0xf] %v1092
        %1097 = vrot.lane.b32.xlu0 %v326, 121
        %v1098 = vpop.permute.xlu0 %1097
        %1099 = vrot.lane.b32.xlu0 %v334, 121
        %v1100 = vpop.permute.xlu0 %1099
        %1101 = vrot.lane.b32.xlu0 %v327, 121
        %v1102 = vpop.permute.xlu0 %1101
        %1103 = vrot.lane.b32.xlu0 %v329, 121
        %v1104 = vpop.permute.xlu0 %1103
        %vm1105 = vcmask 990208
        %v1106 = vsel %vm1105, %v1098, %v1100
        %v1107 = vsel %vm1105, %v1100, %v1102
        %v1108 = vsel %vm1105, %v1102, %v1104
        %v1114 = vsel %vm1105, %v1104, %v1098
        %s1115 = scalar_lea.vmem [#allocation6], 39
        %v1116 = vld [vmem:[%s1115] ss:$8 sm:$0xf]
        %v1118 = vlaneseq
        %v1119 = vshrl.u32 %v1118, 7
        %v1120 = vsub.s32 0, %v1119
        %v1121 = vrot.slane %v1116, %v1120
        %v1122 = vlaneseq
        %v1123 = vshrl.u32 %v1122, 7
        %v1124 = vsub.s32 1, %v1123
        %v1125 = vrot.slane %v1116, %v1124
        %v1126 = vlaneseq
        %v1127 = vshrl.u32 %v1126, 7
        %v1128 = vsub.s32 2, %v1127
        %v1129 = vrot.slane %v1116, %v1128
        %v1130 = vlaneseq
        %v1131 = vshrl.u32 %v1130, 7
        %v1132 = vsub.s32 3, %v1131
        %v1133 = vrot.slane %v1116, %v1132
        %v1138 = vmul.f32 %v1106, %v1121
        %v1139 = vmul.f32 %v1107, %v1125
        %v1140 = vmul.f32 %v1108, %v1129
        %v1141 = vmul.f32 %v1114, %v1133
        %v1146 = vrot.slane %v1138, 4
        %v1147 = vrot.slane %v1139, 4
        %v1148 = vrot.slane %v1140, 4
        %v1149 = vrot.slane %v1141, 4
        %1154 = vst [vmem:[#allocation2 + $0xe0] sm:$0xf0] %v1146
        %1155 = vst [vmem:[#allocation2 + $0xe8] sm:$0xf0] %v1147
        %1156 = vst [vmem:[#allocation2 + $0xf0] sm:$0xf0] %v1148
        %1157 = vst [vmem:[#allocation2 + $0xf8] sm:$0xf0] %v1149
        %1158 = vrot.lane.b32.xlu0 %v326, 120
        %v1159 = vpop.permute.xlu0 %1158
        %1160 = vrot.lane.b32.xlu0 %v334, 120
        %v1161 = vpop.permute.xlu0 %1160
        %1162 = vrot.lane.b32.xlu0 %v327, 120
        %v1163 = vpop.permute.xlu0 %1162
        %1164 = vrot.lane.b32.xlu0 %v329, 120
        %v1165 = vpop.permute.xlu0 %1164
        %vm1166 = vcmask 982016
        %v1167 = vsel %vm1166, %v1159, %v1161
        %v1168 = vsel %vm1166, %v1161, %v1163
        %v1169 = vsel %vm1166, %v1163, %v1165
        %v1175 = vsel %vm1166, %v1165, %v1159
        %s1176 = scalar_lea.vmem [#allocation6], 64
        %v1177 = vld [vmem:[%s1176] ss:$8 sm:$0xf]
        %v1179 = vlaneseq
        %v1180 = vshrl.u32 %v1179, 7
        %v1181 = vsub.s32 0, %v1180
        %v1182 = vrot.slane %v1177, %v1181
        %v1183 = vlaneseq
        %v1184 = vshrl.u32 %v1183, 7
        %v1185 = vsub.s32 1, %v1184
        %v1186 = vrot.slane %v1177, %v1185
        %v1187 = vlaneseq
        %v1188 = vshrl.u32 %v1187, 7
        %v1189 = vsub.s32 2, %v1188
        %v1190 = vrot.slane %v1177, %v1189
        %v1191 = vlaneseq
        %v1192 = vshrl.u32 %v1191, 7
        %v1193 = vsub.s32 3, %v1192
        %v1194 = vrot.slane %v1177, %v1193
        %v1199 = vmul.f32 %v1167, %v1182
        %v1200 = vmul.f32 %v1168, %v1186
        %v1201 = vmul.f32 %v1169, %v1190
        %v1202 = vmul.f32 %v1175, %v1194
        %1203 = vst [vmem:[#allocation2 + $0x100] sm:$0xf] %v1199
        %1204 = vst [vmem:[#allocation2 + $0x108] sm:$0xf] %v1200
        %1205 = vst [vmem:[#allocation2 + $0x110] sm:$0xf] %v1201
        %1206 = vst [vmem:[#allocation2 + $0x118] sm:$0xf] %v1202
        %1207 = vrot.lane.b32.xlu0 %v326, 119
        %v1208 = vpop.permute.xlu0 %1207
        %1209 = vrot.lane.b32.xlu0 %v334, 119
        %v1210 = vpop.permute.xlu0 %1209
        %1211 = vrot.lane.b32.xlu0 %v327, 119
        %v1212 = vpop.permute.xlu0 %1211
        %1213 = vrot.lane.b32.xlu0 %v329, 119
        %v1214 = vpop.permute.xlu0 %1213
        %vm1215 = vcmask 973824
        %v1216 = vsel %vm1215, %v1208, %v1210
        %v1217 = vsel %vm1215, %v1210, %v1212
        %v1218 = vsel %vm1215, %v1212, %v1214
        %v1224 = vsel %vm1215, %v1214, %v1208
        %s1225 = scalar_lea.vmem [#allocation6], 65
        %v1226 = vld [vmem:[%s1225] ss:$8 sm:$0xf]
        %v1228 = vlaneseq
        %v1229 = vshrl.u32 %v1228, 7
        %v1230 = vsub.s32 0, %v1229
        %v1231 = vrot.slane %v1226, %v1230
        %v1232 = vlaneseq
        %v1233 = vshrl.u32 %v1232, 7
        %v1234 = vsub.s32 1, %v1233
        %v1235 = vrot.slane %v1226, %v1234
        %v1236 = vlaneseq
        %v1237 = vshrl.u32 %v1236, 7
        %v1238 = vsub.s32 2, %v1237
        %v1239 = vrot.slane %v1226, %v1238
        %v1240 = vlaneseq
        %v1241 = vshrl.u32 %v1240, 7
        %v1242 = vsub.s32 3, %v1241
        %v1243 = vrot.slane %v1226, %v1242
        %v1248 = vmul.f32 %v1216, %v1231
        %v1249 = vmul.f32 %v1217, %v1235
        %v1250 = vmul.f32 %v1218, %v1239
        %v1251 = vmul.f32 %v1224, %v1243
        %v1256 = vrot.slane %v1248, 4
        %v1257 = vrot.slane %v1249, 4
        %v1258 = vrot.slane %v1250, 4
        %v1259 = vrot.slane %v1251, 4
        %1264 = vst [vmem:[#allocation2 + $0x100] sm:$0xf0] %v1256
        %1265 = vst [vmem:[#allocation2 + $0x108] sm:$0xf0] %v1257
        %1266 = vst [vmem:[#allocation2 + $0x110] sm:$0xf0] %v1258
        %1267 = vst [vmem:[#allocation2 + $0x118] sm:$0xf0] %v1259
        %s1268 = scalar_lea.vmem [#allocation6], 66
        %v1269 = vld [vmem:[%s1268] ss:$8 sm:$0xf]
        %v1271 = vlaneseq
        %v1272 = vshrl.u32 %v1271, 7
        %v1273 = vsub.s32 0, %v1272
        %v1274 = vrot.slane %v1269, %v1273
        %v1275 = vlaneseq
        %v1276 = vshrl.u32 %v1275, 7
        %v1277 = vsub.s32 1, %v1276
        %v1278 = vrot.slane %v1269, %v1277
        %v1279 = vlaneseq
        %v1280 = vshrl.u32 %v1279, 7
        %v1281 = vsub.s32 2, %v1280
        %v1282 = vrot.slane %v1269, %v1281
        %v1283 = vlaneseq
        %v1284 = vshrl.u32 %v1283, 7
        %v1285 = vsub.s32 3, %v1284
        %v1286 = vrot.slane %v1269, %v1285
        %v1291 = vmul.f32 %v342, %v1274
        %v1292 = vmul.f32 %v343, %v1278
        %v1293 = vmul.f32 %v344, %v1282
        %v1294 = vmul.f32 %v349, %v1286
        %1295 = vst [vmem:[#allocation2 + $0x120] sm:$0xf] %v1291
        %1296 = vst [vmem:[#allocation2 + $0x128] sm:$0xf] %v1292
        %1297 = vst [vmem:[#allocation2 + $0x130] sm:$0xf] %v1293
        %1298 = vst [vmem:[#allocation2 + $0x138] sm:$0xf] %v1294
        %s1299 = scalar_lea.vmem [#allocation6], 67
        %v1300 = vld [vmem:[%s1299] ss:$8 sm:$0xf]
        %v1302 = vlaneseq
        %v1303 = vshrl.u32 %v1302, 7
        %v1304 = vsub.s32 0, %v1303
        %v1305 = vrot.slane %v1300, %v1304
        %v1306 = vlaneseq
        %v1307 = vshrl.u32 %v1306, 7
        %v1308 = vsub.s32 1, %v1307
        %v1309 = vrot.slane %v1300, %v1308
        %v1310 = vlaneseq
        %v1311 = vshrl.u32 %v1310, 7
        %v1312 = vsub.s32 2, %v1311
        %v1313 = vrot.slane %v1300, %v1312
        %v1314 = vlaneseq
        %v1315 = vshrl.u32 %v1314, 7
        %v1316 = vsub.s32 3, %v1315
        %v1317 = vrot.slane %v1300, %v1316
        %v1322 = vmul.f32 %v390, %v1305
        %v1323 = vmul.f32 %v391, %v1309
        %v1324 = vmul.f32 %v392, %v1313
        %v1325 = vmul.f32 %v397, %v1317
        %v1330 = vrot.slane %v1322, 4
        %v1331 = vrot.slane %v1323, 4
        %v1332 = vrot.slane %v1324, 4
        %v1333 = vrot.slane %v1325, 4
        %1338 = vst [vmem:[#allocation2 + $0x120] sm:$0xf0] %v1330
        %1339 = vst [vmem:[#allocation2 + $0x128] sm:$0xf0] %v1331
        %1340 = vst [vmem:[#allocation2 + $0x130] sm:$0xf0] %v1332
        %1341 = vst [vmem:[#allocation2 + $0x138] sm:$0xf0] %v1333
        %s1342 = scalar_lea.vmem [#allocation6], 68
        %v1343 = vld [vmem:[%s1342] ss:$8 sm:$0xf]
        %v1345 = vlaneseq
        %v1346 = vshrl.u32 %v1345, 7
        %v1347 = vsub.s32 0, %v1346
        %v1348 = vrot.slane %v1343, %v1347
        %v1349 = vlaneseq
        %v1350 = vshrl.u32 %v1349, 7
        %v1351 = vsub.s32 1, %v1350
        %v1352 = vrot.slane %v1343, %v1351
        %v1353 = vlaneseq
        %v1354 = vshrl.u32 %v1353, 7
        %v1355 = vsub.s32 2, %v1354
        %v1356 = vrot.slane %v1343, %v1355
        %v1357 = vlaneseq
        %v1358 = vshrl.u32 %v1357, 7
        %v1359 = vsub.s32 3, %v1358
        %v1360 = vrot.slane %v1343, %v1359
        %v1365 = vmul.f32 %v451, %v1348
        %v1366 = vmul.f32 %v452, %v1352
        %v1367 = vmul.f32 %v453, %v1356
        %v1368 = vmul.f32 %v458, %v1360
        %1369 = vst [vmem:[#allocation2 + $0x140] sm:$0xf] %v1365
        %1370 = vst [vmem:[#allocation2 + $0x148] sm:$0xf] %v1366
        %1371 = vst [vmem:[#allocation2 + $0x150] sm:$0xf] %v1367
        %1372 = vst [vmem:[#allocation2 + $0x158] sm:$0xf] %v1368
        %s1373 = scalar_lea.vmem [#allocation6], 69
        %v1374 = vld [vmem:[%s1373] ss:$8 sm:$0xf]
        %v1376 = vlaneseq
        %v1377 = vshrl.u32 %v1376, 7
        %v1378 = vsub.s32 0, %v1377
        %v1379 = vrot.slane %v1374, %v1378
        %v1380 = vlaneseq
        %v1381 = vshrl.u32 %v1380, 7
        %v1382 = vsub.s32 1, %v1381
        %v1383 = vrot.slane %v1374, %v1382
        %v1384 = vlaneseq
        %v1385 = vshrl.u32 %v1384, 7
        %v1386 = vsub.s32 2, %v1385
        %v1387 = vrot.slane %v1374, %v1386
        %v1388 = vlaneseq
        %v1389 = vshrl.u32 %v1388, 7
        %v1390 = vsub.s32 3, %v1389
        %v1391 = vrot.slane %v1374, %v1390
        %v1396 = vmul.f32 %v500, %v1379
        %v1397 = vmul.f32 %v501, %v1383
        %v1398 = vmul.f32 %v502, %v1387
        %v1399 = vmul.f32 %v507, %v1391
        %v1404 = vrot.slane %v1396, 4
        %v1405 = vrot.slane %v1397, 4
        %v1406 = vrot.slane %v1398, 4
        %v1407 = vrot.slane %v1399, 4
        %1412 = vst [vmem:[#allocation2 + $0x140] sm:$0xf0] %v1404
        %1413 = vst [vmem:[#allocation2 + $0x148] sm:$0xf0] %v1405
        %1414 = vst [vmem:[#allocation2 + $0x150] sm:$0xf0] %v1406
        %1415 = vst [vmem:[#allocation2 + $0x158] sm:$0xf0] %v1407
        %s1416 = scalar_lea.vmem [#allocation6], 70
        %v1417 = vld [vmem:[%s1416] ss:$8 sm:$0xf]
        %v1419 = vlaneseq
        %v1420 = vshrl.u32 %v1419, 7
        %v1421 = vsub.s32 0, %v1420
        %v1422 = vrot.slane %v1417, %v1421
        %v1423 = vlaneseq
        %v1424 = vshrl.u32 %v1423, 7
        %v1425 = vsub.s32 1, %v1424
        %v1426 = vrot.slane %v1417, %v1425
        %v1427 = vlaneseq
        %v1428 = vshrl.u32 %v1427, 7
        %v1429 = vsub.s32 2, %v1428
        %v1430 = vrot.slane %v1417, %v1429
        %v1431 = vlaneseq
        %v1432 = vshrl.u32 %v1431, 7
        %v1433 = vsub.s32 3, %v1432
        %v1434 = vrot.slane %v1417, %v1433
        %v1439 = vmul.f32 %v561, %v1422
        %v1440 = vmul.f32 %v562, %v1426
        %v1441 = vmul.f32 %v563, %v1430
        %v1442 = vmul.f32 %v568, %v1434
        %1443 = vst [vmem:[#allocation2 + $0x160] sm:$0xf] %v1439
        %1444 = vst [vmem:[#allocation2 + $0x168] sm:$0xf] %v1440
        %1445 = vst [vmem:[#allocation2 + $0x170] sm:$0xf] %v1441
        %1446 = vst [vmem:[#allocation2 + $0x178] sm:$0xf] %v1442
        %s1447 = scalar_lea.vmem [#allocation6], 71
        %v1448 = vld [vmem:[%s1447] ss:$8 sm:$0xf]
        %v1450 = vlaneseq
        %v1451 = vshrl.u32 %v1450, 7
        %v1452 = vsub.s32 0, %v1451
        %v1453 = vrot.slane %v1448, %v1452
        %v1454 = vlaneseq
        %v1455 = vshrl.u32 %v1454, 7
        %v1456 = vsub.s32 1, %v1455
        %v1457 = vrot.slane %v1448, %v1456
        %v1458 = vlaneseq
        %v1459 = vshrl.u32 %v1458, 7
        %v1460 = vsub.s32 2, %v1459
        %v1461 = vrot.slane %v1448, %v1460
        %v1462 = vlaneseq
        %v1463 = vshrl.u32 %v1462, 7
        %v1464 = vsub.s32 3, %v1463
        %v1465 = vrot.slane %v1448, %v1464
        %v1470 = vmul.f32 %v610, %v1453
        %v1471 = vmul.f32 %v611, %v1457
        %v1472 = vmul.f32 %v612, %v1461
        %v1473 = vmul.f32 %v617, %v1465
        %v1478 = vrot.slane %v1470, 4
        %v1479 = vrot.slane %v1471, 4
        %v1480 = vrot.slane %v1472, 4
        %v1481 = vrot.slane %v1473, 4
        %1486 = vst [vmem:[#allocation2 + $0x160] sm:$0xf0] %v1478
        %1487 = vst [vmem:[#allocation2 + $0x168] sm:$0xf0] %v1479
        %1488 = vst [vmem:[#allocation2 + $0x170] sm:$0xf0] %v1480
        %1489 = vst [vmem:[#allocation2 + $0x178] sm:$0xf0] %v1481
        %s1490 = scalar_lea.vmem [#allocation6], 96
        %v1491 = vld [vmem:[%s1490] ss:$8 sm:$0xf]
        %v1493 = vlaneseq
        %v1494 = vshrl.u32 %v1493, 7
        %v1495 = vsub.s32 0, %v1494
        %v1496 = vrot.slane %v1491, %v1495
        %v1497 = vlaneseq
        %v1498 = vshrl.u32 %v1497, 7
        %v1499 = vsub.s32 1, %v1498
        %v1500 = vrot.slane %v1491, %v1499
        %v1501 = vlaneseq
        %v1502 = vshrl.u32 %v1501, 7
        %v1503 = vsub.s32 2, %v1502
        %v1504 = vrot.slane %v1491, %v1503
        %v1505 = vlaneseq
        %v1506 = vshrl.u32 %v1505, 7
        %v1507 = vsub.s32 3, %v1506
        %v1508 = vrot.slane %v1491, %v1507
        %v1513 = vmul.f32 %v671, %v1496
        %v1514 = vmul.f32 %v672, %v1500
        %v1515 = vmul.f32 %v673, %v1504
        %v1516 = vmul.f32 %v678, %v1508
        %1517 = vst [vmem:[#allocation2 + $0x180] sm:$0xf] %v1513
        %1518 = vst [vmem:[#allocation2 + $0x188] sm:$0xf] %v1514
        %1519 = vst [vmem:[#allocation2 + $0x190] sm:$0xf] %v1515
        %1520 = vst [vmem:[#allocation2 + $0x198] sm:$0xf] %v1516
        %s1521 = scalar_lea.vmem [#allocation6], 97
        %v1522 = vld [vmem:[%s1521] ss:$8 sm:$0xf]
        %v1524 = vlaneseq
        %v1525 = vshrl.u32 %v1524, 7
        %v1526 = vsub.s32 0, %v1525
        %v1527 = vrot.slane %v1522, %v1526
        %v1528 = vlaneseq
        %v1529 = vshrl.u32 %v1528, 7
        %v1530 = vsub.s32 1, %v1529
        %v1531 = vrot.slane %v1522, %v1530
        %v1532 = vlaneseq
        %v1533 = vshrl.u32 %v1532, 7
        %v1534 = vsub.s32 2, %v1533
        %v1535 = vrot.slane %v1522, %v1534
        %v1536 = vlaneseq
        %v1537 = vshrl.u32 %v1536, 7
        %v1538 = vsub.s32 3, %v1537
        %v1539 = vrot.slane %v1522, %v1538
        %v1544 = vmul.f32 %v720, %v1527
        %v1545 = vmul.f32 %v721, %v1531
        %v1546 = vmul.f32 %v722, %v1535
        %v1547 = vmul.f32 %v727, %v1539
        %v1552 = vrot.slane %v1544, 4
        %v1553 = vrot.slane %v1545, 4
        %v1554 = vrot.slane %v1546, 4
        %v1555 = vrot.slane %v1547, 4
        %1560 = vst [vmem:[#allocation2 + $0x180] sm:$0xf0] %v1552
        %1561 = vst [vmem:[#allocation2 + $0x188] sm:$0xf0] %v1553
        %1562 = vst [vmem:[#allocation2 + $0x190] sm:$0xf0] %v1554
        %1563 = vst [vmem:[#allocation2 + $0x198] sm:$0xf0] %v1555
        %s1564 = scalar_lea.vmem [#allocation6], 98
        %v1565 = vld [vmem:[%s1564] ss:$8 sm:$0xf]
        %v1567 = vlaneseq
        %v1568 = vshrl.u32 %v1567, 7
        %v1569 = vsub.s32 0, %v1568
        %v1570 = vrot.slane %v1565, %v1569
        %v1571 = vlaneseq
        %v1572 = vshrl.u32 %v1571, 7
        %v1573 = vsub.s32 1, %v1572
        %v1574 = vrot.slane %v1565, %v1573
        %v1575 = vlaneseq
        %v1576 = vshrl.u32 %v1575, 7
        %v1577 = vsub.s32 2, %v1576
        %v1578 = vrot.slane %v1565, %v1577
        %v1579 = vlaneseq
        %v1580 = vshrl.u32 %v1579, 7
        %v1581 = vsub.s32 3, %v1580
        %v1582 = vrot.slane %v1565, %v1581
        %v1587 = vmul.f32 %v781, %v1570
        %v1588 = vmul.f32 %v782, %v1574
        %v1589 = vmul.f32 %v783, %v1578
        %v1590 = vmul.f32 %v788, %v1582
        %1591 = vst [vmem:[#allocation2 + $0x1a0] sm:$0xf] %v1587
        %1592 = vst [vmem:[#allocation2 + $0x1a8] sm:$0xf] %v1588
        %1593 = vst [vmem:[#allocation2 + $0x1b0] sm:$0xf] %v1589
        %1594 = vst [vmem:[#allocation2 + $0x1b8] sm:$0xf] %v1590
        %v1595 = vld [vmem:[%s1] sm:$0xf]
        %v1596 = vld [vmem:[#allocation2] sm:$0xff]
        %v1597 = vld [vmem:[#allocation2 + $0x8] sm:$0xff]
        %v1598 = vld [vmem:[#allocation2 + $0x10] sm:$0xff]
        %v1599 = vld [vmem:[#allocation2 + $0x18] sm:$0xff]
        %v1600 = vld [vmem:[#allocation2 + $0x20] sm:$0xff]
        %v1601 = vld [vmem:[#allocation2 + $0x28] sm:$0xff]
        %v1602 = vld [vmem:[#allocation2 + $0x30] sm:$0xff]
        %v1603 = vld [vmem:[#allocation2 + $0x38] sm:$0xff]
        %v1604 = vld [vmem:[#allocation2 + $0x40] sm:$0xff]
        %v1605 = vld [vmem:[#allocation2 + $0x48] sm:$0xff]
        %v1606 = vld [vmem:[#allocation2 + $0x50] sm:$0xff]
        %v1607 = vld [vmem:[#allocation2 + $0x58] sm:$0xff]
        %v1608 = vld [vmem:[#allocation2 + $0x60] sm:$0xff]
        %v1609 = vld [vmem:[#allocation2 + $0x68] sm:$0xff]
        %v1610 = vld [vmem:[#allocation2 + $0x70] sm:$0xff]
        %v1611 = vld [vmem:[#allocation2 + $0x78] sm:$0xff]
        %v1612 = vld [vmem:[#allocation2 + $0x80] sm:$0xff]
        %v1613 = vld [vmem:[#allocation2 + $0x88] sm:$0xff]
        %v1614 = vld [vmem:[#allocation2 + $0x90] sm:$0xff]
        %v1615 = vld [vmem:[#allocation2 + $0x98] sm:$0xff]
        %v1616 = vld [vmem:[#allocation2 + $0xa0] sm:$0xff]
        %v1617 = vld [vmem:[#allocation2 + $0xa8] sm:$0xff]
        %v1618 = vld [vmem:[#allocation2 + $0xb0] sm:$0xff]
        %v1619 = vld [vmem:[#allocation2 + $0xb8] sm:$0xff]
        %v1620 = vld [vmem:[#allocation2 + $0xc0] sm:$0xff]
        %v1621 = vld [vmem:[#allocation2 + $0xc8] sm:$0xff]
        %v1622 = vld [vmem:[#allocation2 + $0xd0] sm:$0xff]
        %v1623 = vld [vmem:[#allocation2 + $0xd8] sm:$0xff]
        %v1624 = vld [vmem:[#allocation2 + $0xe0] sm:$0xff]
        %v1625 = vld [vmem:[#allocation2 + $0xe8] sm:$0xff]
        %v1626 = vld [vmem:[#allocation2 + $0xf0] sm:$0xff]
        %v1627 = vld [vmem:[#allocation2 + $0xf8] sm:$0xff]
        %v1628 = vld [vmem:[#allocation2 + $0x100] sm:$0xff]
        %v1629 = vld [vmem:[#allocation2 + $0x108] sm:$0xff]
        %v1630 = vld [vmem:[#allocation2 + $0x110] sm:$0xff]
        %v1631 = vld [vmem:[#allocation2 + $0x118] sm:$0xff]
        %v1632 = vld [vmem:[#allocation2 + $0x120] sm:$0xff]
        %v1633 = vld [vmem:[#allocation2 + $0x128] sm:$0xff]
        %v1634 = vld [vmem:[#allocation2 + $0x130] sm:$0xff]
        %v1635 = vld [vmem:[#allocation2 + $0x138] sm:$0xff]
        %v1636 = vld [vmem:[#allocation2 + $0x140] sm:$0xff]
        %v1637 = vld [vmem:[#allocation2 + $0x148] sm:$0xff]
        %v1638 = vld [vmem:[#allocation2 + $0x150] sm:$0xff]
        %v1639 = vld [vmem:[#allocation2 + $0x158] sm:$0xff]
        %v1640 = vld [vmem:[#allocation2 + $0x160] sm:$0xff]
        %v1641 = vld [vmem:[#allocation2 + $0x168] sm:$0xff]
        %v1642 = vld [vmem:[#allocation2 + $0x170] sm:$0xff]
        %v1643 = vld [vmem:[#allocation2 + $0x178] sm:$0xff]
        %v1644 = vld [vmem:[#allocation2 + $0x180] sm:$0xff]
        %v1645 = vld [vmem:[#allocation2 + $0x188] sm:$0xff]
        %v1646 = vld [vmem:[#allocation2 + $0x190] sm:$0xff]
        %v1647 = vld [vmem:[#allocation2 + $0x198] sm:$0xff]
        %v1648 = vld [vmem:[#allocation2 + $0x1a0] sm:$0xf]
        %v1649 = vld [vmem:[#allocation2 + $0x1a8] sm:$0xf]
        %v1650 = vld [vmem:[#allocation2 + $0x1b0] sm:$0xf]
        %v1651 = vld [vmem:[#allocation2 + $0x1b8] sm:$0xf]
        %vm1652 = vcmask 883712
        %v1654 = vsel %vm1652, %v1595, 0
        %vm1656 = vcmask 1043456
        %v1658 = vsel %vm1656, %v1648, 0
        %v1661 = vsel %vm1656, %v1649, 0
        %v1664 = vsel %vm1656, %v1650, 0
        %v1667 = vsel %vm1656, %v1651, 0
        %1669 = vmatprep.subr.mxu0 0.0
        %1670 = vmatpush1.msra.mxu0 0.0
        %1671 = vmatprep.subr.mxu0 0.0
        %1672 = vmatpush1.msra.mxu0 0.0
        %v1673 = vand.u32 %v1661, 4294901760
        %1674 = vmatprep.subr.mxu0 %v1673
        %v1675 = vand.u32 %v1658, 4294901760
        %1676 = vmatpush1.msra.mxu0 %v1675
        %v1677 = vand.u32 %v1645, 4294901760
        %1678 = vmatprep.subr.mxu0 %v1677
        %v1679 = vand.u32 %v1644, 4294901760
        %1680 = vmatpush1.msra.mxu0 %v1679
        %v1681 = vand.u32 %v1641, 4294901760
        %1682 = vmatprep.subr.mxu0 %v1681
        %v1683 = vand.u32 %v1640, 4294901760
        %1684 = vmatpush1.msra.mxu0 %v1683
        %v1685 = vand.u32 %v1637, 4294901760
        %1686 = vmatprep.subr.mxu0 %v1685
        %v1687 = vand.u32 %v1636, 4294901760
        %1688 = vmatpush1.msra.mxu0 %v1687
        %v1689 = vand.u32 %v1633, 4294901760
        %1690 = vmatprep.subr.mxu0 %v1689
        %v1691 = vand.u32 %v1632, 4294901760
        %1692 = vmatpush1.msra.mxu0 %v1691
        %v1693 = vand.u32 %v1629, 4294901760
        %1694 = vmatprep.subr.mxu0 %v1693
        %v1695 = vand.u32 %v1628, 4294901760
        %1696 = vmatpush1.msra.mxu0 %v1695
        %v1697 = vand.u32 %v1625, 4294901760
        %1698 = vmatprep.subr.mxu0 %v1697
        %v1699 = vand.u32 %v1624, 4294901760
        %1700 = vmatpush1.msra.mxu0 %v1699
        %v1701 = vand.u32 %v1621, 4294901760
        %1702 = vmatprep.subr.mxu0 %v1701
        %v1703 = vand.u32 %v1620, 4294901760
        %1704 = vmatpush1.msra.mxu0 %v1703
        %v1705 = vand.u32 %v1617, 4294901760
        %1706 = vmatprep.subr.mxu0 %v1705
        %v1707 = vand.u32 %v1616, 4294901760
        %1708 = vmatpush1.msra.mxu0 %v1707
        %v1709 = vand.u32 %v1613, 4294901760
        %1710 = vmatprep.subr.mxu0 %v1709
        %v1711 = vand.u32 %v1612, 4294901760
        %1712 = vmatpush1.msra.mxu0 %v1711
        %v1713 = vand.u32 %v1609, 4294901760
        %1714 = vmatprep.subr.mxu0 %v1713
        %v1715 = vand.u32 %v1608, 4294901760
        %1716 = vmatpush1.msra.mxu0 %v1715
        %v1717 = vand.u32 %v1605, 4294901760
        %1718 = vmatprep.subr.mxu0 %v1717
        %v1719 = vand.u32 %v1604, 4294901760
        %1720 = vmatpush1.msra.mxu0 %v1719
        %v1721 = vand.u32 %v1601, 4294901760
        %1722 = vmatprep.subr.mxu0 %v1721
        %v1723 = vand.u32 %v1600, 4294901760
        %1724 = vmatpush1.msra.mxu0 %v1723
        %v1725 = vand.u32 %v1597, 4294901760
        %1726 = vmatprep.subr.mxu0 %v1725
        %v1727 = vand.u32 %v1596, 4294901760
        %1728 = vmatpush1.msra.mxu0 %v1727
        %1729 = vmatprep.subr.mxu0 0.0
        %1730 = vmatpush2.msra.mxu0 0.0
        %1731 = vmatprep.subr.mxu0 0.0
        %1732 = vmatpush2.msra.mxu0 0.0
        %1733 = vmatprep.subr.mxu0 0.0
        %1734 = vmatpush2.msra.mxu0 0.0
        %1735 = vmatprep.subr.mxu0 0.0
        %1736 = vmatpush2.msra.mxu0 0.0
        %1737 = vmatprep.subr.mxu0 0.0
        %1738 = vmatpush2.msra.mxu0 0.0
        %1739 = vmatprep.subr.mxu0 0.0
        %1740 = vmatpush2.msra.mxu0 0.0
        %1741 = vmatprep.subr.mxu0 0.0
        %1742 = vmatpush2.msra.mxu0 0.0
        %1743 = vmatprep.subr.mxu0 0.0
        %1744 = vmatpush2.msra.mxu0 0.0
        %1745 = vmatprep.subr.mxu0 0.0
        %1746 = vmatpush2.msra.mxu0 0.0
        %1747 = vmatprep.subr.mxu0 0.0
        %1748 = vmatpush2.msra.mxu0 0.0
        %1749 = vmatprep.subr.mxu0 0.0
        %1750 = vmatpush2.msra.mxu0 0.0
        %1751 = vmatprep.subr.mxu0 0.0
        %1752 = vmatpush2.msra.mxu0 0.0
        %1753 = vmatprep.subr.mxu0 0.0
        %1754 = vmatpush2.msra.mxu0 0.0
        %1755 = vmatprep.subr.mxu0 0.0
        %1756 = vmatpush2.msra.mxu0 0.0
        %1757 = vmatprep.subr.mxu0 0.0
        %1758 = vmatpush2.msra.mxu0 0.0
        %1759 = vmatprep.subr.mxu0 0.0
        %1760 = vmatpush2.msra.mxu0 0.0
        %1761 = vmatprep.mubr.f32.mxu0 0.0
        %v1762 = vand.u32 %v1654, 4294901760
        %v1763 = vsub.f32 %v1654, %v1762
        %v1764 = vand.u32 %v1763, 4294901760
        %v1765 = vsub.f32 %v1763, %v1764
        %v1766 = vand.u32 %v1765, 4294901760
        %1767 = vmatmul.mubr.f32.gmra.mxu0 %v1766
        %v1768 = vpop.f32.mrf.mxu0
        %v1769 = vadd.f32 0.0, %v1768
        %v1770 = vpop.f32.mrf.mxu0
        %v1771 = vadd.f32 0.0, %v1770
        %1772 = vdwg.mxu0
        %1773 = vmatprep.subr.mxu0 0.0
        %1774 = vmatpush1.msra.mxu0 0.0
        %1775 = vmatprep.subr.mxu0 0.0
        %1776 = vmatpush1.msra.mxu0 0.0
        %v1777 = vand.u32 %v1661, 4294901760
        %v1778 = vsub.f32 %v1661, %v1777
        %v1779 = vand.u32 %v1778, 4294901760
        %v1780 = vsub.f32 %v1778, %v1779
        %v1781 = vand.u32 %v1780, 4294901760
        %1782 = vmatprep.subr.mxu0 %v1781
        %v1783 = vand.u32 %v1658, 4294901760
        %v1784 = vsub.f32 %v1658, %v1783
        %v1785 = vand.u32 %v1784, 4294901760
        %v1786 = vsub.f32 %v1784, %v1785
        %v1787 = vand.u32 %v1786, 4294901760
        %1788 = vmatpush1.msra.mxu0 %v1787
        %v1789 = vand.u32 %v1645, 4294901760
        %v1790 = vsub.f32 %v1645, %v1789
        %v1791 = vand.u32 %v1790, 4294901760
        %v1792 = vsub.f32 %v1790, %v1791
        %v1793 = vand.u32 %v1792, 4294901760
        %1794 = vmatprep.subr.mxu0 %v1793
        %v1795 = vand.u32 %v1644, 4294901760
        %v1796 = vsub.f32 %v1644, %v1795
        %v1797 = vand.u32 %v1796, 4294901760
        %v1798 = vsub.f32 %v1796, %v1797
        %v1799 = vand.u32 %v1798, 4294901760
        %1800 = vmatpush1.msra.mxu0 %v1799
        %v1801 = vand.u32 %v1641, 4294901760
        %v1802 = vsub.f32 %v1641, %v1801
        %v1803 = vand.u32 %v1802, 4294901760
        %v1804 = vsub.f32 %v1802, %v1803
        %v1805 = vand.u32 %v1804, 4294901760
        %1806 = vmatprep.subr.mxu0 %v1805
        %v1807 = vand.u32 %v1640, 4294901760
        %v1808 = vsub.f32 %v1640, %v1807
        %v1809 = vand.u32 %v1808, 4294901760
        %v1810 = vsub.f32 %v1808, %v1809
        %v1811 = vand.u32 %v1810, 4294901760
        %1812 = vmatpush1.msra.mxu0 %v1811
        %v1813 = vand.u32 %v1637, 4294901760
        %v1814 = vsub.f32 %v1637, %v1813
        %v1815 = vand.u32 %v1814, 4294901760
        %v1816 = vsub.f32 %v1814, %v1815
        %v1817 = vand.u32 %v1816, 4294901760
        %1818 = vmatprep.subr.mxu0 %v1817
        %v1819 = vand.u32 %v1636, 4294901760
        %v1820 = vsub.f32 %v1636, %v1819
        %v1821 = vand.u32 %v1820, 4294901760
        %v1822 = vsub.f32 %v1820, %v1821
        %v1823 = vand.u32 %v1822, 4294901760
        %1824 = vmatpush1.msra.mxu0 %v1823
        %v1825 = vand.u32 %v1633, 4294901760
        %v1826 = vsub.f32 %v1633, %v1825
        %v1827 = vand.u32 %v1826, 4294901760
        %v1828 = vsub.f32 %v1826, %v1827
        %v1829 = vand.u32 %v1828, 4294901760
        %1830 = vmatprep.subr.mxu0 %v1829
        %v1831 = vand.u32 %v1632, 4294901760
        %v1832 = vsub.f32 %v1632, %v1831
        %v1833 = vand.u32 %v1832, 4294901760
        %v1834 = vsub.f32 %v1832, %v1833
        %v1835 = vand.u32 %v1834, 4294901760
        %1836 = vmatpush1.msra.mxu0 %v1835
        %v1837 = vand.u32 %v1629, 4294901760
        %v1838 = vsub.f32 %v1629, %v1837
        %v1839 = vand.u32 %v1838, 4294901760
        %v1840 = vsub.f32 %v1838, %v1839
        %v1841 = vand.u32 %v1840, 4294901760
        %1842 = vmatprep.subr.mxu0 %v1841
        %v1843 = vand.u32 %v1628, 4294901760
        %v1844 = vsub.f32 %v1628, %v1843
        %v1845 = vand.u32 %v1844, 4294901760
        %v1846 = vsub.f32 %v1844, %v1845
        %v1847 = vand.u32 %v1846, 4294901760
        %1848 = vmatpush1.msra.mxu0 %v1847
        %v1849 = vand.u32 %v1625, 4294901760
        %v1850 = vsub.f32 %v1625, %v1849
        %v1851 = vand.u32 %v1850, 4294901760
        %v1852 = vsub.f32 %v1850, %v1851
        %v1853 = vand.u32 %v1852, 4294901760
        %1854 = vmatprep.subr.mxu0 %v1853
        %v1855 = vand.u32 %v1624, 4294901760
        %v1856 = vsub.f32 %v1624, %v1855
        %v1857 = vand.u32 %v1856, 4294901760
        %v1858 = vsub.f32 %v1856, %v1857
        %v1859 = vand.u32 %v1858, 4294901760
        %1860 = vmatpush1.msra.mxu0 %v1859
        %v1861 = vand.u32 %v1621, 4294901760
        %v1862 = vsub.f32 %v1621, %v1861
        %v1863 = vand.u32 %v1862, 4294901760
        %v1864 = vsub.f32 %v1862, %v1863
        %v1865 = vand.u32 %v1864, 4294901760
        %1866 = vmatprep.subr.mxu0 %v1865
        %v1867 = vand.u32 %v1620, 4294901760
        %v1868 = vsub.f32 %v1620, %v1867
        %v1869 = vand.u32 %v1868, 4294901760
        %v1870 = vsub.f32 %v1868, %v1869
        %v1871 = vand.u32 %v1870, 4294901760
        %1872 = vmatpush1.msra.mxu0 %v1871
        %v1873 = vand.u32 %v1617, 4294901760
        %v1874 = vsub.f32 %v1617, %v1873
        %v1875 = vand.u32 %v1874, 4294901760
        %v1876 = vsub.f32 %v1874, %v1875
        %v1877 = vand.u32 %v1876, 4294901760
        %1878 = vmatprep.subr.mxu0 %v1877
        %v1879 = vand.u32 %v1616, 4294901760
        %v1880 = vsub.f32 %v1616, %v1879
        %v1881 = vand.u32 %v1880, 4294901760
        %v1882 = vsub.f32 %v1880, %v1881
        %v1883 = vand.u32 %v1882, 4294901760
        %1884 = vmatpush1.msra.mxu0 %v1883
        %v1885 = vand.u32 %v1613, 4294901760
        %v1886 = vsub.f32 %v1613, %v1885
        %v1887 = vand.u32 %v1886, 4294901760
        %v1888 = vsub.f32 %v1886, %v1887
        %v1889 = vand.u32 %v1888, 4294901760
        %1890 = vmatprep.subr.mxu0 %v1889
        %v1891 = vand.u32 %v1612, 4294901760
        %v1892 = vsub.f32 %v1612, %v1891
        %v1893 = vand.u32 %v1892, 4294901760
        %v1894 = vsub.f32 %v1892, %v1893
        %v1895 = vand.u32 %v1894, 4294901760
        %1896 = vmatpush1.msra.mxu0 %v1895
        %v1897 = vand.u32 %v1609, 4294901760
        %v1898 = vsub.f32 %v1609, %v1897
        %v1899 = vand.u32 %v1898, 4294901760
        %v1900 = vsub.f32 %v1898, %v1899
        %v1901 = vand.u32 %v1900, 4294901760
        %1902 = vmatprep.subr.mxu0 %v1901
        %v1903 = vand.u32 %v1608, 4294901760
        %v1904 = vsub.f32 %v1608, %v1903
        %v1905 = vand.u32 %v1904, 4294901760
        %v1906 = vsub.f32 %v1904, %v1905
        %v1907 = vand.u32 %v1906, 4294901760
        %1908 = vmatpush1.msra.mxu0 %v1907
        %v1909 = vand.u32 %v1605, 4294901760
        %v1910 = vsub.f32 %v1605, %v1909
        %v1911 = vand.u32 %v1910, 4294901760
        %v1912 = vsub.f32 %v1910, %v1911
        %v1913 = vand.u32 %v1912, 4294901760
        %1914 = vmatprep.subr.mxu0 %v1913
        %v1915 = vand.u32 %v1604, 4294901760
        %v1916 = vsub.f32 %v1604, %v1915
        %v1917 = vand.u32 %v1916, 4294901760
        %v1918 = vsub.f32 %v1916, %v1917
        %v1919 = vand.u32 %v1918, 4294901760
        %1920 = vmatpush1.msra.mxu0 %v1919
        %v1921 = vand.u32 %v1601, 4294901760
        %v1922 = vsub.f32 %v1601, %v1921
        %v1923 = vand.u32 %v1922, 4294901760
        %v1924 = vsub.f32 %v1922, %v1923
        %v1925 = vand.u32 %v1924, 4294901760
        %1926 = vmatprep.subr.mxu0 %v1925
        %v1927 = vand.u32 %v1600, 4294901760
        %v1928 = vsub.f32 %v1600, %v1927
        %v1929 = vand.u32 %v1928, 4294901760
        %v1930 = vsub.f32 %v1928, %v1929
        %v1931 = vand.u32 %v1930, 4294901760
        %1932 = vmatpush1.msra.mxu0 %v1931
        %v1933 = vand.u32 %v1597, 4294901760
        %v1934 = vsub.f32 %v1597, %v1933
        %v1935 = vand.u32 %v1934, 4294901760
        %v1936 = vsub.f32 %v1934, %v1935
        %v1937 = vand.u32 %v1936, 4294901760
        %1938 = vmatprep.subr.mxu0 %v1937
        %v1939 = vand.u32 %v1596, 4294901760
        %v1940 = vsub.f32 %v1596, %v1939
        %v1941 = vand.u32 %v1940, 4294901760
        %v1942 = vsub.f32 %v1940, %v1941
        %v1943 = vand.u32 %v1942, 4294901760
        %1944 = vmatpush1.msra.mxu0 %v1943
        %1945 = vmatprep.subr.mxu0 0.0
        %1946 = vmatpush2.msra.mxu0 0.0
        %1947 = vmatprep.subr.mxu0 0.0
        %1948 = vmatpush2.msra.mxu0 0.0
        %1949 = vmatprep.subr.mxu0 0.0
        %1950 = vmatpush2.msra.mxu0 0.0
        %1951 = vmatprep.subr.mxu0 0.0
        %1952 = vmatpush2.msra.mxu0 0.0
        %1953 = vmatprep.subr.mxu0 0.0
        %1954 = vmatpush2.msra.mxu0 0.0
        %1955 = vmatprep.subr.mxu0 0.0
        %1956 = vmatpush2.msra.mxu0 0.0
        %1957 = vmatprep.subr.mxu0 0.0
        %1958 = vmatpush2.msra.mxu0 0.0
        %1959 = vmatprep.subr.mxu0 0.0
        %1960 = vmatpush2.msra.mxu0 0.0
        %1961 = vmatprep.subr.mxu0 0.0
        %1962 = vmatpush2.msra.mxu0 0.0
        %1963 = vmatprep.subr.mxu0 0.0
        %1964 = vmatpush2.msra.mxu0 0.0
        %1965 = vmatprep.subr.mxu0 0.0
        %1966 = vmatpush2.msra.mxu0 0.0
        %1967 = vmatprep.subr.mxu0 0.0
        %1968 = vmatpush2.msra.mxu0 0.0
        %1969 = vmatprep.subr.mxu0 0.0
        %1970 = vmatpush2.msra.mxu0 0.0
        %1971 = vmatprep.subr.mxu0 0.0
        %1972 = vmatpush2.msra.mxu0 0.0
        %1973 = vmatprep.subr.mxu0 0.0
        %1974 = vmatpush2.msra.mxu0 0.0
        %1975 = vmatprep.subr.mxu0 0.0
        %1976 = vmatpush2.msra.mxu0 0.0
        %1977 = vmatprep.mubr.f32.mxu0 0.0
        %v1978 = vand.u32 %v1654, 4294901760
        %1979 = vmatmul.mubr.f32.gmra.mxu0 %v1978
        %v1980 = vpop.f32.mrf.mxu0
        %v1981 = vadd.f32 %v1769, %v1980
        %v1982 = vpop.f32.mrf.mxu0
        %v1983 = vadd.f32 %v1771, %v1982
        %1984 = vdwg.mxu0
        %1985 = vmatprep.subr.mxu0 0.0
        %1986 = vmatpush1.msra.mxu0 0.0
        %1987 = vmatprep.subr.mxu0 0.0
        %1988 = vmatpush1.msra.mxu0 0.0
        %v1989 = vand.u32 %v1661, 4294901760
        %v1990 = vsub.f32 %v1661, %v1989
        %1991 = vmatprep.subr.mxu0 %v1990
        %v1992 = vand.u32 %v1658, 4294901760
        %v1993 = vsub.f32 %v1658, %v1992
        %1994 = vmatpush1.msra.mxu0 %v1993
        %v1995 = vand.u32 %v1645, 4294901760
        %v1996 = vsub.f32 %v1645, %v1995
        %1997 = vmatprep.subr.mxu0 %v1996
        %v1998 = vand.u32 %v1644, 4294901760
        %v1999 = vsub.f32 %v1644, %v1998
        %2000 = vmatpush1.msra.mxu0 %v1999
        %v2001 = vand.u32 %v1641, 4294901760
        %v2002 = vsub.f32 %v1641, %v2001
        %2003 = vmatprep.subr.mxu0 %v2002
        %v2004 = vand.u32 %v1640, 4294901760
        %v2005 = vsub.f32 %v1640, %v2004
        %2006 = vmatpush1.msra.mxu0 %v2005
        %v2007 = vand.u32 %v1637, 4294901760
        %v2008 = vsub.f32 %v1637, %v2007
        %2009 = vmatprep.subr.mxu0 %v2008
        %v2010 = vand.u32 %v1636, 4294901760
        %v2011 = vsub.f32 %v1636, %v2010
        %2012 = vmatpush1.msra.mxu0 %v2011
        %v2013 = vand.u32 %v1633, 4294901760
        %v2014 = vsub.f32 %v1633, %v2013
        %2015 = vmatprep.subr.mxu0 %v2014
        %v2016 = vand.u32 %v1632, 4294901760
        %v2017 = vsub.f32 %v1632, %v2016
        %2018 = vmatpush1.msra.mxu0 %v2017
        %v2019 = vand.u32 %v1629, 4294901760
        %v2020 = vsub.f32 %v1629, %v2019
        %2021 = vmatprep.subr.mxu0 %v2020
        %v2022 = vand.u32 %v1628, 4294901760
        %v2023 = vsub.f32 %v1628, %v2022
        %2024 = vmatpush1.msra.mxu0 %v2023
        %v2025 = vand.u32 %v1625, 4294901760
        %v2026 = vsub.f32 %v1625, %v2025
        %2027 = vmatprep.subr.mxu0 %v2026
        %v2028 = vand.u32 %v1624, 4294901760
        %v2029 = vsub.f32 %v1624, %v2028
        %2030 = vmatpush1.msra.mxu0 %v2029
        %v2031 = vand.u32 %v1621, 4294901760
        %v2032 = vsub.f32 %v1621, %v2031
        %2033 = vmatprep.subr.mxu0 %v2032
        %v2034 = vand.u32 %v1620, 4294901760
        %v2035 = vsub.f32 %v1620, %v2034
        %2036 = vmatpush1.msra.mxu0 %v2035
        %v2037 = vand.u32 %v1617, 4294901760
        %v2038 = vsub.f32 %v1617, %v2037
        %2039 = vmatprep.subr.mxu0 %v2038
        %v2040 = vand.u32 %v1616, 4294901760
        %v2041 = vsub.f32 %v1616, %v2040
        %2042 = vmatpush1.msra.mxu0 %v2041
        %v2043 = vand.u32 %v1613, 4294901760
        %v2044 = vsub.f32 %v1613, %v2043
        %2045 = vmatprep.subr.mxu0 %v2044
        %v2046 = vand.u32 %v1612, 4294901760
        %v2047 = vsub.f32 %v1612, %v2046
        %2048 = vmatpush1.msra.mxu0 %v2047
        %v2049 = vand.u32 %v1609, 4294901760
        %v2050 = vsub.f32 %v1609, %v2049
        %2051 = vmatprep.subr.mxu0 %v2050
        %v2052 = vand.u32 %v1608, 4294901760
        %v2053 = vsub.f32 %v1608, %v2052
        %2054 = vmatpush1.msra.mxu0 %v2053
        %v2055 = vand.u32 %v1605, 4294901760
        %v2056 = vsub.f32 %v1605, %v2055
        %2057 = vmatprep.subr.mxu0 %v2056
        %v2058 = vand.u32 %v1604, 4294901760
        %v2059 = vsub.f32 %v1604, %v2058
        %2060 = vmatpush1.msra.mxu0 %v2059
        %v2061 = vand.u32 %v1601, 4294901760
        %v2062 = vsub.f32 %v1601, %v2061
        %2063 = vmatprep.subr.mxu0 %v2062
        %v2064 = vand.u32 %v1600, 4294901760
        %v2065 = vsub.f32 %v1600, %v2064
        %2066 = vmatpush1.msra.mxu0 %v2065
        %v2067 = vand.u32 %v1597, 4294901760
        %v2068 = vsub.f32 %v1597, %v2067
        %2069 = vmatprep.subr.mxu0 %v2068
        %v2070 = vand.u32 %v1596, 4294901760
        %v2071 = vsub.f32 %v1596, %v2070
        %2072 = vmatpush1.msra.mxu0 %v2071
        %2073 = vmatprep.subr.mxu0 0.0
        %2074 = vmatpush2.msra.mxu0 0.0
        %2075 = vmatprep.subr.mxu0 0.0
        %2076 = vmatpush2.msra.mxu0 0.0
        %2077 = vmatprep.subr.mxu0 0.0
        %2078 = vmatpush2.msra.mxu0 0.0
        %2079 = vmatprep.subr.mxu0 0.0
        %2080 = vmatpush2.msra.mxu0 0.0
        %2081 = vmatprep.subr.mxu0 0.0
        %2082 = vmatpush2.msra.mxu0 0.0
        %2083 = vmatprep.subr.mxu0 0.0
        %2084 = vmatpush2.msra.mxu0 0.0
        %2085 = vmatprep.subr.mxu0 0.0
        %2086 = vmatpush2.msra.mxu0 0.0
        %2087 = vmatprep.subr.mxu0 0.0
        %2088 = vmatpush2.msra.mxu0 0.0
        %2089 = vmatprep.subr.mxu0 0.0
        %2090 = vmatpush2.msra.mxu0 0.0
        %2091 = vmatprep.subr.mxu0 0.0
        %2092 = vmatpush2.msra.mxu0 0.0
        %2093 = vmatprep.subr.mxu0 0.0
        %2094 = vmatpush2.msra.mxu0 0.0
        %2095 = vmatprep.subr.mxu0 0.0
        %2096 = vmatpush2.msra.mxu0 0.0
        %2097 = vmatprep.subr.mxu0 0.0
        %2098 = vmatpush2.msra.mxu0 0.0
        %2099 = vmatprep.subr.mxu0 0.0
        %2100 = vmatpush2.msra.mxu0 0.0
        %2101 = vmatprep.subr.mxu0 0.0
        %2102 = vmatpush2.msra.mxu0 0.0
        %2103 = vmatprep.subr.mxu0 0.0
        %2104 = vmatpush2.msra.mxu0 0.0
        %2105 = vmatprep.mubr.f32.mxu0 0.0
        %v2106 = vand.u32 %v1654, 4294901760
        %v2107 = vsub.f32 %v1654, %v2106
        %2108 = vmatmul.mubr.f32.gmra.mxu0 %v2107
        %v2109 = vpop.f32.mrf.mxu0
        %v2110 = vadd.f32 %v1981, %v2109
        %v2111 = vpop.f32.mrf.mxu0
        %v2112 = vadd.f32 %v1983, %v2111
        %2113 = vdwg.mxu0
        %2114 = vmatprep.subr.mxu0 0.0
        %2115 = vmatpush1.msra.mxu0 0.0
        %2116 = vmatprep.subr.mxu0 0.0
        %2117 = vmatpush1.msra.mxu0 0.0
        %v2118 = vand.u32 %v1661, 4294901760
        %2119 = vmatprep.subr.mxu0 %v2118
        %v2120 = vand.u32 %v1658, 4294901760
        %2121 = vmatpush1.msra.mxu0 %v2120
        %v2122 = vand.u32 %v1645, 4294901760
        %2123 = vmatprep.subr.mxu0 %v2122
        %v2124 = vand.u32 %v1644, 4294901760
        %2125 = vmatpush1.msra.mxu0 %v2124
        %v2126 = vand.u32 %v1641, 4294901760
        %2127 = vmatprep.subr.mxu0 %v2126
        %v2128 = vand.u32 %v1640, 4294901760
        %2129 = vmatpush1.msra.mxu0 %v2128
        %v2130 = vand.u32 %v1637, 4294901760
        %2131 = vmatprep.subr.mxu0 %v2130
        %v2132 = vand.u32 %v1636, 4294901760
        %2133 = vmatpush1.msra.mxu0 %v2132
        %v2134 = vand.u32 %v1633, 4294901760
        %2135 = vmatprep.subr.mxu0 %v2134
        %v2136 = vand.u32 %v1632, 4294901760
        %2137 = vmatpush1.msra.mxu0 %v2136
        %v2138 = vand.u32 %v1629, 4294901760
        %2139 = vmatprep.subr.mxu0 %v2138
        %v2140 = vand.u32 %v1628, 4294901760
        %2141 = vmatpush1.msra.mxu0 %v2140
        %v2142 = vand.u32 %v1625, 4294901760
        %2143 = vmatprep.subr.mxu0 %v2142
        %v2144 = vand.u32 %v1624, 4294901760
        %2145 = vmatpush1.msra.mxu0 %v2144
        %v2146 = vand.u32 %v1621, 4294901760
        %2147 = vmatprep.subr.mxu0 %v2146
        %v2148 = vand.u32 %v1620, 4294901760
        %2149 = vmatpush1.msra.mxu0 %v2148
        %v2150 = vand.u32 %v1617, 4294901760
        %2151 = vmatprep.subr.mxu0 %v2150
        %v2152 = vand.u32 %v1616, 4294901760
        %2153 = vmatpush1.msra.mxu0 %v2152
        %v2154 = vand.u32 %v1613, 4294901760
        %2155 = vmatprep.subr.mxu0 %v2154
        %v2156 = vand.u32 %v1612, 4294901760
        %2157 = vmatpush1.msra.mxu0 %v2156
        %v2158 = vand.u32 %v1609, 4294901760
        %2159 = vmatprep.subr.mxu0 %v2158
        %v2160 = vand.u32 %v1608, 4294901760
        %2161 = vmatpush1.msra.mxu0 %v2160
        %v2162 = vand.u32 %v1605, 4294901760
        %2163 = vmatprep.subr.mxu0 %v2162
        %v2164 = vand.u32 %v1604, 4294901760
        %2165 = vmatpush1.msra.mxu0 %v2164
        %v2166 = vand.u32 %v1601, 4294901760
        %2167 = vmatprep.subr.mxu0 %v2166
        %v2168 = vand.u32 %v1600, 4294901760
        %2169 = vmatpush1.msra.mxu0 %v2168
        %v2170 = vand.u32 %v1597, 4294901760
        %2171 = vmatprep.subr.mxu0 %v2170
        %v2172 = vand.u32 %v1596, 4294901760
        %2173 = vmatpush1.msra.mxu0 %v2172
        %2174 = vmatprep.subr.mxu0 0.0
        %2175 = vmatpush2.msra.mxu0 0.0
        %2176 = vmatprep.subr.mxu0 0.0
        %2177 = vmatpush2.msra.mxu0 0.0
        %2178 = vmatprep.subr.mxu0 0.0
        %2179 = vmatpush2.msra.mxu0 0.0
        %2180 = vmatprep.subr.mxu0 0.0
        %2181 = vmatpush2.msra.mxu0 0.0
        %2182 = vmatprep.subr.mxu0 0.0
        %2183 = vmatpush2.msra.mxu0 0.0
        %2184 = vmatprep.subr.mxu0 0.0
        %2185 = vmatpush2.msra.mxu0 0.0
        %2186 = vmatprep.subr.mxu0 0.0
        %2187 = vmatpush2.msra.mxu0 0.0
        %2188 = vmatprep.subr.mxu0 0.0
        %2189 = vmatpush2.msra.mxu0 0.0
        %2190 = vmatprep.subr.mxu0 0.0
        %2191 = vmatpush2.msra.mxu0 0.0
        %2192 = vmatprep.subr.mxu0 0.0
        %2193 = vmatpush2.msra.mxu0 0.0
        %2194 = vmatprep.subr.mxu0 0.0
        %2195 = vmatpush2.msra.mxu0 0.0
        %2196 = vmatprep.subr.mxu0 0.0
        %2197 = vmatpush2.msra.mxu0 0.0
        %2198 = vmatprep.subr.mxu0 0.0
        %2199 = vmatpush2.msra.mxu0 0.0
        %2200 = vmatprep.subr.mxu0 0.0
        %2201 = vmatpush2.msra.mxu0 0.0
        %2202 = vmatprep.subr.mxu0 0.0
        %2203 = vmatpush2.msra.mxu0 0.0
        %2204 = vmatprep.subr.mxu0 0.0
        %2205 = vmatpush2.msra.mxu0 0.0
        %2206 = vmatprep.mubr.f32.mxu0 0.0
        %v2207 = vand.u32 %v1654, 4294901760
        %v2208 = vsub.f32 %v1654, %v2207
        %v2209 = vand.u32 %v2208, 4294901760
        %2210 = vmatmul.mubr.f32.gmra.mxu0 %v2209
        %v2211 = vpop.f32.mrf.mxu0
        %v2212 = vadd.f32 %v2110, %v2211
        %v2213 = vpop.f32.mrf.mxu0
        %v2214 = vadd.f32 %v2112, %v2213
        %2215 = vdwg.mxu0
        %2216 = vmatprep.subr.mxu0 0.0
        %2217 = vmatpush1.msra.mxu0 0.0
        %2218 = vmatprep.subr.mxu0 0.0
        %2219 = vmatpush1.msra.mxu0 0.0
        %v2220 = vand.u32 %v1661, 4294901760
        %v2221 = vsub.f32 %v1661, %v2220
        %v2222 = vand.u32 %v2221, 4294901760
        %2223 = vmatprep.subr.mxu0 %v2222
        %v2224 = vand.u32 %v1658, 4294901760
        %v2225 = vsub.f32 %v1658, %v2224
        %v2226 = vand.u32 %v2225, 4294901760
        %2227 = vmatpush1.msra.mxu0 %v2226
        %v2228 = vand.u32 %v1645, 4294901760
        %v2229 = vsub.f32 %v1645, %v2228
        %v2230 = vand.u32 %v2229, 4294901760
        %2231 = vmatprep.subr.mxu0 %v2230
        %v2232 = vand.u32 %v1644, 4294901760
        %v2233 = vsub.f32 %v1644, %v2232
        %v2234 = vand.u32 %v2233, 4294901760
        %2235 = vmatpush1.msra.mxu0 %v2234
        %v2236 = vand.u32 %v1641, 4294901760
        %v2237 = vsub.f32 %v1641, %v2236
        %v2238 = vand.u32 %v2237, 4294901760
        %2239 = vmatprep.subr.mxu0 %v2238
        %v2240 = vand.u32 %v1640, 4294901760
        %v2241 = vsub.f32 %v1640, %v2240
        %v2242 = vand.u32 %v2241, 4294901760
        %2243 = vmatpush1.msra.mxu0 %v2242
        %v2244 = vand.u32 %v1637, 4294901760
        %v2245 = vsub.f32 %v1637, %v2244
        %v2246 = vand.u32 %v2245, 4294901760
        %2247 = vmatprep.subr.mxu0 %v2246
        %v2248 = vand.u32 %v1636, 4294901760
        %v2249 = vsub.f32 %v1636, %v2248
        %v2250 = vand.u32 %v2249, 4294901760
        %2251 = vmatpush1.msra.mxu0 %v2250
        %v2252 = vand.u32 %v1633, 4294901760
        %v2253 = vsub.f32 %v1633, %v2252
        %v2254 = vand.u32 %v2253, 4294901760
        %2255 = vmatprep.subr.mxu0 %v2254
        %v2256 = vand.u32 %v1632, 4294901760
        %v2257 = vsub.f32 %v1632, %v2256
        %v2258 = vand.u32 %v2257, 4294901760
        %2259 = vmatpush1.msra.mxu0 %v2258
        %v2260 = vand.u32 %v1629, 4294901760
        %v2261 = vsub.f32 %v1629, %v2260
        %v2262 = vand.u32 %v2261, 4294901760
        %2263 = vmatprep.subr.mxu0 %v2262
        %v2264 = vand.u32 %v1628, 4294901760
        %v2265 = vsub.f32 %v1628, %v2264
        %v2266 = vand.u32 %v2265, 4294901760
        %2267 = vmatpush1.msra.mxu0 %v2266
        %v2268 = vand.u32 %v1625, 4294901760
        %v2269 = vsub.f32 %v1625, %v2268
        %v2270 = vand.u32 %v2269, 4294901760
        %2271 = vmatprep.subr.mxu0 %v2270
        %v2272 = vand.u32 %v1624, 4294901760
        %v2273 = vsub.f32 %v1624, %v2272
        %v2274 = vand.u32 %v2273, 4294901760
        %2275 = vmatpush1.msra.mxu0 %v2274
        %v2276 = vand.u32 %v1621, 4294901760
        %v2277 = vsub.f32 %v1621, %v2276
        %v2278 = vand.u32 %v2277, 4294901760
        %2279 = vmatprep.subr.mxu0 %v2278
        %v2280 = vand.u32 %v1620, 4294901760
        %v2281 = vsub.f32 %v1620, %v2280
        %v2282 = vand.u32 %v2281, 4294901760
        %2283 = vmatpush1.msra.mxu0 %v2282
        %v2284 = vand.u32 %v1617, 4294901760
        %v2285 = vsub.f32 %v1617, %v2284
        %v2286 = vand.u32 %v2285, 4294901760
        %2287 = vmatprep.subr.mxu0 %v2286
        %v2288 = vand.u32 %v1616, 4294901760
        %v2289 = vsub.f32 %v1616, %v2288
        %v2290 = vand.u32 %v2289, 4294901760
        %2291 = vmatpush1.msra.mxu0 %v2290
        %v2292 = vand.u32 %v1613, 4294901760
        %v2293 = vsub.f32 %v1613, %v2292
        %v2294 = vand.u32 %v2293, 4294901760
        %2295 = vmatprep.subr.mxu0 %v2294
        %v2296 = vand.u32 %v1612, 4294901760
        %v2297 = vsub.f32 %v1612, %v2296
        %v2298 = vand.u32 %v2297, 4294901760
        %2299 = vmatpush1.msra.mxu0 %v2298
        %v2300 = vand.u32 %v1609, 4294901760
        %v2301 = vsub.f32 %v1609, %v2300
        %v2302 = vand.u32 %v2301, 4294901760
        %2303 = vmatprep.subr.mxu0 %v2302
        %v2304 = vand.u32 %v1608, 4294901760
        %v2305 = vsub.f32 %v1608, %v2304
        %v2306 = vand.u32 %v2305, 4294901760
        %2307 = vmatpush1.msra.mxu0 %v2306
        %v2308 = vand.u32 %v1605, 4294901760
        %v2309 = vsub.f32 %v1605, %v2308
        %v2310 = vand.u32 %v2309, 4294901760
        %2311 = vmatprep.subr.mxu0 %v2310
        %v2312 = vand.u32 %v1604, 4294901760
        %v2313 = vsub.f32 %v1604, %v2312
        %v2314 = vand.u32 %v2313, 4294901760
        %2315 = vmatpush1.msra.mxu0 %v2314
        %v2316 = vand.u32 %v1601, 4294901760
        %v2317 = vsub.f32 %v1601, %v2316
        %v2318 = vand.u32 %v2317, 4294901760
        %2319 = vmatprep.subr.mxu0 %v2318
        %v2320 = vand.u32 %v1600, 4294901760
        %v2321 = vsub.f32 %v1600, %v2320
        %v2322 = vand.u32 %v2321, 4294901760
        %2323 = vmatpush1.msra.mxu0 %v2322
        %v2324 = vand.u32 %v1597, 4294901760
        %v2325 = vsub.f32 %v1597, %v2324
        %v2326 = vand.u32 %v2325, 4294901760
        %2327 = vmatprep.subr.mxu0 %v2326
        %v2328 = vand.u32 %v1596, 4294901760
        %v2329 = vsub.f32 %v1596, %v2328
        %v2330 = vand.u32 %v2329, 4294901760
        %2331 = vmatpush1.msra.mxu0 %v2330
        %2332 = vmatprep.subr.mxu0 0.0
        %2333 = vmatpush2.msra.mxu0 0.0
        %2334 = vmatprep.subr.mxu0 0.0
        %2335 = vmatpush2.msra.mxu0 0.0
        %2336 = vmatprep.subr.mxu0 0.0
        %2337 = vmatpush2.msra.mxu0 0.0
        %2338 = vmatprep.subr.mxu0 0.0
        %2339 = vmatpush2.msra.mxu0 0.0
        %2340 = vmatprep.subr.mxu0 0.0
        %2341 = vmatpush2.msra.mxu0 0.0
        %2342 = vmatprep.subr.mxu0 0.0
        %2343 = vmatpush2.msra.mxu0 0.0
        %2344 = vmatprep.subr.mxu0 0.0
        %2345 = vmatpush2.msra.mxu0 0.0
        %2346 = vmatprep.subr.mxu0 0.0
        %2347 = vmatpush2.msra.mxu0 0.0
        %2348 = vmatprep.subr.mxu0 0.0
        %2349 = vmatpush2.msra.mxu0 0.0
        %2350 = vmatprep.subr.mxu0 0.0
        %2351 = vmatpush2.msra.mxu0 0.0
        %2352 = vmatprep.subr.mxu0 0.0
        %2353 = vmatpush2.msra.mxu0 0.0
        %2354 = vmatprep.subr.mxu0 0.0
        %2355 = vmatpush2.msra.mxu0 0.0
        %2356 = vmatprep.subr.mxu0 0.0
        %2357 = vmatpush2.msra.mxu0 0.0
        %2358 = vmatprep.subr.mxu0 0.0
        %2359 = vmatpush2.msra.mxu0 0.0
        %2360 = vmatprep.subr.mxu0 0.0
        %2361 = vmatpush2.msra.mxu0 0.0
        %2362 = vmatprep.subr.mxu0 0.0
        %2363 = vmatpush2.msra.mxu0 0.0
        %2364 = vmatprep.mubr.f32.mxu0 0.0
        %v2365 = vand.u32 %v1654, 4294901760
        %2366 = vmatmul.mubr.f32.gmra.mxu0 %v2365
        %v2367 = vpop.f32.mrf.mxu0
        %v2368 = vadd.f32 %v2212, %v2367
        %v2369 = vpop.f32.mrf.mxu0
        %v2370 = vadd.f32 %v2214, %v2369
        %2371 = vdwg.mxu0
        %2372 = vmatprep.subr.mxu0 0.0
        %2373 = vmatpush1.msra.mxu0 0.0
        %2374 = vmatprep.subr.mxu0 0.0
        %2375 = vmatpush1.msra.mxu0 0.0
        %v2376 = vand.u32 %v1661, 4294901760
        %2377 = vmatprep.subr.mxu0 %v2376
        %v2378 = vand.u32 %v1658, 4294901760
        %2379 = vmatpush1.msra.mxu0 %v2378
        %v2380 = vand.u32 %v1645, 4294901760
        %2381 = vmatprep.subr.mxu0 %v2380
        %v2382 = vand.u32 %v1644, 4294901760
        %2383 = vmatpush1.msra.mxu0 %v2382
        %v2384 = vand.u32 %v1641, 4294901760
        %2385 = vmatprep.subr.mxu0 %v2384
        %v2386 = vand.u32 %v1640, 4294901760
        %2387 = vmatpush1.msra.mxu0 %v2386
        %v2388 = vand.u32 %v1637, 4294901760
        %2389 = vmatprep.subr.mxu0 %v2388
        %v2390 = vand.u32 %v1636, 4294901760
        %2391 = vmatpush1.msra.mxu0 %v2390
        %v2392 = vand.u32 %v1633, 4294901760
        %2393 = vmatprep.subr.mxu0 %v2392
        %v2394 = vand.u32 %v1632, 4294901760
        %2395 = vmatpush1.msra.mxu0 %v2394
        %v2396 = vand.u32 %v1629, 4294901760
        %2397 = vmatprep.subr.mxu0 %v2396
        %v2398 = vand.u32 %v1628, 4294901760
        %2399 = vmatpush1.msra.mxu0 %v2398
        %v2400 = vand.u32 %v1625, 4294901760
        %2401 = vmatprep.subr.mxu0 %v2400
        %v2402 = vand.u32 %v1624, 4294901760
        %2403 = vmatpush1.msra.mxu0 %v2402
        %v2404 = vand.u32 %v1621, 4294901760
        %2405 = vmatprep.subr.mxu0 %v2404
        %v2406 = vand.u32 %v1620, 4294901760
        %2407 = vmatpush1.msra.mxu0 %v2406
        %v2408 = vand.u32 %v1617, 4294901760
        %2409 = vmatprep.subr.mxu0 %v2408
        %v2410 = vand.u32 %v1616, 4294901760
        %2411 = vmatpush1.msra.mxu0 %v2410
        %v2412 = vand.u32 %v1613, 4294901760
        %2413 = vmatprep.subr.mxu0 %v2412
        %v2414 = vand.u32 %v1612, 4294901760
        %2415 = vmatpush1.msra.mxu0 %v2414
        %v2416 = vand.u32 %v1609, 4294901760
        %2417 = vmatprep.subr.mxu0 %v2416
        %v2418 = vand.u32 %v1608, 4294901760
        %2419 = vmatpush1.msra.mxu0 %v2418
        %v2420 = vand.u32 %v1605, 4294901760
        %2421 = vmatprep.subr.mxu0 %v2420
        %v2422 = vand.u32 %v1604, 4294901760
        %2423 = vmatpush1.msra.mxu0 %v2422
        %v2424 = vand.u32 %v1601, 4294901760
        %2425 = vmatprep.subr.mxu0 %v2424
        %v2426 = vand.u32 %v1600, 4294901760
        %2427 = vmatpush1.msra.mxu0 %v2426
        %v2428 = vand.u32 %v1597, 4294901760
        %2429 = vmatprep.subr.mxu0 %v2428
        %v2430 = vand.u32 %v1596, 4294901760
        %2431 = vmatpush1.msra.mxu0 %v2430
        %2432 = vmatprep.subr.mxu0 0.0
        %2433 = vmatpush2.msra.mxu0 0.0
        %2434 = vmatprep.subr.mxu0 0.0
        %2435 = vmatpush2.msra.mxu0 0.0
        %2436 = vmatprep.subr.mxu0 0.0
        %2437 = vmatpush2.msra.mxu0 0.0
        %2438 = vmatprep.subr.mxu0 0.0
        %2439 = vmatpush2.msra.mxu0 0.0
        %2440 = vmatprep.subr.mxu0 0.0
        %2441 = vmatpush2.msra.mxu0 0.0
        %2442 = vmatprep.subr.mxu0 0.0
        %2443 = vmatpush2.msra.mxu0 0.0
        %2444 = vmatprep.subr.mxu0 0.0
        %2445 = vmatpush2.msra.mxu0 0.0
        %2446 = vmatprep.subr.mxu0 0.0
        %2447 = vmatpush2.msra.mxu0 0.0
        %2448 = vmatprep.subr.mxu0 0.0
        %2449 = vmatpush2.msra.mxu0 0.0
        %2450 = vmatprep.subr.mxu0 0.0
        %2451 = vmatpush2.msra.mxu0 0.0
        %2452 = vmatprep.subr.mxu0 0.0
        %2453 = vmatpush2.msra.mxu0 0.0
        %2454 = vmatprep.subr.mxu0 0.0
        %2455 = vmatpush2.msra.mxu0 0.0
        %2456 = vmatprep.subr.mxu0 0.0
        %2457 = vmatpush2.msra.mxu0 0.0
        %2458 = vmatprep.subr.mxu0 0.0
        %2459 = vmatpush2.msra.mxu0 0.0
        %2460 = vmatprep.subr.mxu0 0.0
        %2461 = vmatpush2.msra.mxu0 0.0
        %2462 = vmatprep.subr.mxu0 0.0
        %2463 = vmatpush2.msra.mxu0 0.0
        %2464 = vmatprep.mubr.f32.mxu0 0.0
        %v2465 = vand.u32 %v1654, 4294901760
        %2466 = vmatmul.mubr.f32.gmra.mxu0 %v2465
        %v2467 = vpop.f32.mrf.mxu0
        %v2468 = vadd.f32 %v2368, %v2467
        %v2469 = vpop.f32.mrf.mxu0
        %v2470 = vadd.f32 %v2370, %v2469
        %2471 = vdwg.mxu0
        %2472 = vmatprep.subr.mxu0 0.0
        %2473 = vmatpush1.msra.mxu0 0.0
        %2474 = vmatprep.subr.mxu0 0.0
        %2475 = vmatpush1.msra.mxu0 0.0
        %v2476 = vand.u32 %v1667, 4294901760
        %2477 = vmatprep.subr.mxu0 %v2476
        %v2478 = vand.u32 %v1664, 4294901760
        %2479 = vmatpush1.msra.mxu0 %v2478
        %v2480 = vand.u32 %v1647, 4294901760
        %2481 = vmatprep.subr.mxu0 %v2480
        %v2482 = vand.u32 %v1646, 4294901760
        %2483 = vmatpush1.msra.mxu0 %v2482
        %v2484 = vand.u32 %v1643, 4294901760
        %2485 = vmatprep.subr.mxu0 %v2484
        %v2486 = vand.u32 %v1642, 4294901760
        %2487 = vmatpush1.msra.mxu0 %v2486
        %v2488 = vand.u32 %v1639, 4294901760
        %2489 = vmatprep.subr.mxu0 %v2488
        %v2490 = vand.u32 %v1638, 4294901760
        %2491 = vmatpush1.msra.mxu0 %v2490
        %v2492 = vand.u32 %v1635, 4294901760
        %2493 = vmatprep.subr.mxu0 %v2492
        %v2494 = vand.u32 %v1634, 4294901760
        %2495 = vmatpush1.msra.mxu0 %v2494
        %v2496 = vand.u32 %v1631, 4294901760
        %2497 = vmatprep.subr.mxu0 %v2496
        %v2498 = vand.u32 %v1630, 4294901760
        %2499 = vmatpush1.msra.mxu0 %v2498
        %v2500 = vand.u32 %v1627, 4294901760
        %2501 = vmatprep.subr.mxu0 %v2500
        %v2502 = vand.u32 %v1626, 4294901760
        %2503 = vmatpush1.msra.mxu0 %v2502
        %v2504 = vand.u32 %v1623, 4294901760
        %2505 = vmatprep.subr.mxu0 %v2504
        %v2506 = vand.u32 %v1622, 4294901760
        %2507 = vmatpush1.msra.mxu0 %v2506
        %v2508 = vand.u32 %v1619, 4294901760
        %2509 = vmatprep.subr.mxu0 %v2508
        %v2510 = vand.u32 %v1618, 4294901760
        %2511 = vmatpush1.msra.mxu0 %v2510
        %v2512 = vand.u32 %v1615, 4294901760
        %2513 = vmatprep.subr.mxu0 %v2512
        %v2514 = vand.u32 %v1614, 4294901760
        %2515 = vmatpush1.msra.mxu0 %v2514
        %v2516 = vand.u32 %v1611, 4294901760
        %2517 = vmatprep.subr.mxu0 %v2516
        %v2518 = vand.u32 %v1610, 4294901760
        %2519 = vmatpush1.msra.mxu0 %v2518
        %v2520 = vand.u32 %v1607, 4294901760
        %2521 = vmatprep.subr.mxu0 %v2520
        %v2522 = vand.u32 %v1606, 4294901760
        %2523 = vmatpush1.msra.mxu0 %v2522
        %v2524 = vand.u32 %v1603, 4294901760
        %2525 = vmatprep.subr.mxu0 %v2524
        %v2526 = vand.u32 %v1602, 4294901760
        %2527 = vmatpush1.msra.mxu0 %v2526
        %v2528 = vand.u32 %v1599, 4294901760
        %2529 = vmatprep.subr.mxu0 %v2528
        %v2530 = vand.u32 %v1598, 4294901760
        %2531 = vmatpush1.msra.mxu0 %v2530
        %2532 = vmatprep.subr.mxu0 0.0
        %2533 = vmatpush2.msra.mxu0 0.0
        %2534 = vmatprep.subr.mxu0 0.0
        %2535 = vmatpush2.msra.mxu0 0.0
        %2536 = vmatprep.subr.mxu0 0.0
        %2537 = vmatpush2.msra.mxu0 0.0
        %2538 = vmatprep.subr.mxu0 0.0
        %2539 = vmatpush2.msra.mxu0 0.0
        %2540 = vmatprep.subr.mxu0 0.0
        %2541 = vmatpush2.msra.mxu0 0.0
        %2542 = vmatprep.subr.mxu0 0.0
        %2543 = vmatpush2.msra.mxu0 0.0
        %2544 = vmatprep.subr.mxu0 0.0
        %2545 = vmatpush2.msra.mxu0 0.0
        %2546 = vmatprep.subr.mxu0 0.0
        %2547 = vmatpush2.msra.mxu0 0.0
        %2548 = vmatprep.subr.mxu0 0.0
        %2549 = vmatpush2.msra.mxu0 0.0
        %2550 = vmatprep.subr.mxu0 0.0
        %2551 = vmatpush2.msra.mxu0 0.0
        %2552 = vmatprep.subr.mxu0 0.0
        %2553 = vmatpush2.msra.mxu0 0.0
        %2554 = vmatprep.subr.mxu0 0.0
        %2555 = vmatpush2.msra.mxu0 0.0
        %2556 = vmatprep.subr.mxu0 0.0
        %2557 = vmatpush2.msra.mxu0 0.0
        %2558 = vmatprep.subr.mxu0 0.0
        %2559 = vmatpush2.msra.mxu0 0.0
        %2560 = vmatprep.subr.mxu0 0.0
        %2561 = vmatpush2.msra.mxu0 0.0
        %2562 = vmatprep.subr.mxu0 0.0
        %2563 = vmatpush2.msra.mxu0 0.0
        %2564 = vmatprep.mubr.f32.mxu0 0.0
        %v2565 = vand.u32 %v1654, 4294901760
        %v2566 = vsub.f32 %v1654, %v2565
        %v2567 = vand.u32 %v2566, 4294901760
        %v2568 = vsub.f32 %v2566, %v2567
        %v2569 = vand.u32 %v2568, 4294901760
        %2570 = vmatmul.mubr.f32.gmra.mxu0 %v2569
        %v2571 = vpop.f32.mrf.mxu0
        %v2572 = vadd.f32 0.0, %v2571
        %v2573 = vpop.f32.mrf.mxu0
        %v2574 = vadd.f32 0.0, %v2573
        %2575 = vdwg.mxu0
        %2576 = vmatprep.subr.mxu0 0.0
        %2577 = vmatpush1.msra.mxu0 0.0
        %2578 = vmatprep.subr.mxu0 0.0
        %2579 = vmatpush1.msra.mxu0 0.0
        %v2580 = vand.u32 %v1667, 4294901760
        %v2581 = vsub.f32 %v1667, %v2580
        %v2582 = vand.u32 %v2581, 4294901760
        %v2583 = vsub.f32 %v2581, %v2582
        %v2584 = vand.u32 %v2583, 4294901760
        %2585 = vmatprep.subr.mxu0 %v2584
        %v2586 = vand.u32 %v1664, 4294901760
        %v2587 = vsub.f32 %v1664, %v2586
        %v2588 = vand.u32 %v2587, 4294901760
        %v2589 = vsub.f32 %v2587, %v2588
        %v2590 = vand.u32 %v2589, 4294901760
        %2591 = vmatpush1.msra.mxu0 %v2590
        %v2592 = vand.u32 %v1647, 4294901760
        %v2593 = vsub.f32 %v1647, %v2592
        %v2594 = vand.u32 %v2593, 4294901760
        %v2595 = vsub.f32 %v2593, %v2594
        %v2596 = vand.u32 %v2595, 4294901760
        %2597 = vmatprep.subr.mxu0 %v2596
        %v2598 = vand.u32 %v1646, 4294901760
        %v2599 = vsub.f32 %v1646, %v2598
        %v2600 = vand.u32 %v2599, 4294901760
        %v2601 = vsub.f32 %v2599, %v2600
        %v2602 = vand.u32 %v2601, 4294901760
        %2603 = vmatpush1.msra.mxu0 %v2602
        %v2604 = vand.u32 %v1643, 4294901760
        %v2605 = vsub.f32 %v1643, %v2604
        %v2606 = vand.u32 %v2605, 4294901760
        %v2607 = vsub.f32 %v2605, %v2606
        %v2608 = vand.u32 %v2607, 4294901760
        %2609 = vmatprep.subr.mxu0 %v2608
        %v2610 = vand.u32 %v1642, 4294901760
        %v2611 = vsub.f32 %v1642, %v2610
        %v2612 = vand.u32 %v2611, 4294901760
        %v2613 = vsub.f32 %v2611, %v2612
        %v2614 = vand.u32 %v2613, 4294901760
        %2615 = vmatpush1.msra.mxu0 %v2614
        %v2616 = vand.u32 %v1639, 4294901760
        %v2617 = vsub.f32 %v1639, %v2616
        %v2618 = vand.u32 %v2617, 4294901760
        %v2619 = vsub.f32 %v2617, %v2618
        %v2620 = vand.u32 %v2619, 4294901760
        %2621 = vmatprep.subr.mxu0 %v2620
        %v2622 = vand.u32 %v1638, 4294901760
        %v2623 = vsub.f32 %v1638, %v2622
        %v2624 = vand.u32 %v2623, 4294901760
        %v2625 = vsub.f32 %v2623, %v2624
        %v2626 = vand.u32 %v2625, 4294901760
        %2627 = vmatpush1.msra.mxu0 %v2626
        %v2628 = vand.u32 %v1635, 4294901760
        %v2629 = vsub.f32 %v1635, %v2628
        %v2630 = vand.u32 %v2629, 4294901760
        %v2631 = vsub.f32 %v2629, %v2630
        %v2632 = vand.u32 %v2631, 4294901760
        %2633 = vmatprep.subr.mxu0 %v2632
        %v2634 = vand.u32 %v1634, 4294901760
        %v2635 = vsub.f32 %v1634, %v2634
        %v2636 = vand.u32 %v2635, 4294901760
        %v2637 = vsub.f32 %v2635, %v2636
        %v2638 = vand.u32 %v2637, 4294901760
        %2639 = vmatpush1.msra.mxu0 %v2638
        %v2640 = vand.u32 %v1631, 4294901760
        %v2641 = vsub.f32 %v1631, %v2640
        %v2642 = vand.u32 %v2641, 4294901760
        %v2643 = vsub.f32 %v2641, %v2642
        %v2644 = vand.u32 %v2643, 4294901760
        %2645 = vmatprep.subr.mxu0 %v2644
        %v2646 = vand.u32 %v1630, 4294901760
        %v2647 = vsub.f32 %v1630, %v2646
        %v2648 = vand.u32 %v2647, 4294901760
        %v2649 = vsub.f32 %v2647, %v2648
        %v2650 = vand.u32 %v2649, 4294901760
        %2651 = vmatpush1.msra.mxu0 %v2650
        %v2652 = vand.u32 %v1627, 4294901760
        %v2653 = vsub.f32 %v1627, %v2652
        %v2654 = vand.u32 %v2653, 4294901760
        %v2655 = vsub.f32 %v2653, %v2654
        %v2656 = vand.u32 %v2655, 4294901760
        %2657 = vmatprep.subr.mxu0 %v2656
        %v2658 = vand.u32 %v1626, 4294901760
        %v2659 = vsub.f32 %v1626, %v2658
        %v2660 = vand.u32 %v2659, 4294901760
        %v2661 = vsub.f32 %v2659, %v2660
        %v2662 = vand.u32 %v2661, 4294901760
        %2663 = vmatpush1.msra.mxu0 %v2662
        %v2664 = vand.u32 %v1623, 4294901760
        %v2665 = vsub.f32 %v1623, %v2664
        %v2666 = vand.u32 %v2665, 4294901760
        %v2667 = vsub.f32 %v2665, %v2666
        %v2668 = vand.u32 %v2667, 4294901760
        %2669 = vmatprep.subr.mxu0 %v2668
        %v2670 = vand.u32 %v1622, 4294901760
        %v2671 = vsub.f32 %v1622, %v2670
        %v2672 = vand.u32 %v2671, 4294901760
        %v2673 = vsub.f32 %v2671, %v2672
        %v2674 = vand.u32 %v2673, 4294901760
        %2675 = vmatpush1.msra.mxu0 %v2674
        %v2676 = vand.u32 %v1619, 4294901760
        %v2677 = vsub.f32 %v1619, %v2676
        %v2678 = vand.u32 %v2677, 4294901760
        %v2679 = vsub.f32 %v2677, %v2678
        %v2680 = vand.u32 %v2679, 4294901760
        %2681 = vmatprep.subr.mxu0 %v2680
        %v2682 = vand.u32 %v1618, 4294901760
        %v2683 = vsub.f32 %v1618, %v2682
        %v2684 = vand.u32 %v2683, 4294901760
        %v2685 = vsub.f32 %v2683, %v2684
        %v2686 = vand.u32 %v2685, 4294901760
        %2687 = vmatpush1.msra.mxu0 %v2686
        %v2688 = vand.u32 %v1615, 4294901760
        %v2689 = vsub.f32 %v1615, %v2688
        %v2690 = vand.u32 %v2689, 4294901760
        %v2691 = vsub.f32 %v2689, %v2690
        %v2692 = vand.u32 %v2691, 4294901760
        %2693 = vmatprep.subr.mxu0 %v2692
        %v2694 = vand.u32 %v1614, 4294901760
        %v2695 = vsub.f32 %v1614, %v2694
        %v2696 = vand.u32 %v2695, 4294901760
        %v2697 = vsub.f32 %v2695, %v2696
        %v2698 = vand.u32 %v2697, 4294901760
        %2699 = vmatpush1.msra.mxu0 %v2698
        %v2700 = vand.u32 %v1611, 4294901760
        %v2701 = vsub.f32 %v1611, %v2700
        %v2702 = vand.u32 %v2701, 4294901760
        %v2703 = vsub.f32 %v2701, %v2702
        %v2704 = vand.u32 %v2703, 4294901760
        %2705 = vmatprep.subr.mxu0 %v2704
        %v2706 = vand.u32 %v1610, 4294901760
        %v2707 = vsub.f32 %v1610, %v2706
        %v2708 = vand.u32 %v2707, 4294901760
        %v2709 = vsub.f32 %v2707, %v2708
        %v2710 = vand.u32 %v2709, 4294901760
        %2711 = vmatpush1.msra.mxu0 %v2710
        %v2712 = vand.u32 %v1607, 4294901760
        %v2713 = vsub.f32 %v1607, %v2712
        %v2714 = vand.u32 %v2713, 4294901760
        %v2715 = vsub.f32 %v2713, %v2714
        %v2716 = vand.u32 %v2715, 4294901760
        %2717 = vmatprep.subr.mxu0 %v2716
        %v2718 = vand.u32 %v1606, 4294901760
        %v2719 = vsub.f32 %v1606, %v2718
        %v2720 = vand.u32 %v2719, 4294901760
        %v2721 = vsub.f32 %v2719, %v2720
        %v2722 = vand.u32 %v2721, 4294901760
        %2723 = vmatpush1.msra.mxu0 %v2722
        %v2724 = vand.u32 %v1603, 4294901760
        %v2725 = vsub.f32 %v1603, %v2724
        %v2726 = vand.u32 %v2725, 4294901760
        %v2727 = vsub.f32 %v2725, %v2726
        %v2728 = vand.u32 %v2727, 4294901760
        %2729 = vmatprep.subr.mxu0 %v2728
        %v2730 = vand.u32 %v1602, 4294901760
        %v2731 = vsub.f32 %v1602, %v2730
        %v2732 = vand.u32 %v2731, 4294901760
        %v2733 = vsub.f32 %v2731, %v2732
        %v2734 = vand.u32 %v2733, 4294901760
        %2735 = vmatpush1.msra.mxu0 %v2734
        %v2736 = vand.u32 %v1599, 4294901760
        %v2737 = vsub.f32 %v1599, %v2736
        %v2738 = vand.u32 %v2737, 4294901760
        %v2739 = vsub.f32 %v2737, %v2738
        %v2740 = vand.u32 %v2739, 4294901760
        %2741 = vmatprep.subr.mxu0 %v2740
        %v2742 = vand.u32 %v1598, 4294901760
        %v2743 = vsub.f32 %v1598, %v2742
        %v2744 = vand.u32 %v2743, 4294901760
        %v2745 = vsub.f32 %v2743, %v2744
        %v2746 = vand.u32 %v2745, 4294901760
        %2747 = vmatpush1.msra.mxu0 %v2746
        %2748 = vmatprep.subr.mxu0 0.0
        %2749 = vmatpush2.msra.mxu0 0.0
        %2750 = vmatprep.subr.mxu0 0.0
        %2751 = vmatpush2.msra.mxu0 0.0
        %2752 = vmatprep.subr.mxu0 0.0
        %2753 = vmatpush2.msra.mxu0 0.0
        %2754 = vmatprep.subr.mxu0 0.0
        %2755 = vmatpush2.msra.mxu0 0.0
        %2756 = vmatprep.subr.mxu0 0.0
        %2757 = vmatpush2.msra.mxu0 0.0
        %2758 = vmatprep.subr.mxu0 0.0
        %2759 = vmatpush2.msra.mxu0 0.0
        %2760 = vmatprep.subr.mxu0 0.0
        %2761 = vmatpush2.msra.mxu0 0.0
        %2762 = vmatprep.subr.mxu0 0.0
        %2763 = vmatpush2.msra.mxu0 0.0
        %2764 = vmatprep.subr.mxu0 0.0
        %2765 = vmatpush2.msra.mxu0 0.0
        %2766 = vmatprep.subr.mxu0 0.0
        %2767 = vmatpush2.msra.mxu0 0.0
        %2768 = vmatprep.subr.mxu0 0.0
        %2769 = vmatpush2.msra.mxu0 0.0
        %2770 = vmatprep.subr.mxu0 0.0
        %2771 = vmatpush2.msra.mxu0 0.0
        %2772 = vmatprep.subr.mxu0 0.0
        %2773 = vmatpush2.msra.mxu0 0.0
        %2774 = vmatprep.subr.mxu0 0.0
        %2775 = vmatpush2.msra.mxu0 0.0
        %2776 = vmatprep.subr.mxu0 0.0
        %2777 = vmatpush2.msra.mxu0 0.0
        %2778 = vmatprep.subr.mxu0 0.0
        %2779 = vmatpush2.msra.mxu0 0.0
        %2780 = vmatprep.mubr.f32.mxu0 0.0
        %v2781 = vand.u32 %v1654, 4294901760
        %2782 = vmatmul.mubr.f32.gmra.mxu0 %v2781
        %v2783 = vpop.f32.mrf.mxu0
        %v2784 = vadd.f32 %v2572, %v2783
        %v2785 = vpop.f32.mrf.mxu0
        %v2786 = vadd.f32 %v2574, %v2785
        %2787 = vdwg.mxu0
        %2788 = vmatprep.subr.mxu0 0.0
        %2789 = vmatpush1.msra.mxu0 0.0
        %2790 = vmatprep.subr.mxu0 0.0
        %2791 = vmatpush1.msra.mxu0 0.0
        %v2792 = vand.u32 %v1667, 4294901760
        %v2793 = vsub.f32 %v1667, %v2792
        %2794 = vmatprep.subr.mxu0 %v2793
        %v2795 = vand.u32 %v1664, 4294901760
        %v2796 = vsub.f32 %v1664, %v2795
        %2797 = vmatpush1.msra.mxu0 %v2796
        %v2798 = vand.u32 %v1647, 4294901760
        %v2799 = vsub.f32 %v1647, %v2798
        %2800 = vmatprep.subr.mxu0 %v2799
        %v2801 = vand.u32 %v1646, 4294901760
        %v2802 = vsub.f32 %v1646, %v2801
        %2803 = vmatpush1.msra.mxu0 %v2802
        %v2804 = vand.u32 %v1643, 4294901760
        %v2805 = vsub.f32 %v1643, %v2804
        %2806 = vmatprep.subr.mxu0 %v2805
        %v2807 = vand.u32 %v1642, 4294901760
        %v2808 = vsub.f32 %v1642, %v2807
        %2809 = vmatpush1.msra.mxu0 %v2808
        %v2810 = vand.u32 %v1639, 4294901760
        %v2811 = vsub.f32 %v1639, %v2810
        %2812 = vmatprep.subr.mxu0 %v2811
        %v2813 = vand.u32 %v1638, 4294901760
        %v2814 = vsub.f32 %v1638, %v2813
        %2815 = vmatpush1.msra.mxu0 %v2814
        %v2816 = vand.u32 %v1635, 4294901760
        %v2817 = vsub.f32 %v1635, %v2816
        %2818 = vmatprep.subr.mxu0 %v2817
        %v2819 = vand.u32 %v1634, 4294901760
        %v2820 = vsub.f32 %v1634, %v2819
        %2821 = vmatpush1.msra.mxu0 %v2820
        %v2822 = vand.u32 %v1631, 4294901760
        %v2823 = vsub.f32 %v1631, %v2822
        %2824 = vmatprep.subr.mxu0 %v2823
        %v2825 = vand.u32 %v1630, 4294901760
        %v2826 = vsub.f32 %v1630, %v2825
        %2827 = vmatpush1.msra.mxu0 %v2826
        %v2828 = vand.u32 %v1627, 4294901760
        %v2829 = vsub.f32 %v1627, %v2828
        %2830 = vmatprep.subr.mxu0 %v2829
        %v2831 = vand.u32 %v1626, 4294901760
        %v2832 = vsub.f32 %v1626, %v2831
        %2833 = vmatpush1.msra.mxu0 %v2832
        %v2834 = vand.u32 %v1623, 4294901760
        %v2835 = vsub.f32 %v1623, %v2834
        %2836 = vmatprep.subr.mxu0 %v2835
        %v2837 = vand.u32 %v1622, 4294901760
        %v2838 = vsub.f32 %v1622, %v2837
        %2839 = vmatpush1.msra.mxu0 %v2838
        %v2840 = vand.u32 %v1619, 4294901760
        %v2841 = vsub.f32 %v1619, %v2840
        %2842 = vmatprep.subr.mxu0 %v2841
        %v2843 = vand.u32 %v1618, 4294901760
        %v2844 = vsub.f32 %v1618, %v2843
        %2845 = vmatpush1.msra.mxu0 %v2844
        %v2846 = vand.u32 %v1615, 4294901760
        %v2847 = vsub.f32 %v1615, %v2846
        %2848 = vmatprep.subr.mxu0 %v2847
        %v2849 = vand.u32 %v1614, 4294901760
        %v2850 = vsub.f32 %v1614, %v2849
        %2851 = vmatpush1.msra.mxu0 %v2850
        %v2852 = vand.u32 %v1611, 4294901760
        %v2853 = vsub.f32 %v1611, %v2852
        %2854 = vmatprep.subr.mxu0 %v2853
        %v2855 = vand.u32 %v1610, 4294901760
        %v2856 = vsub.f32 %v1610, %v2855
        %2857 = vmatpush1.msra.mxu0 %v2856
        %v2858 = vand.u32 %v1607, 4294901760
        %v2859 = vsub.f32 %v1607, %v2858
        %2860 = vmatprep.subr.mxu0 %v2859
        %v2861 = vand.u32 %v1606, 4294901760
        %v2862 = vsub.f32 %v1606, %v2861
        %2863 = vmatpush1.msra.mxu0 %v2862
        %v2864 = vand.u32 %v1603, 4294901760
        %v2865 = vsub.f32 %v1603, %v2864
        %2866 = vmatprep.subr.mxu0 %v2865
        %v2867 = vand.u32 %v1602, 4294901760
        %v2868 = vsub.f32 %v1602, %v2867
        %2869 = vmatpush1.msra.mxu0 %v2868
        %v2870 = vand.u32 %v1599, 4294901760
        %v2871 = vsub.f32 %v1599, %v2870
        %2872 = vmatprep.subr.mxu0 %v2871
        %v2873 = vand.u32 %v1598, 4294901760
        %v2874 = vsub.f32 %v1598, %v2873
        %2875 = vmatpush1.msra.mxu0 %v2874
        %2876 = vmatprep.subr.mxu0 0.0
        %2877 = vmatpush2.msra.mxu0 0.0
        %2878 = vmatprep.subr.mxu0 0.0
        %2879 = vmatpush2.msra.mxu0 0.0
        %2880 = vmatprep.subr.mxu0 0.0
        %2881 = vmatpush2.msra.mxu0 0.0
        %2882 = vmatprep.subr.mxu0 0.0
        %2883 = vmatpush2.msra.mxu0 0.0
        %2884 = vmatprep.subr.mxu0 0.0
        %2885 = vmatpush2.msra.mxu0 0.0
        %2886 = vmatprep.subr.mxu0 0.0
        %2887 = vmatpush2.msra.mxu0 0.0
        %2888 = vmatprep.subr.mxu0 0.0
        %2889 = vmatpush2.msra.mxu0 0.0
        %2890 = vmatprep.subr.mxu0 0.0
        %2891 = vmatpush2.msra.mxu0 0.0
        %2892 = vmatprep.subr.mxu0 0.0
        %2893 = vmatpush2.msra.mxu0 0.0
        %2894 = vmatprep.subr.mxu0 0.0
        %2895 = vmatpush2.msra.mxu0 0.0
        %2896 = vmatprep.subr.mxu0 0.0
        %2897 = vmatpush2.msra.mxu0 0.0
        %2898 = vmatprep.subr.mxu0 0.0
        %2899 = vmatpush2.msra.mxu0 0.0
        %2900 = vmatprep.subr.mxu0 0.0
        %2901 = vmatpush2.msra.mxu0 0.0
        %2902 = vmatprep.subr.mxu0 0.0
        %2903 = vmatpush2.msra.mxu0 0.0
        %2904 = vmatprep.subr.mxu0 0.0
        %2905 = vmatpush2.msra.mxu0 0.0
        %2906 = vmatprep.subr.mxu0 0.0
        %2907 = vmatpush2.msra.mxu0 0.0
        %2908 = vmatprep.mubr.f32.mxu0 0.0
        %v2909 = vand.u32 %v1654, 4294901760
        %v2910 = vsub.f32 %v1654, %v2909
        %2911 = vmatmul.mubr.f32.gmra.mxu0 %v2910
        %v2912 = vpop.f32.mrf.mxu0
        %v2913 = vadd.f32 %v2784, %v2912
        %v2914 = vpop.f32.mrf.mxu0
        %v2915 = vadd.f32 %v2786, %v2914
        %2916 = vdwg.mxu0
        %2917 = vmatprep.subr.mxu0 0.0
        %2918 = vmatpush1.msra.mxu0 0.0
        %2919 = vmatprep.subr.mxu0 0.0
        %2920 = vmatpush1.msra.mxu0 0.0
        %v2921 = vand.u32 %v1667, 4294901760
        %2922 = vmatprep.subr.mxu0 %v2921
        %v2923 = vand.u32 %v1664, 4294901760
        %2924 = vmatpush1.msra.mxu0 %v2923
        %v2925 = vand.u32 %v1647, 4294901760
        %2926 = vmatprep.subr.mxu0 %v2925
        %v2927 = vand.u32 %v1646, 4294901760
        %2928 = vmatpush1.msra.mxu0 %v2927
        %v2929 = vand.u32 %v1643, 4294901760
        %2930 = vmatprep.subr.mxu0 %v2929
        %v2931 = vand.u32 %v1642, 4294901760
        %2932 = vmatpush1.msra.mxu0 %v2931
        %v2933 = vand.u32 %v1639, 4294901760
        %2934 = vmatprep.subr.mxu0 %v2933
        %v2935 = vand.u32 %v1638, 4294901760
        %2936 = vmatpush1.msra.mxu0 %v2935
        %v2937 = vand.u32 %v1635, 4294901760
        %2938 = vmatprep.subr.mxu0 %v2937
        %v2939 = vand.u32 %v1634, 4294901760
        %2940 = vmatpush1.msra.mxu0 %v2939
        %v2941 = vand.u32 %v1631, 4294901760
        %2942 = vmatprep.subr.mxu0 %v2941
        %v2943 = vand.u32 %v1630, 4294901760
        %2944 = vmatpush1.msra.mxu0 %v2943
        %v2945 = vand.u32 %v1627, 4294901760
        %2946 = vmatprep.subr.mxu0 %v2945
        %v2947 = vand.u32 %v1626, 4294901760
        %2948 = vmatpush1.msra.mxu0 %v2947
        %v2949 = vand.u32 %v1623, 4294901760
        %2950 = vmatprep.subr.mxu0 %v2949
        %v2951 = vand.u32 %v1622, 4294901760
        %2952 = vmatpush1.msra.mxu0 %v2951
        %v2953 = vand.u32 %v1619, 4294901760
        %2954 = vmatprep.subr.mxu0 %v2953
        %v2955 = vand.u32 %v1618, 4294901760
        %2956 = vmatpush1.msra.mxu0 %v2955
        %v2957 = vand.u32 %v1615, 4294901760
        %2958 = vmatprep.subr.mxu0 %v2957
        %v2959 = vand.u32 %v1614, 4294901760
        %2960 = vmatpush1.msra.mxu0 %v2959
        %v2961 = vand.u32 %v1611, 4294901760
        %2962 = vmatprep.subr.mxu0 %v2961
        %v2963 = vand.u32 %v1610, 4294901760
        %2964 = vmatpush1.msra.mxu0 %v2963
        %v2965 = vand.u32 %v1607, 4294901760
        %2966 = vmatprep.subr.mxu0 %v2965
        %v2967 = vand.u32 %v1606, 4294901760
        %2968 = vmatpush1.msra.mxu0 %v2967
        %v2969 = vand.u32 %v1603, 4294901760
        %2970 = vmatprep.subr.mxu0 %v2969
        %v2971 = vand.u32 %v1602, 4294901760
        %2972 = vmatpush1.msra.mxu0 %v2971
        %v2973 = vand.u32 %v1599, 4294901760
        %2974 = vmatprep.subr.mxu0 %v2973
        %v2975 = vand.u32 %v1598, 4294901760
        %2976 = vmatpush1.msra.mxu0 %v2975
        %2977 = vmatprep.subr.mxu0 0.0
        %2978 = vmatpush2.msra.mxu0 0.0
        %2979 = vmatprep.subr.mxu0 0.0
        %2980 = vmatpush2.msra.mxu0 0.0
        %2981 = vmatprep.subr.mxu0 0.0
        %2982 = vmatpush2.msra.mxu0 0.0
        %2983 = vmatprep.subr.mxu0 0.0
        %2984 = vmatpush2.msra.mxu0 0.0
        %2985 = vmatprep.subr.mxu0 0.0
        %2986 = vmatpush2.msra.mxu0 0.0
        %2987 = vmatprep.subr.mxu0 0.0
        %2988 = vmatpush2.msra.mxu0 0.0
        %2989 = vmatprep.subr.mxu0 0.0
        %2990 = vmatpush2.msra.mxu0 0.0
        %2991 = vmatprep.subr.mxu0 0.0
        %2992 = vmatpush2.msra.mxu0 0.0
        %2993 = vmatprep.subr.mxu0 0.0
        %2994 = vmatpush2.msra.mxu0 0.0
        %2995 = vmatprep.subr.mxu0 0.0
        %2996 = vmatpush2.msra.mxu0 0.0
        %2997 = vmatprep.subr.mxu0 0.0
        %2998 = vmatpush2.msra.mxu0 0.0
        %2999 = vmatprep.subr.mxu0 0.0
        %3000 = vmatpush2.msra.mxu0 0.0
        %3001 = vmatprep.subr.mxu0 0.0
        %3002 = vmatpush2.msra.mxu0 0.0
        %3003 = vmatprep.subr.mxu0 0.0
        %3004 = vmatpush2.msra.mxu0 0.0
        %3005 = vmatprep.subr.mxu0 0.0
        %3006 = vmatpush2.msra.mxu0 0.0
        %3007 = vmatprep.subr.mxu0 0.0
        %3008 = vmatpush2.msra.mxu0 0.0
        %3009 = vmatprep.mubr.f32.mxu0 0.0
        %v3010 = vand.u32 %v1654, 4294901760
        %v3011 = vsub.f32 %v1654, %v3010
        %v3012 = vand.u32 %v3011, 4294901760
        %3013 = vmatmul.mubr.f32.gmra.mxu0 %v3012
        %v3014 = vpop.f32.mrf.mxu0
        %v3015 = vadd.f32 %v2913, %v3014
        %v3016 = vpop.f32.mrf.mxu0
        %v3017 = vadd.f32 %v2915, %v3016
        %3018 = vdwg.mxu0
        %3019 = vmatprep.subr.mxu0 0.0
        %3020 = vmatpush1.msra.mxu0 0.0
        %3021 = vmatprep.subr.mxu0 0.0
        %3022 = vmatpush1.msra.mxu0 0.0
        %v3023 = vand.u32 %v1667, 4294901760
        %v3024 = vsub.f32 %v1667, %v3023
        %v3025 = vand.u32 %v3024, 4294901760
        %3026 = vmatprep.subr.mxu0 %v3025
        %v3027 = vand.u32 %v1664, 4294901760
        %v3028 = vsub.f32 %v1664, %v3027
        %v3029 = vand.u32 %v3028, 4294901760
        %3030 = vmatpush1.msra.mxu0 %v3029
        %v3031 = vand.u32 %v1647, 4294901760
        %v3032 = vsub.f32 %v1647, %v3031
        %v3033 = vand.u32 %v3032, 4294901760
        %3034 = vmatprep.subr.mxu0 %v3033
        %v3035 = vand.u32 %v1646, 4294901760
        %v3036 = vsub.f32 %v1646, %v3035
        %v3037 = vand.u32 %v3036, 4294901760
        %3038 = vmatpush1.msra.mxu0 %v3037
        %v3039 = vand.u32 %v1643, 4294901760
        %v3040 = vsub.f32 %v1643, %v3039
        %v3041 = vand.u32 %v3040, 4294901760
        %3042 = vmatprep.subr.mxu0 %v3041
        %v3043 = vand.u32 %v1642, 4294901760
        %v3044 = vsub.f32 %v1642, %v3043
        %v3045 = vand.u32 %v3044, 4294901760
        %3046 = vmatpush1.msra.mxu0 %v3045
        %v3047 = vand.u32 %v1639, 4294901760
        %v3048 = vsub.f32 %v1639, %v3047
        %v3049 = vand.u32 %v3048, 4294901760
        %3050 = vmatprep.subr.mxu0 %v3049
        %v3051 = vand.u32 %v1638, 4294901760
        %v3052 = vsub.f32 %v1638, %v3051
        %v3053 = vand.u32 %v3052, 4294901760
        %3054 = vmatpush1.msra.mxu0 %v3053
        %v3055 = vand.u32 %v1635, 4294901760
        %v3056 = vsub.f32 %v1635, %v3055
        %v3057 = vand.u32 %v3056, 4294901760
        %3058 = vmatprep.subr.mxu0 %v3057
        %v3059 = vand.u32 %v1634, 4294901760
        %v3060 = vsub.f32 %v1634, %v3059
        %v3061 = vand.u32 %v3060, 4294901760
        %3062 = vmatpush1.msra.mxu0 %v3061
        %v3063 = vand.u32 %v1631, 4294901760
        %v3064 = vsub.f32 %v1631, %v3063
        %v3065 = vand.u32 %v3064, 4294901760
        %3066 = vmatprep.subr.mxu0 %v3065
        %v3067 = vand.u32 %v1630, 4294901760
        %v3068 = vsub.f32 %v1630, %v3067
        %v3069 = vand.u32 %v3068, 4294901760
        %3070 = vmatpush1.msra.mxu0 %v3069
        %v3071 = vand.u32 %v1627, 4294901760
        %v3072 = vsub.f32 %v1627, %v3071
        %v3073 = vand.u32 %v3072, 4294901760
        %3074 = vmatprep.subr.mxu0 %v3073
        %v3075 = vand.u32 %v1626, 4294901760
        %v3076 = vsub.f32 %v1626, %v3075
        %v3077 = vand.u32 %v3076, 4294901760
        %3078 = vmatpush1.msra.mxu0 %v3077
        %v3079 = vand.u32 %v1623, 4294901760
        %v3080 = vsub.f32 %v1623, %v3079
        %v3081 = vand.u32 %v3080, 4294901760
        %3082 = vmatprep.subr.mxu0 %v3081
        %v3083 = vand.u32 %v1622, 4294901760
        %v3084 = vsub.f32 %v1622, %v3083
        %v3085 = vand.u32 %v3084, 4294901760
        %3086 = vmatpush1.msra.mxu0 %v3085
        %v3087 = vand.u32 %v1619, 4294901760
        %v3088 = vsub.f32 %v1619, %v3087
        %v3089 = vand.u32 %v3088, 4294901760
        %3090 = vmatprep.subr.mxu0 %v3089
        %v3091 = vand.u32 %v1618, 4294901760
        %v3092 = vsub.f32 %v1618, %v3091
        %v3093 = vand.u32 %v3092, 4294901760
        %3094 = vmatpush1.msra.mxu0 %v3093
        %v3095 = vand.u32 %v1615, 4294901760
        %v3096 = vsub.f32 %v1615, %v3095
        %v3097 = vand.u32 %v3096, 4294901760
        %3098 = vmatprep.subr.mxu0 %v3097
        %v3099 = vand.u32 %v1614, 4294901760
        %v3100 = vsub.f32 %v1614, %v3099
        %v3101 = vand.u32 %v3100, 4294901760
        %3102 = vmatpush1.msra.mxu0 %v3101
        %v3103 = vand.u32 %v1611, 4294901760
        %v3104 = vsub.f32 %v1611, %v3103
        %v3105 = vand.u32 %v3104, 4294901760
        %3106 = vmatprep.subr.mxu0 %v3105
        %v3107 = vand.u32 %v1610, 4294901760
        %v3108 = vsub.f32 %v1610, %v3107
        %v3109 = vand.u32 %v3108, 4294901760
        %3110 = vmatpush1.msra.mxu0 %v3109
        %v3111 = vand.u32 %v1607, 4294901760
        %v3112 = vsub.f32 %v1607, %v3111
        %v3113 = vand.u32 %v3112, 4294901760
        %3114 = vmatprep.subr.mxu0 %v3113
        %v3115 = vand.u32 %v1606, 4294901760
        %v3116 = vsub.f32 %v1606, %v3115
        %v3117 = vand.u32 %v3116, 4294901760
        %3118 = vmatpush1.msra.mxu0 %v3117
        %v3119 = vand.u32 %v1603, 4294901760
        %v3120 = vsub.f32 %v1603, %v3119
        %v3121 = vand.u32 %v3120, 4294901760
        %3122 = vmatprep.subr.mxu0 %v3121
        %v3123 = vand.u32 %v1602, 4294901760
        %v3124 = vsub.f32 %v1602, %v3123
        %v3125 = vand.u32 %v3124, 4294901760
        %3126 = vmatpush1.msra.mxu0 %v3125
        %v3127 = vand.u32 %v1599, 4294901760
        %v3128 = vsub.f32 %v1599, %v3127
        %v3129 = vand.u32 %v3128, 4294901760
        %3130 = vmatprep.subr.mxu0 %v3129
        %v3131 = vand.u32 %v1598, 4294901760
        %v3132 = vsub.f32 %v1598, %v3131
        %v3133 = vand.u32 %v3132, 4294901760
        %3134 = vmatpush1.msra.mxu0 %v3133
        %3135 = vmatprep.subr.mxu0 0.0
        %3136 = vmatpush2.msra.mxu0 0.0
        %3137 = vmatprep.subr.mxu0 0.0
        %3138 = vmatpush2.msra.mxu0 0.0
        %3139 = vmatprep.subr.mxu0 0.0
        %3140 = vmatpush2.msra.mxu0 0.0
        %3141 = vmatprep.subr.mxu0 0.0
        %3142 = vmatpush2.msra.mxu0 0.0
        %3143 = vmatprep.subr.mxu0 0.0
        %3144 = vmatpush2.msra.mxu0 0.0
        %3145 = vmatprep.subr.mxu0 0.0
        %3146 = vmatpush2.msra.mxu0 0.0
        %3147 = vmatprep.subr.mxu0 0.0
        %3148 = vmatpush2.msra.mxu0 0.0
        %3149 = vmatprep.subr.mxu0 0.0
        %3150 = vmatpush2.msra.mxu0 0.0
        %3151 = vmatprep.subr.mxu0 0.0
        %3152 = vmatpush2.msra.mxu0 0.0
        %3153 = vmatprep.subr.mxu0 0.0
        %3154 = vmatpush2.msra.mxu0 0.0
        %3155 = vmatprep.subr.mxu0 0.0
        %3156 = vmatpush2.msra.mxu0 0.0
        %3157 = vmatprep.subr.mxu0 0.0
        %3158 = vmatpush2.msra.mxu0 0.0
        %3159 = vmatprep.subr.mxu0 0.0
        %3160 = vmatpush2.msra.mxu0 0.0
        %3161 = vmatprep.subr.mxu0 0.0
        %3162 = vmatpush2.msra.mxu0 0.0
        %3163 = vmatprep.subr.mxu0 0.0
        %3164 = vmatpush2.msra.mxu0 0.0
        %3165 = vmatprep.subr.mxu0 0.0
        %3166 = vmatpush2.msra.mxu0 0.0
        %3167 = vmatprep.mubr.f32.mxu0 0.0
        %v3168 = vand.u32 %v1654, 4294901760
        %3169 = vmatmul.mubr.f32.gmra.mxu0 %v3168
        %v3170 = vpop.f32.mrf.mxu0
        %v3171 = vadd.f32 %v3015, %v3170
        %v3172 = vpop.f32.mrf.mxu0
        %v3173 = vadd.f32 %v3017, %v3172
        %3174 = vdwg.mxu0
        %3175 = vmatprep.subr.mxu0 0.0
        %3176 = vmatpush1.msra.mxu0 0.0
        %3177 = vmatprep.subr.mxu0 0.0
        %3178 = vmatpush1.msra.mxu0 0.0
        %v3179 = vand.u32 %v1667, 4294901760
        %3180 = vmatprep.subr.mxu0 %v3179
        %v3181 = vand.u32 %v1664, 4294901760
        %3182 = vmatpush1.msra.mxu0 %v3181
        %v3183 = vand.u32 %v1647, 4294901760
        %3184 = vmatprep.subr.mxu0 %v3183
        %v3185 = vand.u32 %v1646, 4294901760
        %3186 = vmatpush1.msra.mxu0 %v3185
        %v3187 = vand.u32 %v1643, 4294901760
        %3188 = vmatprep.subr.mxu0 %v3187
        %v3189 = vand.u32 %v1642, 4294901760
        %3190 = vmatpush1.msra.mxu0 %v3189
        %v3191 = vand.u32 %v1639, 4294901760
        %3192 = vmatprep.subr.mxu0 %v3191
        %v3193 = vand.u32 %v1638, 4294901760
        %3194 = vmatpush1.msra.mxu0 %v3193
        %v3195 = vand.u32 %v1635, 4294901760
        %3196 = vmatprep.subr.mxu0 %v3195
        %v3197 = vand.u32 %v1634, 4294901760
        %3198 = vmatpush1.msra.mxu0 %v3197
        %v3199 = vand.u32 %v1631, 4294901760
        %3200 = vmatprep.subr.mxu0 %v3199
        %v3201 = vand.u32 %v1630, 4294901760
        %3202 = vmatpush1.msra.mxu0 %v3201
        %v3203 = vand.u32 %v1627, 4294901760
        %3204 = vmatprep.subr.mxu0 %v3203
        %v3205 = vand.u32 %v1626, 4294901760
        %3206 = vmatpush1.msra.mxu0 %v3205
        %v3207 = vand.u32 %v1623, 4294901760
        %3208 = vmatprep.subr.mxu0 %v3207
        %v3209 = vand.u32 %v1622, 4294901760
        %3210 = vmatpush1.msra.mxu0 %v3209
        %v3211 = vand.u32 %v1619, 4294901760
        %3212 = vmatprep.subr.mxu0 %v3211
        %v3213 = vand.u32 %v1618, 4294901760
        %3214 = vmatpush1.msra.mxu0 %v3213
        %v3215 = vand.u32 %v1615, 4294901760
        %3216 = vmatprep.subr.mxu0 %v3215
        %v3217 = vand.u32 %v1614, 4294901760
        %3218 = vmatpush1.msra.mxu0 %v3217
        %v3219 = vand.u32 %v1611, 4294901760
        %3220 = vmatprep.subr.mxu0 %v3219
        %v3221 = vand.u32 %v1610, 4294901760
        %3222 = vmatpush1.msra.mxu0 %v3221
        %v3223 = vand.u32 %v1607, 4294901760
        %3224 = vmatprep.subr.mxu0 %v3223
        %v3225 = vand.u32 %v1606, 4294901760
        %3226 = vmatpush1.msra.mxu0 %v3225
        %v3227 = vand.u32 %v1603, 4294901760
        %3228 = vmatprep.subr.mxu0 %v3227
        %v3229 = vand.u32 %v1602, 4294901760
        %3230 = vmatpush1.msra.mxu0 %v3229
        %v3231 = vand.u32 %v1599, 4294901760
        %3232 = vmatprep.subr.mxu0 %v3231
        %v3233 = vand.u32 %v1598, 4294901760
        %3234 = vmatpush1.msra.mxu0 %v3233
        %3235 = vmatprep.subr.mxu0 0.0
        %3236 = vmatpush2.msra.mxu0 0.0
        %3237 = vmatprep.subr.mxu0 0.0
        %3238 = vmatpush2.msra.mxu0 0.0
        %3239 = vmatprep.subr.mxu0 0.0
        %3240 = vmatpush2.msra.mxu0 0.0
        %3241 = vmatprep.subr.mxu0 0.0
        %3242 = vmatpush2.msra.mxu0 0.0
        %3243 = vmatprep.subr.mxu0 0.0
        %3244 = vmatpush2.msra.mxu0 0.0
        %3245 = vmatprep.subr.mxu0 0.0
        %3246 = vmatpush2.msra.mxu0 0.0
        %3247 = vmatprep.subr.mxu0 0.0
        %3248 = vmatpush2.msra.mxu0 0.0
        %3249 = vmatprep.subr.mxu0 0.0
        %3250 = vmatpush2.msra.mxu0 0.0
        %3251 = vmatprep.subr.mxu0 0.0
        %3252 = vmatpush2.msra.mxu0 0.0
        %3253 = vmatprep.subr.mxu0 0.0
        %3254 = vmatpush2.msra.mxu0 0.0
        %3255 = vmatprep.subr.mxu0 0.0
        %3256 = vmatpush2.msra.mxu0 0.0
        %3257 = vmatprep.subr.mxu0 0.0
        %3258 = vmatpush2.msra.mxu0 0.0
        %3259 = vmatprep.subr.mxu0 0.0
        %3260 = vmatpush2.msra.mxu0 0.0
        %3261 = vmatprep.subr.mxu0 0.0
        %3262 = vmatpush2.msra.mxu0 0.0
        %3263 = vmatprep.subr.mxu0 0.0
        %3264 = vmatpush2.msra.mxu0 0.0
        %3265 = vmatprep.subr.mxu0 0.0
        %3266 = vmatpush2.msra.mxu0 0.0
        %3267 = vmatprep.mubr.f32.mxu0 0.0
        %v3268 = vand.u32 %v1654, 4294901760
        %3269 = vmatmul.mubr.f32.gmra.mxu0 %v3268
        %v3270 = vpop.f32.mrf.mxu0
        %v3271 = vadd.f32 %v3171, %v3270
        %v3272 = vpop.f32.mrf.mxu0
        %v3273 = vadd.f32 %v3173, %v3272
        %3274 = vdwg.mxu0
        %v3279 = vcombine.low %v2468, %v2470
        %v3280 = vcombine.low %v3271, %v3273
        %3283 = vst [vmem:[%s313] sm:$0xff] %v3279
        %3284 = vst [vmem:[%s313 + $0x8] sm:$0xff] %v3280
        %v3285 = vsel %vm1656, %v2468, 0.0
        %v3286 = vsel %vm1656, %v2470, 0.0
        %v3287 = vadd.f32 %v3285, %v3286
        %v3288 = vsel %vm1656, %v3271, 0.0
        %v3289 = vadd.f32 %v3287, %v3288
        %v3290 = vsel %vm1656, %v3273, 0.0
        %v3291 = vadd.f32 %v3289, %v3290
        %3292 = vadd.xlane.f32.xlu0 %v3291
        %v3293 = vpop.xlane.xlu0 %3292
        %v3295 = vlaneseq
        %v3296 = vand.u32 %v3295, 127
        %v3297 = vlaneseq
        %v3298 = vshrl.u32 %v3297, 7
        %v3299 = vsub.s32 %v3296, %v3298
        %v3300 = vrot.slane %v3293, %v3299
        %vm3302 = vcmask 24576
        %3303 = vst.msk [vmem:[%s319] sm:$0x1] %vm3302, %v3300
        %v3304 = vmul.f32 %v2468, %v2468
        %v3305 = vmul.f32 %v2470, %v2470
        %v3306 = vmul.f32 %v3271, %v3271
        %v3307 = vmul.f32 %v3273, %v3273
        %v3308 = vsel %vm1656, %v3304, 0.0
        %v3309 = vsel %vm1656, %v3305, 0.0
        %v3310 = vadd.f32 %v3308, %v3309
        %v3311 = vsel %vm1656, %v3306, 0.0
        %v3312 = vadd.f32 %v3310, %v3311
        %v3313 = vsel %vm1656, %v3307, 0.0
        %v3314 = vadd.f32 %v3312, %v3313
        %3315 = vadd.xlane.f32.xlu0 %v3314
        %v3316 = vpop.xlane.xlu0 %3315
        %v3318 = vlaneseq
        %v3319 = vshrl.u32 %v3318, 7
        %v3320 = vsub.s32 %v3296, %v3319
        %v3321 = vrot.slane %v3316, %v3320
        %3323 = vst.msk [vmem:[%s325] sm:$0x1] %vm3302, %v3321
        %s3324 = sand.u32 %s147, 1
        %s3325 = scalar_lea.sflag [#allocation5], %s3324
        %s3326 = sand.u32 %s147, 1
        %s3327 = smul.addr %s3326, 16
        %s3328 = scalar_lea.vmem [#allocation8], %s3327
        %s3329 = sand.u32 %s29, 1
        %s3330 = scalar_lea.sflag [#allocation10], %s3329
        %s3331 = sand.u32 %s173, 1
        %s3332 = scalar_lea.vmem [#allocation9], %s3331
        %s3333 = sand.u32 %s29, 1
        %s3334 = scalar_lea.sflag [#allocation10], %s3333
        %s3335 = sand.u32 %s199, 1
        %s3336 = scalar_lea.vmem [#allocation11], %s3335
        // Predicated region
        $region49: #{tpu_custom_call.1} parent=39 // pred_check
          %p3337 = pneg %p157
        $region50: #{tpu_custom_call.1} parent=39 // pred_check_branch
          %3339 = sbr.rel (%p3337) target = $region52
        $region51: #{tpu_custom_call.1} parent=39 // pred_region
          %s3341 = ssub.s32 256, 256
          %3342 = vsyncadd %s3325, %s3341
          %s3343 = smul.addr %s29, 4
          %s3344 = smul.addr %s3343, 64
          %s3345 = scalar_lea.hbm %s5, %s3344
          %s3347 = sshll.u32 %s3328, 4
          %s3348 = int_to_ptr.vmem [resolvable:$true] %s3347
          %3350 = dma.vmem_to_hbm [thread:$0]  %s3348, 256, %s3345, %s3325
        $region52: #{tpu_custom_call.1} parent=39 // pred_fallthru
          _
        // Predicated region
        $region53: #{tpu_custom_call.1} parent=39 // pred_check
          %p3351 = pneg %p183
        $region54: #{tpu_custom_call.1} parent=39 // pred_check_branch
          %3353 = sbr.rel (%p3351) target = $region56
        $region55: #{tpu_custom_call.1} parent=39 // pred_region
          %s3355 = ssub.s32 16, 16
          %3356 = vsyncadd %s3330, %s3355
          %s3357 = smul.addr %s29, 16
          %s3358 = scalar_lea.hbm %s6, %s3357
          %s3360 = sshll.u32 %s3332, 4
          %s3361 = int_to_ptr.vmem [resolvable:$true] %s3360
          %3363 = dma.vmem_to_hbm [thread:$0]  %s3361, 16, %s3358, %s3330
        $region56: #{tpu_custom_call.1} parent=39 // pred_fallthru
          _
        // Predicated region
        $region57: #{tpu_custom_call.1} parent=39 // pred_check
          %p3364 = pneg %p209
        $region58: #{tpu_custom_call.1} parent=39 // pred_check_branch
          %3366 = sbr.rel (%p3364) target = $region60
        $region59: #{tpu_custom_call.1} parent=39 // pred_region
          %s3368 = ssub.s32 16, 16
          %3369 = vsyncadd %s3334, %s3368
          %s3370 = smul.addr %s29, 16
          %s3371 = scalar_lea.hbm %s7, %s3370
          %s3373 = sshll.u32 %s3336, 4
          %s3374 = int_to_ptr.vmem [resolvable:$true] %s3373
          %3376 = dma.vmem_to_hbm [thread:$0]  %s3374, 16, %s3371, %s3334
        $region60: #{tpu_custom_call.1} parent=39 // pred_fallthru
          _
      $region40: #{tpu_custom_call.1} parent=5 // pred_fallthru
        _
      %p3377 = scmp.le.s32.totalorder 2, %s24
      // Predicated region
      $region61: #{tpu_custom_call.1} parent=5 // pred_check
        %p3378 = pneg %p3377
      $region62: #{tpu_custom_call.1} parent=5 // pred_check_branch
        %3380 = sbr.rel (%p3378) target = $region64
      $region63: #{tpu_custom_call.1} parent=5 // pred_region
        %s3381 = ssub.s32 %s24, 2
        // Predicated region
        $region65: #{tpu_custom_call.1} parent=63 // pred_check
          %p3382 = pneg %p163
        $region66: #{tpu_custom_call.1} parent=63 // pred_check_branch
          %3384 = sbr.rel (%p3382) target = $region68
        $region67: #{tpu_custom_call.1} parent=63 // pred_region
          %s3385 = sand.u32 %s148, 1
          %s3386 = scalar_lea.sflag [#allocation5], %s3385
          %s3387 = sand.u32 %s148, 1
          %s3388 = smul.addr %s3387, 16
          %s3389 = scalar_lea.vmem [#allocation8], %s3388
          %3390 = dma.done %s3386, 256
        $region68: #{tpu_custom_call.1} parent=63 // pred_fallthru
          _
        // Predicated region
        $region69: #{tpu_custom_call.1} parent=63 // pred_check
          %p3391 = pneg %p189
        $region70: #{tpu_custom_call.1} parent=63 // pred_check_branch
          %3393 = sbr.rel (%p3391) target = $region72
        $region71: #{tpu_custom_call.1} parent=63 // pred_region
          %s3394 = sand.u32 %s30, 1
          %s3395 = scalar_lea.sflag [#allocation10], %s3394
          %s3396 = sand.u32 %s174, 1
          %s3397 = scalar_lea.vmem [#allocation9], %s3396
          %3398 = dma.done %s3395, 16
        $region72: #{tpu_custom_call.1} parent=63 // pred_fallthru
          _
        // Predicated region
        $region73: #{tpu_custom_call.1} parent=63 // pred_check
          %p3399 = pneg %p215
        $region74: #{tpu_custom_call.1} parent=63 // pred_check_branch
          %3401 = sbr.rel (%p3399) target = $region76
        $region75: #{tpu_custom_call.1} parent=63 // pred_region
          %s3402 = sand.u32 %s30, 1
          %s3403 = scalar_lea.sflag [#allocation10], %s3402
          %s3404 = sand.u32 %s200, 1
          %s3405 = scalar_lea.vmem [#allocation11], %s3404
          %3406 = dma.done %s3403, 16
        $region76: #{tpu_custom_call.1} parent=63 // pred_fallthru
          _
      $region64: #{tpu_custom_call.1} parent=5 // pred_fallthru
        _
    $region6: #{tpu_custom_call.1} parent=1 // loop_footer
      %s28 = sadd.s32 1, %s24
    $region7: #{tpu_custom_call.1} parent=1 // loop_footer_branch
      %23 = sbr.rel target = $region3
    $region8: #{tpu_custom_call.1} parent=1 // loop_exit
      _
    %3407 = vsyncpa [#allocation4], 1
    %s3408 = scalar_lea.sflag [#allocation4], 1
    %3409 = vsyncpa %s3408, 1
    %3410 = vsyncpa [#allocation7], 1
    %3411 = vsyncpa [#allocation5], 1
    %s3412 = scalar_lea.sflag [#allocation5], 1
    %3413 = vsyncpa %s3412, 1
    %3414 = vsyncpa [#allocation10], 1
    %s3415 = scalar_lea.sflag [#allocation10], 1
    %3416 = vsyncpa %s3415, 1

</llo_original>
